<compile_context>
chip_gen: v7x
topology: tpu7x:2x2x1
jax: 0.10.0
libtpu: 0.0.40
codegen_flags: <defaults>
</compile_context>

<pallas_src>
import jax
import jax.numpy as jnp
from jax.experimental import pallas as pl
from jax.experimental.pallas import tpu as pltpu

N_NODES = 248          # fixed by LayerNorm([248, ...]) in the module
NUM_FEATURE = 128      # num_feature for the synthetic instantiation
H1 = 256
H2 = 256
H3 = 128
LN_EPS = 1e-5


def _silu(h):
    return h * jax.nn.sigmoid(h)


def _layernorm_full_1pass(h):
    # LayerNorm over the full [248, C] matrix, no affine params.
    # Single sweep: var = E[h^2] - E[h]^2; normalization fused as h*inv - mu*inv.
    n = h.size
    s1 = jnp.sum(h)
    s2 = jnp.sum(h * h)
    mu = s1 / n
    var = s2 / n - mu * mu
    inv = jax.lax.rsqrt(var + LN_EPS)
    return h * inv - mu * inv


def mirna_gcn_kernel(x_ref, ahat_ref,
                     lp_w_ref, lp_b_ref,
                     g1w0_ref, g1w1_ref, g1b_ref,
                     g2w0_hbm, g2w1_hbm, g2b_ref,
                     g3w0_hbm, g3w1_hbm, g3b_ref,
                     out_ref,
                     g2w0_v, g2w1_v, g3w0_v, g3w1_v, dma_sems):
    # Kick off the layer-2 / layer-3 weight DMAs immediately so their HBM traffic
    # overlaps the LP / GCN1 matmuls instead of sitting on the critical path.
    cps = (pltpu.make_async_copy(g2w0_hbm, g2w0_v, dma_sems.at[0]),
           pltpu.make_async_copy(g2w1_hbm, g2w1_v, dma_sems.at[1]),
           pltpu.make_async_copy(g3w0_hbm, g3w0_v, dma_sems.at[2]),
           pltpu.make_async_copy(g3w1_hbm, g3w1_v, dma_sems.at[3]))
    for cp in cps:
        cp.start()

    a_hat = ahat_ref[...]                      # bf16 D^{-1/2} A D^{-1/2}
    x = x_ref[...].astype(jnp.bfloat16)

    def cheb(h, w0, w1_neg, b):
        # ChebConv K=2 (sym, lambda_max=2): h @ W0 + (L_hat @ h) @ W1 + b,
        # with L_hat = -A_hat and the -1 already folded into w1_neg.
        hb = h.astype(jnp.bfloat16)
        tx1 = jnp.dot(a_hat, hb, preferred_element_type=jnp.float32)
        return (jnp.dot(hb, w0, preferred_element_type=jnp.float32)
                + jnp.dot(tx1.astype(jnp.bfloat16), w1_neg,
                          preferred_element_type=jnp.float32)
                + b)

    # residual branch: Linear(num_feature -> 256)
    res_x = (jnp.dot(x, lp_w_ref[...], preferred_element_type=jnp.float32)
             + lp_b_ref[...])

    # dropout(p=0.3) -> identity in eval mode
    h = cheb(x, g1w0_ref[...], g1w1_ref[...], g1b_ref[...])        # GCN1
    h = _layernorm_full_1pass(_silu(h))                            # silu + ln1

    # dropout(p=0.3) -> identity in eval mode
    cps[0].wait()
    cps[1].wait()
    h = cheb(h, g2w0_v[...], g2w1_v[...], g2b_ref[...])            # GCN2
    h = _layernorm_full_1pass(_silu(res_x + h))                    # residual + silu + ln2

    cps[2].wait()
    cps[3].wait()
    out_ref[...] = cheb(h, g3w0_v[...], g3w1_v[...], g3b_ref[...])  # GCN3


def _full_spec(arr):
    # whole array lives in one VMEM block; single grid point
    return pl.BlockSpec(arr.shape, lambda i, _nd=arr.ndim: (0,) * _nd)


def mirna_gcn_forward(x, a_hat, params):
    args = (
        x,                                      # f32 node features
        a_hat.astype(jnp.bfloat16),             # bf16 normalized adjacency
        params["lp_w"], params["lp_b"],
        params["g1_w0"], -params["g1_w1"], params["g1_b"],
        params["g2_w0"], -params["g2_w1"], params["g2_b"],
        params["g3_w0"], -params["g3_w1"], params["g3_b"],
    )
    in_specs = [_full_spec(a) for a in args]
    # GCN2 / GCN3 weight matrices stay in HBM; the kernel DMAs them itself so
    # the copy overlaps GCN1 compute.
    any_spec = pl.BlockSpec(memory_space=pl.ANY)
    in_specs[7] = any_spec    # g2_w0
    in_specs[8] = any_spec    # g2_w1 (negated)
    in_specs[10] = any_spec   # g3_w0
    in_specs[11] = any_spec   # g3_w1 (negated)

    return pl.pallas_call(
        mirna_gcn_kernel,
        out_shape=jax.ShapeDtypeStruct((N_NODES, H3), jnp.float32),
        grid_spec=pltpu.PrefetchScalarGridSpec(
            num_scalar_prefetch=0,
            grid=(1,),
            in_specs=in_specs,
            out_specs=pl.BlockSpec((N_NODES, H3), lambda i: (0, 0)),
            scratch_shapes=[
                pltpu.VMEM((H1, H2), jnp.bfloat16),   # g2_w0 landing buffer
                pltpu.VMEM((H1, H2), jnp.bfloat16),   # g2_w1 landing buffer
                pltpu.VMEM((H2, H3), jnp.bfloat16),   # g3_w0 landing buffer
                pltpu.VMEM((H2, H3), jnp.bfloat16),   # g3_w1 landing buffer
                pltpu.SemaphoreType.DMA((4,)),
            ],
        ),
        compiler_params=pltpu.CompilerParams(
            dimension_semantics=("arbitrary",),
            vmem_limit_bytes=16 << 20,
        ),
    )(*args)


def build_norm_adj(edge_index, num_nodes):
    """Dense D^{-1/2} A D^{-1/2} from edge_index (matches get_laplacian('sym') deg)."""
    row, col = edge_index[0], edge_index[1]
    a = jnp.zeros((num_nodes, num_nodes), jnp.float32).at[row, col].set(1.0)
    deg = jnp.sum(a, axis=1)
    dinv = jnp.where(deg > 0, 1.0 / jnp.sqrt(deg), 0.0)
    return dinv[:, None] * a * dinv[None, :]


def init_params(key):
    ks = jax.random.split(key, 8)
    scale = 0.05

    def w(k, shape):
        # weight matrices stored in bf16 (MXU-native); biases kept in f32
        return (scale * jax.random.normal(k, shape, jnp.float32)).astype(jnp.bfloat16)

    return {
        # Linear LP: stored already transposed -> x @ lp_w + lp_b
        "lp_w": w(ks[0], (NUM_FEATURE, H1)),
        "lp_b": scale * jax.random.normal(ks[1], (1, H1), jnp.float32),
        # ChebConv weights: lins[k] applied as X @ W_k
        "g1_w0": w(ks[2], (NUM_FEATURE, H1)),
        "g1_w1": w(ks[3], (NUM_FEATURE, H1)),
        "g1_b": jnp.zeros((1, H1), jnp.float32),
        "g2_w0": w(ks[4], (H1, H2)),
        "g2_w1": w(ks[5], (H1, H2)),
        "g2_b": jnp.zeros((1, H2), jnp.float32),
        "g3_w0": w(ks[6], (H2, H3)),
        "g3_w1": w(ks[7], (H2, H3)),
        "g3_b": jnp.zeros((1, H3), jnp.float32),
    }


def reference_forward(x, a_hat, params):
    """Pure-JAX reference (same bf16-operand / f32-accumulate math, no Pallas)."""
    ab = a_hat.astype(jnp.bfloat16)

    def mm(a, b):
        return jnp.dot(a.astype(jnp.bfloat16), b.astype(jnp.bfloat16),
                       preferred_element_type=jnp.float32)

    def cheb(h, w0, w1, b):
        tx1 = mm(ab, h)                       # A_hat @ h
        return mm(h, w0) - mm(tx1, w1) + b    # L_hat = -A_hat

    def ln(h):
        mu = jnp.mean(h)
        var = jnp.mean((h - mu) ** 2)
        return (h - mu) * jax.lax.rsqrt(var + LN_EPS)

    res_x = mm(x, params["lp_w"]) + params["lp_b"]
    h = cheb(x, params["g1_w0"], params["g1_w1"], params["g1_b"])
    h = ln(_silu(h))
    h = cheb(h, params["g2_w0"], params["g2_w1"], params["g2_b"])
    h = ln(_silu(res_x + h))
    return cheb(h, params["g3_w0"], params["g3_w1"], params["g3_b"])


if __name__ == "__main__":
    key = jax.random.PRNGKey(0)
    kx, ke1, ke2, kp = jax.random.split(key, 4)

    # node features  (data.x)
    x = jax.random.normal(kx, (N_NODES, NUM_FEATURE), jnp.float32)

    # random undirected graph  (data.edge_index)
    n_edges = 600
    src = jax.random.randint(ke1, (n_edges,), 0, N_NODES)
    dst = jax.random.randint(ke2, (n_edges,), 0, N_NODES)
    edge_index = jnp.stack([jnp.concatenate([src, dst]),
                            jnp.concatenate([dst, src])], axis=0)

    a_hat = build_norm_adj(edge_index, N_NODES)
    params = init_params(kp)

    out = jax.block_until_ready(mirna_gcn_forward(x, a_hat, params))
    ref = reference_forward(x, a_hat, params)

    assert out.shape == (N_NODES, H3)
    assert bool(jnp.all(jnp.isfinite(out))), "non-finite output"
    # bf16 matmul operands (f32 accumulation) -> loosened tolerance vs reference
    assert jnp.allclose(out, ref, atol=2e-2, rtol=2e-2), "mismatch vs JAX reference"

    print("KERNEL_OK")
</pallas_src>

<mosaic_0001>
module attributes {stable_mosaic.version = 11 : i64} {
  func.func @mirna_gcn_kernel(%arg0: i32, %arg1: memref<248x128xf32, #tpu.memory_space<vmem>>, %arg2: memref<248x248xbf16, #tpu.memory_space<vmem>>, %arg3: memref<128x256xbf16, #tpu.memory_space<vmem>>, %arg4: memref<1x256xf32, #tpu.memory_space<vmem>>, %arg5: memref<128x256xbf16, #tpu.memory_space<vmem>>, %arg6: memref<128x256xbf16, #tpu.memory_space<vmem>>, %arg7: memref<1x256xf32, #tpu.memory_space<vmem>>, %arg8: memref<256x256xbf16, #tpu.memory_space<any>>, %arg9: memref<256x256xbf16, #tpu.memory_space<any>>, %arg10: memref<1x256xf32, #tpu.memory_space<vmem>>, %arg11: memref<256x128xbf16, #tpu.memory_space<any>>, %arg12: memref<256x128xbf16, #tpu.memory_space<any>>, %arg13: memref<1x128xf32, #tpu.memory_space<vmem>>, %arg14: memref<248x128xf32, #tpu.memory_space<vmem>>, %arg15: memref<256x256xbf16, #tpu.memory_space<vmem>>, %arg16: memref<256x256xbf16, #tpu.memory_space<vmem>>, %arg17: memref<256x128xbf16, #tpu.memory_space<vmem>>, %arg18: memref<256x128xbf16, #tpu.memory_space<vmem>>, %arg19: memref<4x!tpu.dma_semaphore, #tpu.memory_space<semaphore_mem>>) attributes {dimension_semantics = [#tpu.dimension_semantics<arbitrary>], iteration_bounds = array<i64: 1>, scalar_prefetch = 0 : i64, scratch_operands = 5 : i64, tpu.core_type = #tpu.core_type<tc>, window_params = [{pipeline_mode = #tpu.pipeline_mode<synchronous>, transform_indices = @transform_0, window_bounds = array<i64: 248, 128>}, {pipeline_mode = #tpu.pipeline_mode<synchronous>, transform_indices = @transform_1, window_bounds = array<i64: 248, 248>}, {pipeline_mode = #tpu.pipeline_mode<synchronous>, transform_indices = @transform_2, window_bounds = array<i64: 128, 256>}, {pipeline_mode = #tpu.pipeline_mode<synchronous>, transform_indices = @transform_3, window_bounds = array<i64: 1, 256>}, {pipeline_mode = #tpu.pipeline_mode<synchronous>, transform_indices = @transform_4, window_bounds = array<i64: 128, 256>}, {pipeline_mode = #tpu.pipeline_mode<synchronous>, transform_indices = @transform_5, window_bounds = array<i64: 128, 256>}, {pipeline_mode = #tpu.pipeline_mode<synchronous>, transform_indices = @transform_6, window_bounds = array<i64: 1, 256>}, {}, {}, {pipeline_mode = #tpu.pipeline_mode<synchronous>, transform_indices = @transform_9, window_bounds = array<i64: 1, 256>}, {}, {}, {pipeline_mode = #tpu.pipeline_mode<synchronous>, transform_indices = @transform_12, window_bounds = array<i64: 1, 128>}, {pipeline_mode = #tpu.pipeline_mode<synchronous>, transform_indices = @transform_13, window_bounds = array<i64: 248, 128>}]} {
    %c0_i32 = arith.constant 0 : i32
    %0 = tpu.memref_slice %arg19[%c0_i32] : memref<4x!tpu.dma_semaphore, #tpu.memory_space<semaphore_mem>> -> memref<1x!tpu.dma_semaphore, #tpu.memory_space<semaphore_mem>>
    %1 = tpu.memref_squeeze %0 : memref<1x!tpu.dma_semaphore, #tpu.memory_space<semaphore_mem>> -> memref<!tpu.dma_semaphore, #tpu.memory_space<semaphore_mem>>
    tpu.enqueue_dma source(%arg8 : memref<256x256xbf16, #tpu.memory_space<any>>) target(%arg15 : memref<256x256xbf16, #tpu.memory_space<vmem>>) target_semaphore(%1 : memref<!tpu.dma_semaphore, #tpu.memory_space<semaphore_mem>>)
    %c1_i32 = arith.constant 1 : i32
    %2 = tpu.memref_slice %arg19[%c1_i32] : memref<4x!tpu.dma_semaphore, #tpu.memory_space<semaphore_mem>> -> memref<1x!tpu.dma_semaphore, #tpu.memory_space<semaphore_mem>>
    %3 = tpu.memref_squeeze %2 : memref<1x!tpu.dma_semaphore, #tpu.memory_space<semaphore_mem>> -> memref<!tpu.dma_semaphore, #tpu.memory_space<semaphore_mem>>
    tpu.enqueue_dma source(%arg9 : memref<256x256xbf16, #tpu.memory_space<any>>) target(%arg16 : memref<256x256xbf16, #tpu.memory_space<vmem>>) target_semaphore(%3 : memref<!tpu.dma_semaphore, #tpu.memory_space<semaphore_mem>>)
    %c2_i32 = arith.constant 2 : i32
    %4 = tpu.memref_slice %arg19[%c2_i32] : memref<4x!tpu.dma_semaphore, #tpu.memory_space<semaphore_mem>> -> memref<1x!tpu.dma_semaphore, #tpu.memory_space<semaphore_mem>>
    %5 = tpu.memref_squeeze %4 : memref<1x!tpu.dma_semaphore, #tpu.memory_space<semaphore_mem>> -> memref<!tpu.dma_semaphore, #tpu.memory_space<semaphore_mem>>
    tpu.enqueue_dma source(%arg11 : memref<256x128xbf16, #tpu.memory_space<any>>) target(%arg17 : memref<256x128xbf16, #tpu.memory_space<vmem>>) target_semaphore(%5 : memref<!tpu.dma_semaphore, #tpu.memory_space<semaphore_mem>>)
    %c3_i32 = arith.constant 3 : i32
    %6 = tpu.memref_slice %arg19[%c3_i32] : memref<4x!tpu.dma_semaphore, #tpu.memory_space<semaphore_mem>> -> memref<1x!tpu.dma_semaphore, #tpu.memory_space<semaphore_mem>>
    %7 = tpu.memref_squeeze %6 : memref<1x!tpu.dma_semaphore, #tpu.memory_space<semaphore_mem>> -> memref<!tpu.dma_semaphore, #tpu.memory_space<semaphore_mem>>
    tpu.enqueue_dma source(%arg12 : memref<256x128xbf16, #tpu.memory_space<any>>) target(%arg18 : memref<256x128xbf16, #tpu.memory_space<vmem>>) target_semaphore(%7 : memref<!tpu.dma_semaphore, #tpu.memory_space<semaphore_mem>>)
    %c0 = arith.constant 0 : index
    %c0_0 = arith.constant 0 : index
    %8 = vector.load %arg2[%c0, %c0_0] : memref<248x248xbf16, #tpu.memory_space<vmem>>, vector<248x248xbf16>
    %c0_1 = arith.constant 0 : index
    %c0_2 = arith.constant 0 : index
    %9 = vector.load %arg1[%c0_1, %c0_2] : memref<248x128xf32, #tpu.memory_space<vmem>>, vector<248x128xf32>
    %10 = arith.truncf %9 : vector<248x128xf32> to vector<248x128xbf16>
    %c0_3 = arith.constant 0 : index
    %c0_4 = arith.constant 0 : index
    %11 = vector.load %arg3[%c0_3, %c0_4] : memref<128x256xbf16, #tpu.memory_space<vmem>>, vector<128x256xbf16>
    %cst = arith.constant dense<0.000000e+00> : vector<248x256xf32>
    %12 = tpu.matmul %10, %11, %cst {dimension_numbers = #tpu.dot_dimension_numbers<[1], [0], [0], [1], [0, 0, 1, 1], [], []>} : vector<248x128xbf16>, vector<128x256xbf16>, vector<248x256xf32> -> vector<248x256xf32>
    %c0_5 = arith.constant 0 : index
    %c0_6 = arith.constant 0 : index
    %13 = vector.load %arg4[%c0_5, %c0_6] : memref<1x256xf32, #tpu.memory_space<vmem>>, vector<1x256xf32>
    %14 = vector.broadcast %13 : vector<1x256xf32> to vector<248x256xf32>
    %15 = arith.addf %12, %14 : vector<248x256xf32>
    %c0_7 = arith.constant 0 : index
    %c0_8 = arith.constant 0 : index
    %16 = vector.load %arg5[%c0_7, %c0_8] : memref<128x256xbf16, #tpu.memory_space<vmem>>, vector<128x256xbf16>
    %c0_9 = arith.constant 0 : index
    %c0_10 = arith.constant 0 : index
    %17 = vector.load %arg6[%c0_9, %c0_10] : memref<128x256xbf16, #tpu.memory_space<vmem>>, vector<128x256xbf16>
    %c0_11 = arith.constant 0 : index
    %c0_12 = arith.constant 0 : index
    %18 = vector.load %arg7[%c0_11, %c0_12] : memref<1x256xf32, #tpu.memory_space<vmem>>, vector<1x256xf32>
    %cst_13 = arith.constant dense<0.000000e+00> : vector<248x128xf32>
    %19 = tpu.matmul %8, %10, %cst_13 {dimension_numbers = #tpu.dot_dimension_numbers<[1], [0], [0], [1], [0, 0, 1, 1], [], []>} : vector<248x248xbf16>, vector<248x128xbf16>, vector<248x128xf32> -> vector<248x128xf32>
    %cst_14 = arith.constant dense<0.000000e+00> : vector<248x256xf32>
    %20 = tpu.matmul %10, %16, %cst_14 {dimension_numbers = #tpu.dot_dimension_numbers<[1], [0], [0], [1], [0, 0, 1, 1], [], []>} : vector<248x128xbf16>, vector<128x256xbf16>, vector<248x256xf32> -> vector<248x256xf32>
    %21 = arith.truncf %19 : vector<248x128xf32> to vector<248x128xbf16>
    %cst_15 = arith.constant dense<0.000000e+00> : vector<248x256xf32>
    %22 = tpu.matmul %21, %17, %cst_15 {dimension_numbers = #tpu.dot_dimension_numbers<[1], [0], [0], [1], [0, 0, 1, 1], [], []>} : vector<248x128xbf16>, vector<128x256xbf16>, vector<248x256xf32> -> vector<248x256xf32>
    %23 = arith.addf %20, %22 : vector<248x256xf32>
    %24 = vector.broadcast %18 : vector<1x256xf32> to vector<248x256xf32>
    %25 = arith.addf %23, %24 : vector<248x256xf32>
    %26 = arith.negf %25 : vector<248x256xf32>
    %27 = math.exp %26 : vector<248x256xf32>
    %cst_16 = arith.constant 1.000000e+00 : f32
    %28 = vector.broadcast %cst_16 : f32 to vector<248x256xf32>
    %29 = arith.addf %28, %27 : vector<248x256xf32>
    %30 = arith.divf %28, %29 : vector<248x256xf32>
    %31 = arith.mulf %25, %30 : vector<248x256xf32>
    %32 = vector.shape_cast %31 : vector<248x256xf32> to vector<1x248x256xf32>
    %cst_17 = arith.constant dense<0.000000e+00> : vector<1xf32>
    %33 = vector.multi_reduction <add>, %32, %cst_17 [1, 2] : vector<1x248x256xf32> to vector<1xf32>
    %34 = vector.shape_cast %33 : vector<1xf32> to vector<1x1x1xf32>
    %35 = vector.extract %34[0, 0, 0] : f32 from vector<1x1x1xf32>
    %36 = arith.mulf %31, %31 : vector<248x256xf32>
    %37 = vector.shape_cast %36 : vector<248x256xf32> to vector<1x248x256xf32>
    %cst_18 = arith.constant dense<0.000000e+00> : vector<1xf32>
    %38 = vector.multi_reduction <add>, %37, %cst_18 [1, 2] : vector<1x248x256xf32> to vector<1xf32>
    %39 = vector.shape_cast %38 : vector<1xf32> to vector<1x1x1xf32>
    %40 = vector.extract %39[0, 0, 0] : f32 from vector<1x1x1xf32>
    %cst_19 = arith.constant 6.348800e+04 : f32
    %41 = arith.divf %35, %cst_19 : f32
    %cst_20 = arith.constant 6.348800e+04 : f32
    %42 = arith.divf %40, %cst_20 : f32
    %43 = arith.mulf %41, %41 : f32
    %44 = arith.subf %42, %43 : f32
    %cst_21 = arith.constant 9.99999974E-6 : f32
    %45 = arith.addf %44, %cst_21 : f32
    %46 = math.rsqrt %45 : f32
    %47 = vector.broadcast %46 : f32 to vector<248x256xf32>
    %48 = arith.mulf %31, %47 : vector<248x256xf32>
    %49 = arith.mulf %41, %46 : f32
    %50 = vector.broadcast %49 : f32 to vector<248x256xf32>
    %51 = arith.subf %48, %50 : vector<248x256xf32>
    %c0_i32_22 = arith.constant 0 : i32
    %52 = tpu.memref_slice %arg19[%c0_i32_22] : memref<4x!tpu.dma_semaphore, #tpu.memory_space<semaphore_mem>> -> memref<1x!tpu.dma_semaphore, #tpu.memory_space<semaphore_mem>>
    %53 = tpu.memref_squeeze %52 : memref<1x!tpu.dma_semaphore, #tpu.memory_space<semaphore_mem>> -> memref<!tpu.dma_semaphore, #tpu.memory_space<semaphore_mem>>
    tpu.wait_dma2 semaphore(%53 : memref<!tpu.dma_semaphore, #tpu.memory_space<semaphore_mem>>) src(%arg8 : memref<256x256xbf16, #tpu.memory_space<any>>) dst(%arg15 : memref<256x256xbf16, #tpu.memory_space<vmem>>)
    %c1_i32_23 = arith.constant 1 : i32
    %54 = tpu.memref_slice %arg19[%c1_i32_23] : memref<4x!tpu.dma_semaphore, #tpu.memory_space<semaphore_mem>> -> memref<1x!tpu.dma_semaphore, #tpu.memory_space<semaphore_mem>>
    %55 = tpu.memref_squeeze %54 : memref<1x!tpu.dma_semaphore, #tpu.memory_space<semaphore_mem>> -> memref<!tpu.dma_semaphore, #tpu.memory_space<semaphore_mem>>
    tpu.wait_dma2 semaphore(%55 : memref<!tpu.dma_semaphore, #tpu.memory_space<semaphore_mem>>) src(%arg9 : memref<256x256xbf16, #tpu.memory_space<any>>) dst(%arg16 : memref<256x256xbf16, #tpu.memory_space<vmem>>)
    %c0_24 = arith.constant 0 : index
    %c0_25 = arith.constant 0 : index
    %56 = vector.load %arg15[%c0_24, %c0_25] : memref<256x256xbf16, #tpu.memory_space<vmem>>, vector<256x256xbf16>
    %c0_26 = arith.constant 0 : index
    %c0_27 = arith.constant 0 : index
    %57 = vector.load %arg16[%c0_26, %c0_27] : memref<256x256xbf16, #tpu.memory_space<vmem>>, vector<256x256xbf16>
    %c0_28 = arith.constant 0 : index
    %c0_29 = arith.constant 0 : index
    %58 = vector.load %arg10[%c0_28, %c0_29] : memref<1x256xf32, #tpu.memory_space<vmem>>, vector<1x256xf32>
    %59 = arith.truncf %51 : vector<248x256xf32> to vector<248x256xbf16>
    %cst_30 = arith.constant dense<0.000000e+00> : vector<248x256xf32>
    %60 = tpu.matmul %8, %59, %cst_30 {dimension_numbers = #tpu.dot_dimension_numbers<[1], [0], [0], [1], [0, 0, 1, 1], [], []>} : vector<248x248xbf16>, vector<248x256xbf16>, vector<248x256xf32> -> vector<248x256xf32>
    %cst_31 = arith.constant dense<0.000000e+00> : vector<248x256xf32>
    %61 = tpu.matmul %59, %56, %cst_31 {dimension_numbers = #tpu.dot_dimension_numbers<[1], [0], [0], [1], [0, 0, 1, 1], [], []>} : vector<248x256xbf16>, vector<256x256xbf16>, vector<248x256xf32> -> vector<248x256xf32>
    %62 = arith.truncf %60 : vector<248x256xf32> to vector<248x256xbf16>
    %cst_32 = arith.constant dense<0.000000e+00> : vector<248x256xf32>
    %63 = tpu.matmul %62, %57, %cst_32 {dimension_numbers = #tpu.dot_dimension_numbers<[1], [0], [0], [1], [0, 0, 1, 1], [], []>} : vector<248x256xbf16>, vector<256x256xbf16>, vector<248x256xf32> -> vector<248x256xf32>
    %64 = arith.addf %61, %63 : vector<248x256xf32>
    %65 = vector.broadcast %58 : vector<1x256xf32> to vector<248x256xf32>
    %66 = arith.addf %64, %65 : vector<248x256xf32>
    %67 = arith.addf %15, %66 : vector<248x256xf32>
    %68 = arith.negf %67 : vector<248x256xf32>
    %69 = math.exp %68 : vector<248x256xf32>
    %cst_33 = arith.constant 1.000000e+00 : f32
    %70 = vector.broadcast %cst_33 : f32 to vector<248x256xf32>
    %71 = arith.addf %70, %69 : vector<248x256xf32>
    %72 = arith.divf %70, %71 : vector<248x256xf32>
    %73 = arith.mulf %67, %72 : vector<248x256xf32>
    %74 = vector.shape_cast %73 : vector<248x256xf32> to vector<1x248x256xf32>
    %cst_34 = arith.constant dense<0.000000e+00> : vector<1xf32>
    %75 = vector.multi_reduction <add>, %74, %cst_34 [1, 2] : vector<1x248x256xf32> to vector<1xf32>
    %76 = vector.shape_cast %75 : vector<1xf32> to vector<1x1x1xf32>
    %77 = vector.extract %76[0, 0, 0] : f32 from vector<1x1x1xf32>
    %78 = arith.mulf %73, %73 : vector<248x256xf32>
    %79 = vector.shape_cast %78 : vector<248x256xf32> to vector<1x248x256xf32>
    %cst_35 = arith.constant dense<0.000000e+00> : vector<1xf32>
    %80 = vector.multi_reduction <add>, %79, %cst_35 [1, 2] : vector<1x248x256xf32> to vector<1xf32>
    %81 = vector.shape_cast %80 : vector<1xf32> to vector<1x1x1xf32>
    %82 = vector.extract %81[0, 0, 0] : f32 from vector<1x1x1xf32>
    %cst_36 = arith.constant 6.348800e+04 : f32
    %83 = arith.divf %77, %cst_36 : f32
    %cst_37 = arith.constant 6.348800e+04 : f32
    %84 = arith.divf %82, %cst_37 : f32
    %85 = arith.mulf %83, %83 : f32
    %86 = arith.subf %84, %85 : f32
    %cst_38 = arith.constant 9.99999974E-6 : f32
    %87 = arith.addf %86, %cst_38 : f32
    %88 = math.rsqrt %87 : f32
    %89 = vector.broadcast %88 : f32 to vector<248x256xf32>
    %90 = arith.mulf %73, %89 : vector<248x256xf32>
    %91 = arith.mulf %83, %88 : f32
    %92 = vector.broadcast %91 : f32 to vector<248x256xf32>
    %93 = arith.subf %90, %92 : vector<248x256xf32>
    %c2_i32_39 = arith.constant 2 : i32
    %94 = tpu.memref_slice %arg19[%c2_i32_39] : memref<4x!tpu.dma_semaphore, #tpu.memory_space<semaphore_mem>> -> memref<1x!tpu.dma_semaphore, #tpu.memory_space<semaphore_mem>>
    %95 = tpu.memref_squeeze %94 : memref<1x!tpu.dma_semaphore, #tpu.memory_space<semaphore_mem>> -> memref<!tpu.dma_semaphore, #tpu.memory_space<semaphore_mem>>
    tpu.wait_dma2 semaphore(%95 : memref<!tpu.dma_semaphore, #tpu.memory_space<semaphore_mem>>) src(%arg11 : memref<256x128xbf16, #tpu.memory_space<any>>) dst(%arg17 : memref<256x128xbf16, #tpu.memory_space<vmem>>)
    %c3_i32_40 = arith.constant 3 : i32
    %96 = tpu.memref_slice %arg19[%c3_i32_40] : memref<4x!tpu.dma_semaphore, #tpu.memory_space<semaphore_mem>> -> memref<1x!tpu.dma_semaphore, #tpu.memory_space<semaphore_mem>>
    %97 = tpu.memref_squeeze %96 : memref<1x!tpu.dma_semaphore, #tpu.memory_space<semaphore_mem>> -> memref<!tpu.dma_semaphore, #tpu.memory_space<semaphore_mem>>
    tpu.wait_dma2 semaphore(%97 : memref<!tpu.dma_semaphore, #tpu.memory_space<semaphore_mem>>) src(%arg12 : memref<256x128xbf16, #tpu.memory_space<any>>) dst(%arg18 : memref<256x128xbf16, #tpu.memory_space<vmem>>)
    %c0_41 = arith.constant 0 : index
    %c0_42 = arith.constant 0 : index
    %98 = vector.load %arg17[%c0_41, %c0_42] : memref<256x128xbf16, #tpu.memory_space<vmem>>, vector<256x128xbf16>
    %c0_43 = arith.constant 0 : index
    %c0_44 = arith.constant 0 : index
    %99 = vector.load %arg18[%c0_43, %c0_44] : memref<256x128xbf16, #tpu.memory_space<vmem>>, vector<256x128xbf16>
    %c0_45 = arith.constant 0 : index
    %c0_46 = arith.constant 0 : index
    %100 = vector.load %arg13[%c0_45, %c0_46] : memref<1x128xf32, #tpu.memory_space<vmem>>, vector<1x128xf32>
    %101 = arith.truncf %93 : vector<248x256xf32> to vector<248x256xbf16>
    %cst_47 = arith.constant dense<0.000000e+00> : vector<248x256xf32>
    %102 = tpu.matmul %8, %101, %cst_47 {dimension_numbers = #tpu.dot_dimension_numbers<[1], [0], [0], [1], [0, 0, 1, 1], [], []>} : vector<248x248xbf16>, vector<248x256xbf16>, vector<248x256xf32> -> vector<248x256xf32>
    %cst_48 = arith.constant dense<0.000000e+00> : vector<248x128xf32>
    %103 = tpu.matmul %101, %98, %cst_48 {dimension_numbers = #tpu.dot_dimension_numbers<[1], [0], [0], [1], [0, 0, 1, 1], [], []>} : vector<248x256xbf16>, vector<256x128xbf16>, vector<248x128xf32> -> vector<248x128xf32>
    %104 = arith.truncf %102 : vector<248x256xf32> to vector<248x256xbf16>
    %cst_49 = arith.constant dense<0.000000e+00> : vector<248x128xf32>
    %105 = tpu.matmul %104, %99, %cst_49 {dimension_numbers = #tpu.dot_dimension_numbers<[1], [0], [0], [1], [0, 0, 1, 1], [], []>} : vector<248x256xbf16>, vector<256x128xbf16>, vector<248x128xf32> -> vector<248x128xf32>
    %106 = arith.addf %103, %105 : vector<248x128xf32>
    %107 = vector.broadcast %100 : vector<1x128xf32> to vector<248x128xf32>
    %108 = arith.addf %106, %107 : vector<248x128xf32>
    %c0_50 = arith.constant 0 : index
    %c0_51 = arith.constant 0 : index
    %109 = vector.load %arg14[%c0_50, %c0_51] : memref<248x128xf32, #tpu.memory_space<vmem>>, vector<248x128xf32>
    tpu.vector_store %arg14[%c0_50, %c0_51], %108 {strides = array<i32>} : memref<248x128xf32, #tpu.memory_space<vmem>>, vector<248x128xf32>,
    return
  }
  func.func @transform_0(%arg0: i32) -> (i32, i32) {
    %c0_i32 = arith.constant 0 : i32
    %c0_i32_0 = arith.constant 0 : i32
    %c0_i32_1 = arith.constant 0 : i32
    return %c0_i32, %c0_i32_0 : i32, i32
  }
  func.func @transform_1(%arg0: i32) -> (i32, i32) {
    %c0_i32 = arith.constant 0 : i32
    %c0_i32_0 = arith.constant 0 : i32
    %c0_i32_1 = arith.constant 0 : i32
    return %c0_i32, %c0_i32_0 : i32, i32
  }
  func.func @transform_2(%arg0: i32) -> (i32, i32) {
    %c0_i32 = arith.constant 0 : i32
    %c0_i32_0 = arith.constant 0 : i32
    %c0_i32_1 = arith.constant 0 : i32
    return %c0_i32, %c0_i32_0 : i32, i32
  }
  func.func @transform_3(%arg0: i32) -> (i32, i32) {
    %c0_i32 = arith.constant 0 : i32
    %c0_i32_0 = arith.constant 0 : i32
    %c0_i32_1 = arith.constant 0 : i32
    return %c0_i32, %c0_i32_0 : i32, i32
  }
  func.func @transform_4(%arg0: i32) -> (i32, i32) {
    %c0_i32 = arith.constant 0 : i32
    %c0_i32_0 = arith.constant 0 : i32
    %c0_i32_1 = arith.constant 0 : i32
    return %c0_i32, %c0_i32_0 : i32, i32
  }
  func.func @transform_5(%arg0: i32) -> (i32, i32) {
    %c0_i32 = arith.constant 0 : i32
    %c0_i32_0 = arith.constant 0 : i32
    %c0_i32_1 = arith.constant 0 : i32
    return %c0_i32, %c0_i32_0 : i32, i32
  }
  func.func @transform_6(%arg0: i32) -> (i32, i32) {
    %c0_i32 = arith.constant 0 : i32
    %c0_i32_0 = arith.constant 0 : i32
    %c0_i32_1 = arith.constant 0 : i32
    return %c0_i32, %c0_i32_0 : i32, i32
  }
  func.func @transform_9(%arg0: i32) -> (i32, i32) {
    %c0_i32 = arith.constant 0 : i32
    %c0_i32_0 = arith.constant 0 : i32
    %c0_i32_1 = arith.constant 0 : i32
    return %c0_i32, %c0_i32_0 : i32, i32
  }
  func.func @transform_12(%arg0: i32) -> (i32, i32) {
    %c0_i32 = arith.constant 0 : i32
    %c0_i32_0 = arith.constant 0 : i32
    %c0_i32_1 = arith.constant 0 : i32
    return %c0_i32, %c0_i32_0 : i32, i32
  }
  func.func @transform_13(%arg0: i32) -> (i32, i32) {
    %c0_i32 = arith.constant 0 : i32
    %c0_i32_0 = arith.constant 0 : i32
    %c0_i32_1 = arith.constant 0 : i32
    return %c0_i32, %c0_i32_0 : i32, i32
  }
}

</mosaic_0001>

<llo_original>
// kernel: tpu_custom_call.1
$region0: #{tpu_custom_call.1}
  #allocation0 [shape = 'u32[]', space=smem, size = 0x4, offset = 0x4, fixed_abs, tag = 'smem constant byte address 0x4 - core index']
  #allocation1 [shape = 'u32[144,128]{1,0:T(1,128)}', space=vmem, size = 0x12000, scoped, tag = 'internal scratch']
  #allocation2 [shape = 'bf16[256,256]{1,0:T(16,128)(2,1)}', space=vmem, size = 0x20000, scoped, tag = 'scratch operand']
  #allocation3 [shape = 'bf16[256,256]{1,0:T(16,128)(2,1)}', space=vmem, size = 0x20000, scoped, tag = 'scratch operand']
  #allocation4 [shape = 'bf16[256,128]{1,0:T(16,128)(2,1)}', space=vmem, size = 0x10000, scoped, tag = 'scratch operand']
  #allocation5 [shape = 'bf16[256,128]{1,0:T(16,128)(2,1)}', space=vmem, size = 0x10000, scoped, tag = 'scratch operand']
  #allocation6 [shape = 's32[4]{0}', space=sflag, size = 0x10, scoped, tag = 'scratch operand']
  #allocation17 [shape = 's32[]', space=sflag, size = 0x4, offset = 0, fixed_abs, tag = 'sflag constant byte address 0x0 - dummy sync flag']
  #allocation19 [shape = 's32[]', space=sflag, size = 0x4, offset = 0, fixed_abs, tag = 'sflag constant byte address 0x0 - dummy sync flag']
  #allocation21 [shape = 's32[]', space=sflag, size = 0x4, offset = 0, fixed_abs, tag = 'sflag constant byte address 0x0 - dummy sync flag']
  #allocation22 [shape = 's32[]', space=sflag, size = 0x4, offset = 0, fixed_abs, tag = 'sflag constant byte address 0x0 - dummy sync flag']
  #allocation23 [shape = 'u32[]', space=smem, size = 0x4, offset = 0x44, fixed_abs, tag = 'smem constant byte address 0x44 - assertion arg 0']
  #allocation24 [shape = 'u32[]', space=smem, size = 0x4, offset = 0x48, fixed_abs, tag = 'smem constant byte address 0x48 - assertion arg 1']
  #allocation25 [shape = 's32[]', space=sflag, size = 0x4, offset = 0, fixed_abs, tag = 'sflag constant byte address 0x0 - dummy sync flag']
  #allocation26 [shape = 's32[]', space=sflag, size = 0x4, offset = 0, fixed_abs, tag = 'sflag constant byte address 0x0 - dummy sync flag']
  %s0 = inlined_call_operand.hbm [shape: f32[248,128], index: 0, kind: input, shape index: {}]
  %s1 = inlined_call_operand.hbm [shape: bf16[248,248], index: 1, kind: input, shape index: {}]
  %s2 = inlined_call_operand.hbm [shape: bf16[128,256], index: 2, kind: input, shape index: {}]
  %s3 = inlined_call_operand.vmem [shape: f32[1,256], index: 3, kind: input, shape index: {}]
  %s4 = inlined_call_operand.hbm [shape: bf16[128,256], index: 4, kind: input, shape index: {}]
  %s5 = inlined_call_operand.hbm [shape: bf16[128,256], index: 5, kind: input, shape index: {}]
  %s6 = inlined_call_operand.vmem [shape: f32[1,256], index: 6, kind: input, shape index: {}]
  %s7 = inlined_call_operand.hbm [shape: bf16[256,256], index: 7, kind: input, shape index: {}]
  %s8 = inlined_call_operand.hbm [shape: bf16[256,256], index: 8, kind: input, shape index: {}]
  %s9 = inlined_call_operand.vmem [shape: f32[1,256], index: 9, kind: input, shape index: {}]
  %s10 = inlined_call_operand.hbm [shape: bf16[256,128], index: 10, kind: input, shape index: {}]
  %s11 = inlined_call_operand.hbm [shape: bf16[256,128], index: 11, kind: input, shape index: {}]
  %s12 = inlined_call_operand.vmem [shape: f32[1,128], index: 12, kind: input, shape index: {}]
  %s13 = inlined_call_operand.hbm [shape: f32[248,128], index: 13, kind: output, shape index: {}]
  %s14 = sld [smem:[#allocation0]]
  $region74: #{tpu_custom_call.1} parent=0
    _
  %s16 = ssub.s32 1, %s14
  %s17 = scalar_select 0, %s16, %s14
  $region1: #{tpu_custom_call.1} parent=0
    #allocation7 [shape = 'u8[126976]{0}', space=vmem, size = 0x1f000, scoped, tag = 'input window, operand 0, single buffered']
    #allocation8 [shape = 's32[1]{0}', space=sflag, size = 0x4, scoped, tag = 'scoped memory for tpu_custom_call.1']
    #allocation9 [shape = 's32[1]{0}', space=sflag, size = 0x4, scoped, tag = 'scoped memory for tpu_custom_call.1']
    #allocation10 [shape = 'u8[126976]{0}', space=vmem, size = 0x1f000, scoped, tag = 'input window, operand 1, single buffered']
    #allocation11 [shape = 's32[1]{0}', space=sflag, size = 0x4, scoped, tag = 'scoped memory for tpu_custom_call.1']
    #allocation12 [shape = 'u8[65536]{0}', space=vmem, size = 0x10000, scoped, tag = 'input window, operand 2, single buffered']
    #allocation13 [shape = 'u8[65536]{0}', space=vmem, size = 0x10000, scoped, tag = 'input window, operand 4, single buffered']
    #allocation14 [shape = 's32[1]{0}', space=sflag, size = 0x4, scoped, tag = 'scoped memory for tpu_custom_call.1']
    #allocation15 [shape = 'u8[65536]{0}', space=vmem, size = 0x10000, scoped, tag = 'input window, operand 5, single buffered']
    #allocation16 [shape = 'u8[126976]{0}', space=vmem, size = 0x1f000, scoped, tag = 'output window, operand 0, single buffered']
    #allocation18 [shape = 'u32[9]{0}', space=smem, size = 0x24, scoped, tag = 'DMA stride descriptor']
    #allocation20 [shape = 'u32[9]{0}', space=smem, size = 0x24, scoped, tag = 'DMA stride descriptor']
    %18 = vsyncpa [#allocation8], 0
    %19 = vsyncpa [#allocation11], 0
    %20 = vsyncpa [#allocation14], 0
    %21 = vsyncpa [#allocation9], 0
    // Predicated region
    $region2: #{tpu_custom_call.1} parent=1 // pred_check
      _
    $region3: #{tpu_custom_call.1} parent=1 // pred_check_branch
      %23 = sbr.rel (0) target = $region5
    $region4: #{tpu_custom_call.1} parent=1 // pred_region
      %s25 = ssub.s32 3968, 3968
      %26 = vsyncadd [#allocation8], %s25
      %s27 = sshll.u32 [#allocation7], 4
      %s28 = int_to_ptr.vmem [resolvable:$true] %s27
      %33 = dma.hbm_to_vmem [thread:$0]  %s0, 3968, %s28, [#allocation8], 128, 128, 8
    $region5: #{tpu_custom_call.1} parent=1 // pred_fallthru
      _
    // Predicated region
    $region6: #{tpu_custom_call.1} parent=1 // pred_check
      _
    $region7: #{tpu_custom_call.1} parent=1 // pred_check_branch
      %35 = sbr.rel (0) target = $region9
    $region8: #{tpu_custom_call.1} parent=1 // pred_region
      %s37 = ssub.s32 3968, 3968
      %38 = vsyncadd [#allocation11], %s37
      %s39 = sshll.u32 [#allocation10], 4
      %s40 = int_to_ptr.vmem [resolvable:$true] %s39
      %45 = dma.hbm_to_vmem [thread:$0]  %s1, 3968, %s40, [#allocation11], 128, 128, 8
    $region9: #{tpu_custom_call.1} parent=1 // pred_fallthru
      _
    // Predicated region
    $region10: #{tpu_custom_call.1} parent=1 // pred_check
      _
    $region11: #{tpu_custom_call.1} parent=1 // pred_check_branch
      %47 = sbr.rel (0) target = $region13
    $region12: #{tpu_custom_call.1} parent=1 // pred_region
      %s49 = ssub.s32 2048, 2048
      %50 = vsyncadd [#allocation11], %s49
      %s51 = sshll.u32 [#allocation12], 4
      %s52 = int_to_ptr.vmem [resolvable:$true] %s51
      %57 = dma.hbm_to_vmem [thread:$0]  %s2, 2048, %s52, [#allocation11], 128, 128, 8
    $region13: #{tpu_custom_call.1} parent=1 // pred_fallthru
      _
    // Predicated region
    $region14: #{tpu_custom_call.1} parent=1 // pred_check
      _
    $region15: #{tpu_custom_call.1} parent=1 // pred_check_branch
      %59 = sbr.rel (0) target = $region17
    $region16: #{tpu_custom_call.1} parent=1 // pred_region
      _
    $region17: #{tpu_custom_call.1} parent=1 // pred_fallthru
      _
    // Predicated region
    $region18: #{tpu_custom_call.1} parent=1 // pred_check
      _
    $region19: #{tpu_custom_call.1} parent=1 // pred_check_branch
      %61 = sbr.rel (0) target = $region21
    $region20: #{tpu_custom_call.1} parent=1 // pred_region
      %s63 = ssub.s32 2048, 2048
      %64 = vsyncadd [#allocation14], %s63
      %s65 = sshll.u32 [#allocation13], 4
      %s66 = int_to_ptr.vmem [resolvable:$true] %s65
      %71 = dma.hbm_to_vmem [thread:$0]  %s4, 2048, %s66, [#allocation14], 128, 128, 8
    $region21: #{tpu_custom_call.1} parent=1 // pred_fallthru
      _
    // Predicated region
    $region22: #{tpu_custom_call.1} parent=1 // pred_check
      _
    $region23: #{tpu_custom_call.1} parent=1 // pred_check_branch
      %73 = sbr.rel (0) target = $region25
    $region24: #{tpu_custom_call.1} parent=1 // pred_region
      %s75 = ssub.s32 2048, 2048
      %76 = vsyncadd [#allocation14], %s75
      %s77 = sshll.u32 [#allocation15], 4
      %s78 = int_to_ptr.vmem [resolvable:$true] %s77
      %83 = dma.hbm_to_vmem [thread:$0]  %s5, 2048, %s78, [#allocation14], 128, 128, 8
    $region25: #{tpu_custom_call.1} parent=1 // pred_fallthru
      _
    // Predicated region
    $region26: #{tpu_custom_call.1} parent=1 // pred_check
      _
    $region27: #{tpu_custom_call.1} parent=1 // pred_check_branch
      %85 = sbr.rel (0) target = $region29
    $region28: #{tpu_custom_call.1} parent=1 // pred_region
      _
    $region29: #{tpu_custom_call.1} parent=1 // pred_fallthru
      _
    // Predicated region
    $region30: #{tpu_custom_call.1} parent=1 // pred_check
      _
    $region31: #{tpu_custom_call.1} parent=1 // pred_check_branch
      %87 = sbr.rel (0) target = $region33
    $region32: #{tpu_custom_call.1} parent=1 // pred_region
      _
    $region33: #{tpu_custom_call.1} parent=1 // pred_fallthru
      _
    // Predicated region
    $region34: #{tpu_custom_call.1} parent=1 // pred_check
      _
    $region35: #{tpu_custom_call.1} parent=1 // pred_check_branch
      %89 = sbr.rel (0) target = $region37
    $region36: #{tpu_custom_call.1} parent=1 // pred_region
      _
    $region37: #{tpu_custom_call.1} parent=1 // pred_fallthru
      _
    // Predicated region
    $region38: #{tpu_custom_call.1} parent=1 // pred_check
      _
    $region39: #{tpu_custom_call.1} parent=1 // pred_check_branch
      %91 = sbr.rel (0) target = $region41
    $region40: #{tpu_custom_call.1} parent=1 // pred_region
      %92 = dma.done [#allocation8], 3968
    $region41: #{tpu_custom_call.1} parent=1 // pred_fallthru
      _
    // Predicated region
    $region42: #{tpu_custom_call.1} parent=1 // pred_check
      _
    $region43: #{tpu_custom_call.1} parent=1 // pred_check_branch
      %94 = sbr.rel (0) target = $region45
    $region44: #{tpu_custom_call.1} parent=1 // pred_region
      %95 = dma.done [#allocation11], 3968
    $region45: #{tpu_custom_call.1} parent=1 // pred_fallthru
      _
    // Predicated region
    $region46: #{tpu_custom_call.1} parent=1 // pred_check
      _
    $region47: #{tpu_custom_call.1} parent=1 // pred_check_branch
      %97 = sbr.rel (0) target = $region49
    $region48: #{tpu_custom_call.1} parent=1 // pred_region
      %98 = dma.done [#allocation11], 2048
    $region49: #{tpu_custom_call.1} parent=1 // pred_fallthru
      _
    // Predicated region
    $region50: #{tpu_custom_call.1} parent=1 // pred_check
      _
    $region51: #{tpu_custom_call.1} parent=1 // pred_check_branch
      %100 = sbr.rel (0) target = $region53
    $region52: #{tpu_custom_call.1} parent=1 // pred_region
      %101 = dma.done [#allocation14], 2048
    $region53: #{tpu_custom_call.1} parent=1 // pred_fallthru
      _
    // Predicated region
    $region54: #{tpu_custom_call.1} parent=1 // pred_check
      _
    $region55: #{tpu_custom_call.1} parent=1 // pred_check_branch
      %103 = sbr.rel (0) target = $region57
    $region56: #{tpu_custom_call.1} parent=1 // pred_region
      %104 = dma.done [#allocation14], 2048
    $region57: #{tpu_custom_call.1} parent=1 // pred_fallthru
      _
    %s107 = sshll.u32 1, 14
    %s108 = sxor.u32 4294967295, %s107
    %s110 = sld [smem:[#allocation0]]
    %s111 = sadd.s32 2, %s110
    %s113 = sshll.u32 7, 26
    %s114 = sxor.u32 4294967295, %s113
    %s115 = sand.u32 0, %s114
    %s116 = sshll.u32 %s111, 26
    %s117 = sor.u32 %s115, %s116
    %s118 = sshll.u32 [#allocation2], 4
    %s119 = int_to_ptr.vmem [resolvable:$true] %s118
    %122 = sst [smem:[#allocation18]] 256
    %s123 = scalar_lea.smem [#allocation18], 1
    %124 = sst [smem:[%s123]] 256
    %s125 = scalar_lea.smem [#allocation18], 2
    %126 = sst [smem:[%s125]] 2
    %s127 = scalar_lea.smem [#allocation18], 3
    %128 = sst [smem:[%s127]] 64
    %s129 = scalar_lea.smem [#allocation18], 4
    %130 = sst [smem:[%s129]] 128
    %s131 = scalar_lea.smem [#allocation18], 5
    %132 = sst [smem:[%s131]] 2
    %s133 = scalar_lea.smem [#allocation18], 6
    %134 = sst [smem:[%s133]] 128
    %s135 = scalar_lea.smem [#allocation18], 7
    %136 = sst [smem:[%s135]] 64
    %s137 = scalar_lea.smem [#allocation18], 8
    %138 = sst [smem:[%s137]] 4
    %140 = dma.general %s7, 4096, %s119, [#allocation6], [#allocation17], [#allocation18], %s117, 0
    %s141 = scalar_lea.sflag [#allocation6], 1
    %s143 = sshll.u32 1, 14
    %s144 = sxor.u32 4294967295, %s143
    %s146 = sadd.s32 2, %s110
    %s148 = sshll.u32 7, 26
    %s149 = sxor.u32 4294967295, %s148
    %s150 = sand.u32 0, %s149
    %s151 = sshll.u32 %s146, 26
    %s152 = sor.u32 %s150, %s151
    %s153 = sshll.u32 [#allocation3], 4
    %s154 = int_to_ptr.vmem [resolvable:$true] %s153
    %157 = sst [smem:[#allocation20]] 256
    %s158 = scalar_lea.smem [#allocation20], 1
    %159 = sst [smem:[%s158]] 256
    %s160 = scalar_lea.smem [#allocation20], 2
    %161 = sst [smem:[%s160]] 2
    %s162 = scalar_lea.smem [#allocation20], 3
    %163 = sst [smem:[%s162]] 64
    %s164 = scalar_lea.smem [#allocation20], 4
    %165 = sst [smem:[%s164]] 128
    %s166 = scalar_lea.smem [#allocation20], 5
    %167 = sst [smem:[%s166]] 2
    %s168 = scalar_lea.smem [#allocation20], 6
    %169 = sst [smem:[%s168]] 128
    %s170 = scalar_lea.smem [#allocation20], 7
    %171 = sst [smem:[%s170]] 64
    %s172 = scalar_lea.smem [#allocation20], 8
    %173 = sst [smem:[%s172]] 4
    %175 = dma.general %s8, 4096, %s154, %s141, [#allocation19], [#allocation20], %s152, 0
    %s176 = scalar_lea.sflag [#allocation6], 2
    // Predicated region
    $region58: #{tpu_custom_call.1} parent=1 // pred_check
      _
    $region59: #{tpu_custom_call.1} parent=1 // pred_check_branch
      %178 = sbr.rel target = $region61
    $region60: #{tpu_custom_call.1} parent=1 // pred_region
      %179 = sst [smem:[#allocation23]] [#allocation22]
      %180 = sst [smem:[#allocation24]] [#allocation21]
    $region61: #{tpu_custom_call.1} parent=1 // pred_fallthru
      _
    %182 = shalt.err (0)
    %s184 = sshll.u32 [#allocation4], 4
    %s185 = int_to_ptr.vmem [resolvable:$true] %s184
    %187 = dma.hbm_to_vmem [thread:$0]  %s10, 2048, %s185, %s176
    %s188 = scalar_lea.sflag [#allocation6], 3
    // Predicated region
    $region62: #{tpu_custom_call.1} parent=1 // pred_check
      _
    $region63: #{tpu_custom_call.1} parent=1 // pred_check_branch
      %190 = sbr.rel target = $region65
    $region64: #{tpu_custom_call.1} parent=1 // pred_region
      %191 = sst [smem:[#allocation23]] [#allocation26]
      %192 = sst [smem:[#allocation24]] [#allocation25]
    $region65: #{tpu_custom_call.1} parent=1 // pred_fallthru
      _
    %194 = shalt.err (0)
    %s196 = sshll.u32 [#allocation5], 4
    %s197 = int_to_ptr.vmem [resolvable:$true] %s196
    %199 = dma.hbm_to_vmem [thread:$0]  %s11, 2048, %s197, %s188
    %v200 = vld [vmem:[#allocation10] sm:$0xff]
    %v201 = vld [vmem:[#allocation10 + $0x8] sm:$0xff]
    %v202 = vld [vmem:[#allocation10 + $0x10] sm:$0xff]
    %v203 = vld [vmem:[#allocation10 + $0x18] sm:$0xff]
    %v204 = vld [vmem:[#allocation10 + $0x20] sm:$0xff]
    %v205 = vld [vmem:[#allocation10 + $0x28] sm:$0xff]
    %v206 = vld [vmem:[#allocation10 + $0x30] sm:$0xff]
    %v207 = vld [vmem:[#allocation10 + $0x38] sm:$0xff]
    %v208 = vld [vmem:[#allocation10 + $0x40] sm:$0xff]
    %v209 = vld [vmem:[#allocation10 + $0x48] sm:$0xff]
    %v210 = vld [vmem:[#allocation10 + $0x50] sm:$0xff]
    %v211 = vld [vmem:[#allocation10 + $0x58] sm:$0xff]
    %v212 = vld [vmem:[#allocation10 + $0x60] sm:$0xff]
    %v213 = vld [vmem:[#allocation10 + $0x68] sm:$0xff]
    %v214 = vld [vmem:[#allocation10 + $0x70] sm:$0xff]
    %v215 = vld [vmem:[#allocation10 + $0x78] sm:$0xff]
    %v216 = vld [vmem:[#allocation10 + $0x80] sm:$0xff]
    %v217 = vld [vmem:[#allocation10 + $0x88] sm:$0xff]
    %v218 = vld [vmem:[#allocation10 + $0x90] sm:$0xff]
    %v219 = vld [vmem:[#allocation10 + $0x98] sm:$0xff]
    %v220 = vld [vmem:[#allocation10 + $0xa0] sm:$0xff]
    %v221 = vld [vmem:[#allocation10 + $0xa8] sm:$0xff]
    %v222 = vld [vmem:[#allocation10 + $0xb0] sm:$0xff]
    %v223 = vld [vmem:[#allocation10 + $0xb8] sm:$0xff]
    %v224 = vld [vmem:[#allocation10 + $0xc0] sm:$0xff]
    %v225 = vld [vmem:[#allocation10 + $0xc8] sm:$0xff]
    %v226 = vld [vmem:[#allocation10 + $0xd0] sm:$0xff]
    %v227 = vld [vmem:[#allocation10 + $0xd8] sm:$0xff]
    %v228 = vld [vmem:[#allocation10 + $0xe0] sm:$0xff]
    %v229 = vld [vmem:[#allocation10 + $0xe8] sm:$0xff]
    %v230 = vld [vmem:[#allocation10 + $0xf0] sm:$0xff]
    %v231 = vld [vmem:[#allocation7] sm:$0xff]
    %v232 = vld [vmem:[#allocation7 + $0x8] sm:$0xff]
    %v233 = vld [vmem:[#allocation7 + $0x10] sm:$0xff]
    %v234 = vld [vmem:[#allocation7 + $0x18] sm:$0xff]
    %v235 = vld [vmem:[#allocation7 + $0x20] sm:$0xff]
    %v236 = vld [vmem:[#allocation7 + $0x28] sm:$0xff]
    %v237 = vld [vmem:[#allocation7 + $0x30] sm:$0xff]
    %v238 = vld [vmem:[#allocation7 + $0x38] sm:$0xff]
    %v239 = vld [vmem:[#allocation7 + $0x40] sm:$0xff]
    %v240 = vld [vmem:[#allocation7 + $0x48] sm:$0xff]
    %v241 = vld [vmem:[#allocation7 + $0x50] sm:$0xff]
    %v242 = vld [vmem:[#allocation7 + $0x58] sm:$0xff]
    %v243 = vld [vmem:[#allocation7 + $0x60] sm:$0xff]
    %v244 = vld [vmem:[#allocation7 + $0x68] sm:$0xff]
    %v245 = vld [vmem:[#allocation7 + $0x70] sm:$0xff]
    %v246 = vld [vmem:[#allocation7 + $0x78] sm:$0xff]
    %v247 = vld [vmem:[#allocation7 + $0x80] sm:$0xff]
    %v248 = vld [vmem:[#allocation7 + $0x88] sm:$0xff]
    %v249 = vld [vmem:[#allocation7 + $0x90] sm:$0xff]
    %v250 = vld [vmem:[#allocation7 + $0x98] sm:$0xff]
    %v251 = vld [vmem:[#allocation7 + $0xa0] sm:$0xff]
    %v252 = vld [vmem:[#allocation7 + $0xa8] sm:$0xff]
    %v253 = vld [vmem:[#allocation7 + $0xb0] sm:$0xff]
    %v254 = vld [vmem:[#allocation7 + $0xb8] sm:$0xff]
    %v255 = vld [vmem:[#allocation7 + $0xc0] sm:$0xff]
    %v256 = vld [vmem:[#allocation7 + $0xc8] sm:$0xff]
    %v257 = vld [vmem:[#allocation7 + $0xd0] sm:$0xff]
    %v258 = vld [vmem:[#allocation7 + $0xd8] sm:$0xff]
    %v259 = vld [vmem:[#allocation7 + $0xe0] sm:$0xff]
    %v260 = vld [vmem:[#allocation7 + $0xe8] sm:$0xff]
    %v261 = vld [vmem:[#allocation7 + $0xf0] sm:$0xff]
    %v262 = vpack.c.bf16 %v232, %v231
    %v263 = vpack.c.bf16 %v234, %v233
    %v264 = vpack.c.bf16 %v236, %v235
    %v265 = vpack.c.bf16 %v238, %v237
    %v266 = vpack.c.bf16 %v240, %v239
    %v267 = vpack.c.bf16 %v242, %v241
    %v268 = vpack.c.bf16 %v244, %v243
    %v269 = vpack.c.bf16 %v246, %v245
    %v270 = vpack.c.bf16 %v248, %v247
    %v271 = vpack.c.bf16 %v250, %v249
    %v272 = vpack.c.bf16 %v252, %v251
    %v273 = vpack.c.bf16 %v254, %v253
    %v274 = vpack.c.bf16 %v256, %v255
    %v275 = vpack.c.bf16 %v258, %v257
    %v276 = vpack.c.bf16 %v260, %v259
    %v277 = vpack.c.bf16 %v261, %v261
    %v278 = vld [vmem:[#allocation12] sm:$0xff]
    %v279 = vld [vmem:[#allocation12 + $0x8] sm:$0xff]
    %v280 = vld [vmem:[#allocation12 + $0x10] sm:$0xff]
    %v281 = vld [vmem:[#allocation12 + $0x18] sm:$0xff]
    %v282 = vld [vmem:[#allocation12 + $0x20] sm:$0xff]
    %v283 = vld [vmem:[#allocation12 + $0x28] sm:$0xff]
    %v284 = vld [vmem:[#allocation12 + $0x30] sm:$0xff]
    %v285 = vld [vmem:[#allocation12 + $0x38] sm:$0xff]
    %v286 = vld [vmem:[#allocation12 + $0x40] sm:$0xff]
    %v287 = vld [vmem:[#allocation12 + $0x48] sm:$0xff]
    %v288 = vld [vmem:[#allocation12 + $0x50] sm:$0xff]
    %v289 = vld [vmem:[#allocation12 + $0x58] sm:$0xff]
    %v290 = vld [vmem:[#allocation12 + $0x60] sm:$0xff]
    %v291 = vld [vmem:[#allocation12 + $0x68] sm:$0xff]
    %v292 = vld [vmem:[#allocation12 + $0x70] sm:$0xff]
    %v293 = vld [vmem:[#allocation12 + $0x78] sm:$0xff]
    %v294 = vld [vmem:[%s3] sm:$0x3]
    %v296 = vlaneseq
    %v297 = vshrl.u32 %v296, 7
    %v298 = vsub.s32 0, %v297
    %v299 = vrot.slane %v294, %v298
    %v300 = vlaneseq
    %v301 = vshrl.u32 %v300, 7
    %v302 = vsub.s32 1, %v301
    %v303 = vrot.slane %v294, %v302
    %v322 = vunpack.c.l.b16 %v278
    %v323 = vunpack.c.h.b16 %v278
    %v324 = vunpack.c.l.b16 %v279
    %v325 = vunpack.c.h.b16 %v279
    %v326 = vunpack.c.l.b16 %v280
    %v327 = vunpack.c.h.b16 %v280
    %v328 = vunpack.c.l.b16 %v281
    %v329 = vunpack.c.h.b16 %v281
    %v330 = vunpack.c.l.b16 %v282
    %v331 = vunpack.c.h.b16 %v282
    %v332 = vunpack.c.l.b16 %v283
    %v333 = vunpack.c.h.b16 %v283
    %v334 = vunpack.c.l.b16 %v284
    %v335 = vunpack.c.h.b16 %v284
    %v336 = vunpack.c.l.b16 %v285
    %v337 = vunpack.c.h.b16 %v285
    %v338 = vunpack.c.l.b16 %v286
    %v339 = vunpack.c.h.b16 %v286
    %v340 = vunpack.c.l.b16 %v287
    %v341 = vunpack.c.h.b16 %v287
    %v342 = vunpack.c.l.b16 %v288
    %v343 = vunpack.c.h.b16 %v288
    %v344 = vunpack.c.l.b16 %v289
    %v345 = vunpack.c.h.b16 %v289
    %v346 = vunpack.c.l.b16 %v290
    %v347 = vunpack.c.h.b16 %v290
    %v348 = vunpack.c.l.b16 %v291
    %v349 = vunpack.c.h.b16 %v291
    %v350 = vunpack.c.l.b16 %v292
    %v351 = vunpack.c.h.b16 %v292
    %v352 = vunpack.c.l.b16 %v293
    %v353 = vunpack.c.h.b16 %v293
    %v354 = vpack.c.b16 %v324, %v322
    %v355 = vpack.c.b16 %v325, %v323
    %v356 = vpack.c.b16 %v328, %v326
    %v357 = vpack.c.b16 %v329, %v327
    %v358 = vpack.c.b16 %v332, %v330
    %v359 = vpack.c.b16 %v333, %v331
    %v360 = vpack.c.b16 %v336, %v334
    %v361 = vpack.c.b16 %v337, %v335
    %v362 = vpack.c.b16 %v340, %v338
    %v363 = vpack.c.b16 %v341, %v339
    %v364 = vpack.c.b16 %v344, %v342
    %v365 = vpack.c.b16 %v345, %v343
    %v366 = vpack.c.b16 %v348, %v346
    %v367 = vpack.c.b16 %v349, %v347
    %v368 = vpack.c.b16 %v352, %v350
    %v369 = vpack.c.b16 %v353, %v351
    %386 = vmatprep.subr.bf16.mxu0 %v355
    %387 = vmatpush1.bf16.msra.mxu0 %v354
    %388 = vmatprep.subr.bf16.mxu0 %v357
    %389 = vmatpush1.bf16.msra.mxu0 %v356
    %390 = vmatprep.subr.bf16.mxu0 %v359
    %391 = vmatpush1.bf16.msra.mxu0 %v358
    %392 = vmatprep.subr.bf16.mxu0 %v361
    %393 = vmatpush1.bf16.msra.mxu0 %v360
    %394 = vmatprep.subr.bf16.mxu0 %v363
    %395 = vmatpush1.bf16.msra.mxu0 %v362
    %396 = vmatprep.subr.bf16.mxu0 %v365
    %397 = vmatpush1.bf16.msra.mxu0 %v364
    %398 = vmatprep.subr.bf16.mxu0 %v367
    %399 = vmatpush1.bf16.msra.mxu0 %v366
    %400 = vmatprep.subr.bf16.mxu0 %v369
    %401 = vmatpush1.bf16.msra.mxu0 %v368
    %402 = vmatprep.subr.bf16.mxu0 0
    %403 = vmatpush1.bf16.msra.mxu0 0
    %404 = vmatprep.subr.bf16.mxu0 0
    %405 = vmatpush1.bf16.msra.mxu0 0
    %406 = vmatprep.subr.bf16.mxu0 0
    %407 = vmatpush1.bf16.msra.mxu0 0
    %408 = vmatprep.subr.bf16.mxu0 0
    %409 = vmatpush1.bf16.msra.mxu0 0
    %410 = vmatprep.subr.bf16.mxu0 0
    %411 = vmatpush1.bf16.msra.mxu0 0
    %412 = vmatprep.subr.bf16.mxu0 0
    %413 = vmatpush1.bf16.msra.mxu0 0
    %414 = vmatprep.subr.bf16.mxu0 0
    %415 = vmatpush1.bf16.msra.mxu0 0
    %416 = vmatprep.subr.bf16.mxu0 0
    %417 = vmatpush1.bf16.msra.mxu0 0
    %418 = vmatprep.mubr.bf16.mxu0 0
    %419 = vmatmul.mubr.bf16.gmra.mrb[0].mxu0 %v262
    %v420 = vpop.f32.mrb[0].mxu0
    %v421 = vadd.f32 %v299, %v420
    %v422 = vpop.f32.mrb[0].mxu0
    %v423 = vadd.f32 %v303, %v422
    %v424 = vpop.f32.mrb[0].mxu0
    %v425 = vadd.f32 %v299, %v424
    %v426 = vpop.f32.mrb[0].mxu0
    %v427 = vadd.f32 %v303, %v426
    %428 = vmatprep.mubr.bf16.mxu0 0
    %429 = vmatmul.mubr.bf16.gmra.mrb[0].mxu0 %v263
    %v430 = vpop.f32.mrb[0].mxu0
    %v431 = vadd.f32 %v299, %v430
    %v432 = vpop.f32.mrb[0].mxu0
    %v433 = vadd.f32 %v303, %v432
    %v434 = vpop.f32.mrb[0].mxu0
    %v435 = vadd.f32 %v299, %v434
    %v436 = vpop.f32.mrb[0].mxu0
    %v437 = vadd.f32 %v303, %v436
    %438 = vmatprep.mubr.bf16.mxu0 0
    %439 = vmatmul.mubr.bf16.gmra.mrb[0].mxu0 %v264
    %v440 = vpop.f32.mrb[0].mxu0
    %v441 = vadd.f32 %v299, %v440
    %v442 = vpop.f32.mrb[0].mxu0
    %v443 = vadd.f32 %v303, %v442
    %v444 = vpop.f32.mrb[0].mxu0
    %v445 = vadd.f32 %v299, %v444
    %v446 = vpop.f32.mrb[0].mxu0
    %v447 = vadd.f32 %v303, %v446
    %448 = vmatprep.mubr.bf16.mxu0 0
    %449 = vmatmul.mubr.bf16.gmra.mrb[0].mxu0 %v265
    %v450 = vpop.f32.mrb[0].mxu0
    %v451 = vadd.f32 %v299, %v450
    %v452 = vpop.f32.mrb[0].mxu0
    %v453 = vadd.f32 %v303, %v452
    %v454 = vpop.f32.mrb[0].mxu0
    %v455 = vadd.f32 %v299, %v454
    %v456 = vpop.f32.mrb[0].mxu0
    %v457 = vadd.f32 %v303, %v456
    %458 = vmatprep.mubr.bf16.mxu0 0
    %459 = vmatmul.mubr.bf16.gmra.mrb[0].mxu0 %v266
    %v460 = vpop.f32.mrb[0].mxu0
    %v461 = vadd.f32 %v299, %v460
    %v462 = vpop.f32.mrb[0].mxu0
    %v463 = vadd.f32 %v303, %v462
    %v464 = vpop.f32.mrb[0].mxu0
    %v465 = vadd.f32 %v299, %v464
    %v466 = vpop.f32.mrb[0].mxu0
    %v467 = vadd.f32 %v303, %v466
    %468 = vmatprep.mubr.bf16.mxu0 0
    %469 = vmatmul.mubr.bf16.gmra.mrb[0].mxu0 %v267
    %v470 = vpop.f32.mrb[0].mxu0
    %v471 = vadd.f32 %v299, %v470
    %v472 = vpop.f32.mrb[0].mxu0
    %v473 = vadd.f32 %v303, %v472
    %v474 = vpop.f32.mrb[0].mxu0
    %v475 = vadd.f32 %v299, %v474
    %v476 = vpop.f32.mrb[0].mxu0
    %v477 = vadd.f32 %v303, %v476
    %478 = vmatprep.mubr.bf16.mxu0 0
    %479 = vmatmul.mubr.bf16.gmra.mrb[0].mxu0 %v268
    %v480 = vpop.f32.mrb[0].mxu0
    %v481 = vadd.f32 %v299, %v480
    %v482 = vpop.f32.mrb[0].mxu0
    %v483 = vadd.f32 %v303, %v482
    %v484 = vpop.f32.mrb[0].mxu0
    %v485 = vadd.f32 %v299, %v484
    %v486 = vpop.f32.mrb[0].mxu0
    %v487 = vadd.f32 %v303, %v486
    %488 = vmatprep.mubr.bf16.mxu0 0
    %489 = vmatmul.mubr.bf16.gmra.mrb[0].mxu0 %v269
    %v490 = vpop.f32.mrb[0].mxu0
    %v491 = vadd.f32 %v299, %v490
    %v492 = vpop.f32.mrb[0].mxu0
    %v493 = vadd.f32 %v303, %v492
    %v494 = vpop.f32.mrb[0].mxu0
    %v495 = vadd.f32 %v299, %v494
    %v496 = vpop.f32.mrb[0].mxu0
    %v497 = vadd.f32 %v303, %v496
    %498 = vmatprep.mubr.bf16.mxu0 0
    %499 = vmatmul.mubr.bf16.gmra.mrb[0].mxu0 %v270
    %v500 = vpop.f32.mrb[0].mxu0
    %v501 = vadd.f32 %v299, %v500
    %v502 = vpop.f32.mrb[0].mxu0
    %v503 = vadd.f32 %v303, %v502
    %v504 = vpop.f32.mrb[0].mxu0
    %v505 = vadd.f32 %v299, %v504
    %v506 = vpop.f32.mrb[0].mxu0
    %v507 = vadd.f32 %v303, %v506
    %508 = vmatprep.mubr.bf16.mxu0 0
    %509 = vmatmul.mubr.bf16.gmra.mrb[0].mxu0 %v271
    %v510 = vpop.f32.mrb[0].mxu0
    %v511 = vadd.f32 %v299, %v510
    %v512 = vpop.f32.mrb[0].mxu0
    %v513 = vadd.f32 %v303, %v512
    %v514 = vpop.f32.mrb[0].mxu0
    %v515 = vadd.f32 %v299, %v514
    %v516 = vpop.f32.mrb[0].mxu0
    %v517 = vadd.f32 %v303, %v516
    %518 = vmatprep.mubr.bf16.mxu0 0
    %519 = vmatmul.mubr.bf16.gmra.mrb[0].mxu0 %v272
    %v520 = vpop.f32.mrb[0].mxu0
    %v521 = vadd.f32 %v299, %v520
    %v522 = vpop.f32.mrb[0].mxu0
    %v523 = vadd.f32 %v303, %v522
    %v524 = vpop.f32.mrb[0].mxu0
    %v525 = vadd.f32 %v299, %v524
    %v526 = vpop.f32.mrb[0].mxu0
    %v527 = vadd.f32 %v303, %v526
    %528 = vmatprep.mubr.bf16.mxu0 0
    %529 = vmatmul.mubr.bf16.gmra.mrb[0].mxu0 %v273
    %v530 = vpop.f32.mrb[0].mxu0
    %v531 = vadd.f32 %v299, %v530
    %v532 = vpop.f32.mrb[0].mxu0
    %v533 = vadd.f32 %v303, %v532
    %v534 = vpop.f32.mrb[0].mxu0
    %v535 = vadd.f32 %v299, %v534
    %v536 = vpop.f32.mrb[0].mxu0
    %v537 = vadd.f32 %v303, %v536
    %538 = vmatprep.mubr.bf16.mxu0 0
    %539 = vmatmul.mubr.bf16.gmra.mrb[0].mxu0 %v274
    %v540 = vpop.f32.mrb[0].mxu0
    %v541 = vadd.f32 %v299, %v540
    %v542 = vpop.f32.mrb[0].mxu0
    %v543 = vadd.f32 %v303, %v542
    %v544 = vpop.f32.mrb[0].mxu0
    %v545 = vadd.f32 %v299, %v544
    %v546 = vpop.f32.mrb[0].mxu0
    %v547 = vadd.f32 %v303, %v546
    %548 = vmatprep.mubr.bf16.mxu0 0
    %549 = vmatmul.mubr.bf16.gmra.mrb[0].mxu0 %v275
    %v550 = vpop.f32.mrb[0].mxu0
    %v551 = vadd.f32 %v299, %v550
    %v552 = vpop.f32.mrb[0].mxu0
    %v553 = vadd.f32 %v303, %v552
    %v554 = vpop.f32.mrb[0].mxu0
    %v555 = vadd.f32 %v299, %v554
    %v556 = vpop.f32.mrb[0].mxu0
    %v557 = vadd.f32 %v303, %v556
    %558 = vmatprep.mubr.bf16.mxu0 0
    %559 = vmatmul.mubr.bf16.gmra.mrb[0].mxu0 %v276
    %v560 = vpop.f32.mrb[0].mxu0
    %v561 = vadd.f32 %v299, %v560
    %v562 = vpop.f32.mrb[0].mxu0
    %v563 = vadd.f32 %v303, %v562
    %v564 = vpop.f32.mrb[0].mxu0
    %v565 = vadd.f32 %v299, %v564
    %v566 = vpop.f32.mrb[0].mxu0
    %v567 = vadd.f32 %v303, %v566
    %568 = vmatprep.mubr.bf16.mxu0 0
    %569 = vmatmul.mubr.bf16.gmra.mrb[0].mxu0 %v277
    %v570 = vpop.f32.mrb[0].mxu0
    %v571 = vadd.f32 %v299, %v570
    %v572 = vpop.f32.mrb[0].mxu0
    %v573 = vadd.f32 %v303, %v572
    %v574 = vpop.f32.mrb[0].mxu0
    %v575 = vpop.f32.mrb[0].mxu0
    %576 = vdwg.mxu0
    %v577 = vld [vmem:[#allocation13] sm:$0xff]
    %v578 = vld [vmem:[#allocation13 + $0x8] sm:$0xff]
    %v579 = vld [vmem:[#allocation13 + $0x10] sm:$0xff]
    %v580 = vld [vmem:[#allocation13 + $0x18] sm:$0xff]
    %v581 = vld [vmem:[#allocation13 + $0x20] sm:$0xff]
    %v582 = vld [vmem:[#allocation13 + $0x28] sm:$0xff]
    %v583 = vld [vmem:[#allocation13 + $0x30] sm:$0xff]
    %v584 = vld [vmem:[#allocation13 + $0x38] sm:$0xff]
    %v585 = vld [vmem:[#allocation13 + $0x40] sm:$0xff]
    %v586 = vld [vmem:[#allocation13 + $0x48] sm:$0xff]
    %v587 = vld [vmem:[#allocation13 + $0x50] sm:$0xff]
    %v588 = vld [vmem:[#allocation13 + $0x58] sm:$0xff]
    %v589 = vld [vmem:[#allocation13 + $0x60] sm:$0xff]
    %v590 = vld [vmem:[#allocation13 + $0x68] sm:$0xff]
    %v591 = vld [vmem:[#allocation13 + $0x70] sm:$0xff]
    %v592 = vld [vmem:[#allocation13 + $0x78] sm:$0xff]
    %v593 = vld [vmem:[#allocation15] sm:$0xff]
    %v594 = vld [vmem:[#allocation15 + $0x8] sm:$0xff]
    %v595 = vld [vmem:[#allocation15 + $0x10] sm:$0xff]
    %v596 = vld [vmem:[#allocation15 + $0x18] sm:$0xff]
    %v597 = vld [vmem:[#allocation15 + $0x20] sm:$0xff]
    %v598 = vld [vmem:[#allocation15 + $0x28] sm:$0xff]
    %v599 = vld [vmem:[#allocation15 + $0x30] sm:$0xff]
    %v600 = vld [vmem:[#allocation15 + $0x38] sm:$0xff]
    %v601 = vld [vmem:[#allocation15 + $0x40] sm:$0xff]
    %v602 = vld [vmem:[#allocation15 + $0x48] sm:$0xff]
    %v603 = vld [vmem:[#allocation15 + $0x50] sm:$0xff]
    %v604 = vld [vmem:[#allocation15 + $0x58] sm:$0xff]
    %v605 = vld [vmem:[#allocation15 + $0x60] sm:$0xff]
    %v606 = vld [vmem:[#allocation15 + $0x68] sm:$0xff]
    %v607 = vld [vmem:[#allocation15 + $0x70] sm:$0xff]
    %v608 = vld [vmem:[#allocation15 + $0x78] sm:$0xff]
    %v609 = vld [vmem:[%s6] sm:$0x3]
    %v641 = vunpack.c.l.b16 %v200
    %v642 = vunpack.c.h.b16 %v200
    %v643 = vunpack.c.l.b16 %v201
    %v644 = vunpack.c.h.b16 %v201
    %v645 = vunpack.c.l.b16 %v202
    %v646 = vunpack.c.h.b16 %v202
    %v647 = vunpack.c.l.b16 %v203
    %v648 = vunpack.c.h.b16 %v203
    %v649 = vunpack.c.l.b16 %v204
    %v650 = vunpack.c.h.b16 %v204
    %v651 = vunpack.c.l.b16 %v205
    %v652 = vunpack.c.h.b16 %v205
    %v653 = vunpack.c.l.b16 %v206
    %v654 = vunpack.c.h.b16 %v206
    %v655 = vunpack.c.l.b16 %v207
    %v656 = vunpack.c.h.b16 %v207
    %v657 = vunpack.c.l.b16 %v208
    %v658 = vunpack.c.h.b16 %v208
    %v659 = vunpack.c.l.b16 %v209
    %v660 = vunpack.c.h.b16 %v209
    %v661 = vunpack.c.l.b16 %v210
    %v662 = vunpack.c.h.b16 %v210
    %v663 = vunpack.c.l.b16 %v211
    %v664 = vunpack.c.h.b16 %v211
    %v665 = vunpack.c.l.b16 %v212
    %v666 = vunpack.c.h.b16 %v212
    %v667 = vunpack.c.l.b16 %v213
    %v668 = vunpack.c.h.b16 %v213
    %v669 = vunpack.c.l.b16 %v214
    %v670 = vunpack.c.h.b16 %v214
    %v671 = vunpack.c.l.b16 %v215
    %v672 = vunpack.c.h.b16 %v215
    %v673 = vunpack.c.l.b16 %v216
    %v674 = vunpack.c.h.b16 %v216
    %v675 = vunpack.c.l.b16 %v217
    %v676 = vunpack.c.h.b16 %v217
    %v677 = vunpack.c.l.b16 %v218
    %v678 = vunpack.c.h.b16 %v218
    %v679 = vunpack.c.l.b16 %v219
    %v680 = vunpack.c.h.b16 %v219
    %v681 = vunpack.c.l.b16 %v220
    %v682 = vunpack.c.h.b16 %v220
    %v683 = vunpack.c.l.b16 %v221
    %v684 = vunpack.c.h.b16 %v221
    %v685 = vunpack.c.l.b16 %v222
    %v686 = vunpack.c.h.b16 %v222
    %v687 = vunpack.c.l.b16 %v223
    %v688 = vunpack.c.h.b16 %v223
    %v689 = vunpack.c.l.b16 %v224
    %v690 = vunpack.c.h.b16 %v224
    %v691 = vunpack.c.l.b16 %v225
    %v692 = vunpack.c.h.b16 %v225
    %v693 = vunpack.c.l.b16 %v226
    %v694 = vunpack.c.h.b16 %v226
    %v695 = vunpack.c.l.b16 %v227
    %v696 = vunpack.c.h.b16 %v227
    %v697 = vunpack.c.l.b16 %v228
    %v698 = vunpack.c.h.b16 %v228
    %v699 = vunpack.c.l.b16 %v229
    %v700 = vunpack.c.h.b16 %v229
    %v701 = vunpack.c.l.b16 %v230
    %v702 = vunpack.c.h.b16 %v230
    %v703 = vpack.c.b16 %v643, %v641
    %v704 = vpack.c.b16 %v644, %v642
    %v705 = vpack.c.b16 %v647, %v645
    %v706 = vpack.c.b16 %v648, %v646
    %v707 = vpack.c.b16 %v651, %v649
    %v708 = vpack.c.b16 %v652, %v650
    %v709 = vpack.c.b16 %v655, %v653
    %v710 = vpack.c.b16 %v656, %v654
    %v711 = vpack.c.b16 %v659, %v657
    %v712 = vpack.c.b16 %v660, %v658
    %v713 = vpack.c.b16 %v663, %v661
    %v714 = vpack.c.b16 %v664, %v662
    %v715 = vpack.c.b16 %v667, %v665
    %v716 = vpack.c.b16 %v668, %v666
    %v717 = vpack.c.b16 %v671, %v669
    %v718 = vpack.c.b16 %v672, %v670
    %v719 = vpack.c.b16 %v675, %v673
    %v720 = vpack.c.b16 %v676, %v674
    %v721 = vpack.c.b16 %v679, %v677
    %v722 = vpack.c.b16 %v680, %v678
    %v723 = vpack.c.b16 %v683, %v681
    %v724 = vpack.c.b16 %v684, %v682
    %v725 = vpack.c.b16 %v687, %v685
    %v726 = vpack.c.b16 %v688, %v686
    %v727 = vpack.c.b16 %v691, %v689
    %v728 = vpack.c.b16 %v692, %v690
    %v729 = vpack.c.b16 %v695, %v693
    %v730 = vpack.c.b16 %v696, %v694
    %v731 = vpack.c.b16 %v699, %v697
    %v732 = vpack.c.b16 %v700, %v698
    %v733 = vpack.c.b16 %v701, %v701
    %v734 = vpack.c.b16 %v702, %v702
    %vm751 = vcmask 982016
    %v753 = vsel %vm751, %v704, 0
    %v756 = vsel %vm751, %v706, 0
    %v759 = vsel %vm751, %v708, 0
    %v762 = vsel %vm751, %v710, 0
    %v765 = vsel %vm751, %v712, 0
    %v768 = vsel %vm751, %v714, 0
    %v771 = vsel %vm751, %v716, 0
    %v774 = vsel %vm751, %v718, 0
    %v777 = vsel %vm751, %v720, 0
    %v780 = vsel %vm751, %v722, 0
    %v783 = vsel %vm751, %v724, 0
    %v786 = vsel %vm751, %v726, 0
    %v789 = vsel %vm751, %v728, 0
    %v792 = vsel %vm751, %v730, 0
    %v795 = vsel %vm751, %v732, 0
    %v798 = vsel %vm751, %v734, 0
    %vm800 = vcmask 1043456
    %v802 = vsel %vm800, %v277, 0
    %804 = vmatprep.subr.bf16.mxu0 0
    %805 = vmatpush1.bf16.msra.mxu0 %v262
    %806 = vmatprep.subr.bf16.mxu0 0
    %807 = vmatpush1.bf16.msra.mxu0 %v263
    %808 = vmatprep.subr.bf16.mxu0 0
    %809 = vmatpush1.bf16.msra.mxu0 %v264
    %810 = vmatprep.subr.bf16.mxu0 0
    %811 = vmatpush1.bf16.msra.mxu0 %v265
    %812 = vmatprep.subr.bf16.mxu0 0
    %813 = vmatpush1.bf16.msra.mxu0 %v266
    %814 = vmatprep.subr.bf16.mxu0 0
    %815 = vmatpush1.bf16.msra.mxu0 %v267
    %816 = vmatprep.subr.bf16.mxu0 0
    %817 = vmatpush1.bf16.msra.mxu0 %v268
    %818 = vmatprep.subr.bf16.mxu0 0
    %819 = vmatpush1.bf16.msra.mxu0 %v269
    %820 = vmatprep.subr.bf16.mxu0 0
    %821 = vmatpush1.bf16.msra.mxu0 %v270
    %822 = vmatprep.subr.bf16.mxu0 0
    %823 = vmatpush1.bf16.msra.mxu0 %v271
    %824 = vmatprep.subr.bf16.mxu0 0
    %825 = vmatpush1.bf16.msra.mxu0 %v272
    %826 = vmatprep.subr.bf16.mxu0 0
    %827 = vmatpush1.bf16.msra.mxu0 %v273
    %828 = vmatprep.subr.bf16.mxu0 0
    %829 = vmatpush1.bf16.msra.mxu0 %v274
    %830 = vmatprep.subr.bf16.mxu0 0
    %831 = vmatpush1.bf16.msra.mxu0 %v275
    %832 = vmatprep.subr.bf16.mxu0 0
    %833 = vmatpush1.bf16.msra.mxu0 %v276
    %834 = vmatprep.subr.bf16.mxu0 0
    %835 = vmatpush1.bf16.msra.mxu0 %v802
    %836 = vmatprep.mubr.bf16.mxu0 %v753
    %837 = vmatmul.mubr.bf16.gmra.mrb[0].mxu0 %v703
    %v838 = vpop.f32.mrb[0].mxu0
    %v839 = vadd.f32 0.0, %v838
    %v840 = vpop.f32.mrb[0].mxu0
    %v841 = vpop.f32.mrb[0].mxu0
    %v842 = vadd.f32 0.0, %v841
    %v843 = vpop.f32.mrb[0].mxu0
    %844 = vmatprep.mubr.bf16.mxu0 %v756
    %845 = vmatmul.mubr.bf16.gmra.mrb[0].mxu0 %v705
    %v846 = vpop.f32.mrb[0].mxu0
    %v847 = vadd.f32 0.0, %v846
    %v848 = vpop.f32.mrb[0].mxu0
    %v849 = vpop.f32.mrb[0].mxu0
    %v850 = vadd.f32 0.0, %v849
    %v851 = vpop.f32.mrb[0].mxu0
    %852 = vmatprep.mubr.bf16.mxu0 %v759
    %853 = vmatmul.mubr.bf16.gmra.mrb[0].mxu0 %v707
    %v854 = vpop.f32.mrb[0].mxu0
    %v855 = vadd.f32 0.0, %v854
    %v856 = vpop.f32.mrb[0].mxu0
    %v857 = vpop.f32.mrb[0].mxu0
    %v858 = vadd.f32 0.0, %v857
    %v859 = vpop.f32.mrb[0].mxu0
    %860 = vmatprep.mubr.bf16.mxu0 %v762
    %861 = vmatmul.mubr.bf16.gmra.mrb[0].mxu0 %v709
    %v862 = vpop.f32.mrb[0].mxu0
    %v863 = vadd.f32 0.0, %v862
    %v864 = vpop.f32.mrb[0].mxu0
    %v865 = vpop.f32.mrb[0].mxu0
    %v866 = vadd.f32 0.0, %v865
    %v867 = vpop.f32.mrb[0].mxu0
    %868 = vmatprep.mubr.bf16.mxu0 %v765
    %869 = vmatmul.mubr.bf16.gmra.mrb[0].mxu0 %v711
    %v870 = vpop.f32.mrb[0].mxu0
    %v871 = vadd.f32 0.0, %v870
    %v872 = vpop.f32.mrb[0].mxu0
    %v873 = vpop.f32.mrb[0].mxu0
    %v874 = vadd.f32 0.0, %v873
    %v875 = vpop.f32.mrb[0].mxu0
    %876 = vmatprep.mubr.bf16.mxu0 %v768
    %877 = vmatmul.mubr.bf16.gmra.mrb[0].mxu0 %v713
    %v878 = vpop.f32.mrb[0].mxu0
    %v879 = vadd.f32 0.0, %v878
    %v880 = vpop.f32.mrb[0].mxu0
    %v881 = vpop.f32.mrb[0].mxu0
    %v882 = vadd.f32 0.0, %v881
    %v883 = vpop.f32.mrb[0].mxu0
    %884 = vmatprep.mubr.bf16.mxu0 %v771
    %885 = vmatmul.mubr.bf16.gmra.mrb[0].mxu0 %v715
    %v886 = vpop.f32.mrb[0].mxu0
    %v887 = vadd.f32 0.0, %v886
    %v888 = vpop.f32.mrb[0].mxu0
    %v889 = vpop.f32.mrb[0].mxu0
    %v890 = vadd.f32 0.0, %v889
    %v891 = vpop.f32.mrb[0].mxu0
    %892 = vmatprep.mubr.bf16.mxu0 %v774
    %893 = vmatmul.mubr.bf16.gmra.mrb[0].mxu0 %v717
    %v894 = vpop.f32.mrb[0].mxu0
    %v895 = vadd.f32 0.0, %v894
    %v896 = vpop.f32.mrb[0].mxu0
    %v897 = vpop.f32.mrb[0].mxu0
    %v898 = vadd.f32 0.0, %v897
    %v899 = vpop.f32.mrb[0].mxu0
    %900 = vmatprep.mubr.bf16.mxu0 %v777
    %901 = vmatmul.mubr.bf16.gmra.mrb[0].mxu0 %v719
    %v902 = vpop.f32.mrb[0].mxu0
    %v903 = vadd.f32 0.0, %v902
    %v904 = vpop.f32.mrb[0].mxu0
    %v905 = vpop.f32.mrb[0].mxu0
    %v906 = vadd.f32 0.0, %v905
    %v907 = vpop.f32.mrb[0].mxu0
    %908 = vmatprep.mubr.bf16.mxu0 %v780
    %909 = vmatmul.mubr.bf16.gmra.mrb[0].mxu0 %v721
    %v910 = vpop.f32.mrb[0].mxu0
    %v911 = vadd.f32 0.0, %v910
    %v912 = vpop.f32.mrb[0].mxu0
    %v913 = vpop.f32.mrb[0].mxu0
    %v914 = vadd.f32 0.0, %v913
    %v915 = vpop.f32.mrb[0].mxu0
    %916 = vmatprep.mubr.bf16.mxu0 %v783
    %917 = vmatmul.mubr.bf16.gmra.mrb[0].mxu0 %v723
    %v918 = vpop.f32.mrb[0].mxu0
    %v919 = vadd.f32 0.0, %v918
    %v920 = vpop.f32.mrb[0].mxu0
    %v921 = vpop.f32.mrb[0].mxu0
    %v922 = vadd.f32 0.0, %v921
    %v923 = vpop.f32.mrb[0].mxu0
    %924 = vmatprep.mubr.bf16.mxu0 %v786
    %925 = vmatmul.mubr.bf16.gmra.mrb[0].mxu0 %v725
    %v926 = vpop.f32.mrb[0].mxu0
    %v927 = vadd.f32 0.0, %v926
    %v928 = vpop.f32.mrb[0].mxu0
    %v929 = vpop.f32.mrb[0].mxu0
    %v930 = vadd.f32 0.0, %v929
    %v931 = vpop.f32.mrb[0].mxu0
    %932 = vmatprep.mubr.bf16.mxu0 %v789
    %933 = vmatmul.mubr.bf16.gmra.mrb[0].mxu0 %v727
    %v934 = vpop.f32.mrb[0].mxu0
    %v935 = vadd.f32 0.0, %v934
    %v936 = vpop.f32.mrb[0].mxu0
    %v937 = vpop.f32.mrb[0].mxu0
    %v938 = vadd.f32 0.0, %v937
    %v939 = vpop.f32.mrb[0].mxu0
    %940 = vmatprep.mubr.bf16.mxu0 %v792
    %941 = vmatmul.mubr.bf16.gmra.mrb[0].mxu0 %v729
    %v942 = vpop.f32.mrb[0].mxu0
    %v943 = vadd.f32 0.0, %v942
    %v944 = vpop.f32.mrb[0].mxu0
    %v945 = vpop.f32.mrb[0].mxu0
    %v946 = vadd.f32 0.0, %v945
    %v947 = vpop.f32.mrb[0].mxu0
    %948 = vmatprep.mubr.bf16.mxu0 %v795
    %949 = vmatmul.mubr.bf16.gmra.mrb[0].mxu0 %v731
    %v950 = vpop.f32.mrb[0].mxu0
    %v951 = vadd.f32 0.0, %v950
    %v952 = vpop.f32.mrb[0].mxu0
    %v953 = vpop.f32.mrb[0].mxu0
    %v954 = vadd.f32 0.0, %v953
    %v955 = vpop.f32.mrb[0].mxu0
    %956 = vmatprep.mubr.bf16.mxu0 %v798
    %957 = vmatmul.mubr.bf16.gmra.mrb[0].mxu0 %v733
    %v958 = vpop.f32.mrb[0].mxu0
    %v959 = vadd.f32 0.0, %v958
    %v960 = vpop.f32.mrb[0].mxu0
    %v961 = vpop.f32.mrb[0].mxu0
    %v962 = vpop.f32.mrb[0].mxu0
    %963 = vdwg.mxu0
    %v964 = vpack.c.bf16 %v842, %v839
    %v965 = vpack.c.bf16 %v850, %v847
    %v966 = vpack.c.bf16 %v858, %v855
    %v967 = vpack.c.bf16 %v866, %v863
    %v968 = vpack.c.bf16 %v874, %v871
    %v969 = vpack.c.bf16 %v882, %v879
    %v970 = vpack.c.bf16 %v890, %v887
    %v971 = vpack.c.bf16 %v898, %v895
    %v972 = vpack.c.bf16 %v906, %v903
    %v973 = vpack.c.bf16 %v914, %v911
    %v974 = vpack.c.bf16 %v922, %v919
    %v975 = vpack.c.bf16 %v930, %v927
    %v976 = vpack.c.bf16 %v938, %v935
    %v977 = vpack.c.bf16 %v946, %v943
    %v978 = vpack.c.bf16 %v954, %v951
    %v979 = vpack.c.bf16 %v959, %v959
    %v996 = vunpack.c.l.b16 %v593
    %v997 = vunpack.c.h.b16 %v593
    %v998 = vunpack.c.l.b16 %v594
    %v999 = vunpack.c.h.b16 %v594
    %v1000 = vunpack.c.l.b16 %v595
    %v1001 = vunpack.c.h.b16 %v595
    %v1002 = vunpack.c.l.b16 %v596
    %v1003 = vunpack.c.h.b16 %v596
    %v1004 = vunpack.c.l.b16 %v597
    %v1005 = vunpack.c.h.b16 %v597
    %v1006 = vunpack.c.l.b16 %v598
    %v1007 = vunpack.c.h.b16 %v598
    %v1008 = vunpack.c.l.b16 %v599
    %v1009 = vunpack.c.h.b16 %v599
    %v1010 = vunpack.c.l.b16 %v600
    %v1011 = vunpack.c.h.b16 %v600
    %v1012 = vunpack.c.l.b16 %v601
    %v1013 = vunpack.c.h.b16 %v601
    %v1014 = vunpack.c.l.b16 %v602
    %v1015 = vunpack.c.h.b16 %v602
    %v1016 = vunpack.c.l.b16 %v603
    %v1017 = vunpack.c.h.b16 %v603
    %v1018 = vunpack.c.l.b16 %v604
    %v1019 = vunpack.c.h.b16 %v604
    %v1020 = vunpack.c.l.b16 %v605
    %v1021 = vunpack.c.h.b16 %v605
    %v1022 = vunpack.c.l.b16 %v606
    %v1023 = vunpack.c.h.b16 %v606
    %v1024 = vunpack.c.l.b16 %v607
    %v1025 = vunpack.c.h.b16 %v607
    %v1026 = vunpack.c.l.b16 %v608
    %v1027 = vunpack.c.h.b16 %v608
    %v1028 = vpack.c.b16 %v998, %v996
    %v1029 = vpack.c.b16 %v999, %v997
    %v1030 = vpack.c.b16 %v1002, %v1000
    %v1031 = vpack.c.b16 %v1003, %v1001
    %v1032 = vpack.c.b16 %v1006, %v1004
    %v1033 = vpack.c.b16 %v1007, %v1005
    %v1034 = vpack.c.b16 %v1010, %v1008
    %v1035 = vpack.c.b16 %v1011, %v1009
    %v1036 = vpack.c.b16 %v1014, %v1012
    %v1037 = vpack.c.b16 %v1015, %v1013
    %v1038 = vpack.c.b16 %v1018, %v1016
    %v1039 = vpack.c.b16 %v1019, %v1017
    %v1040 = vpack.c.b16 %v1022, %v1020
    %v1041 = vpack.c.b16 %v1023, %v1021
    %v1042 = vpack.c.b16 %v1026, %v1024
    %v1043 = vpack.c.b16 %v1027, %v1025
    %1060 = vmatprep.subr.bf16.mxu0 %v1029
    %1061 = vmatpush1.bf16.msra.mxu0 %v1028
    %1062 = vmatprep.subr.bf16.mxu0 %v1031
    %1063 = vmatpush1.bf16.msra.mxu0 %v1030
    %1064 = vmatprep.subr.bf16.mxu0 %v1033
    %1065 = vmatpush1.bf16.msra.mxu0 %v1032
    %1066 = vmatprep.subr.bf16.mxu0 %v1035
    %1067 = vmatpush1.bf16.msra.mxu0 %v1034
    %1068 = vmatprep.subr.bf16.mxu0 %v1037
    %1069 = vmatpush1.bf16.msra.mxu0 %v1036
    %1070 = vmatprep.subr.bf16.mxu0 %v1039
    %1071 = vmatpush1.bf16.msra.mxu0 %v1038
    %1072 = vmatprep.subr.bf16.mxu0 %v1041
    %1073 = vmatpush1.bf16.msra.mxu0 %v1040
    %1074 = vmatprep.subr.bf16.mxu0 %v1043
    %1075 = vmatpush1.bf16.msra.mxu0 %v1042
    %1076 = vmatprep.subr.bf16.mxu0 0
    %1077 = vmatpush1.bf16.msra.mxu0 0
    %1078 = vmatprep.subr.bf16.mxu0 0
    %1079 = vmatpush1.bf16.msra.mxu0 0
    %1080 = vmatprep.subr.bf16.mxu0 0
    %1081 = vmatpush1.bf16.msra.mxu0 0
    %1082 = vmatprep.subr.bf16.mxu0 0
    %1083 = vmatpush1.bf16.msra.mxu0 0
    %1084 = vmatprep.subr.bf16.mxu0 0
    %1085 = vmatpush1.bf16.msra.mxu0 0
    %1086 = vmatprep.subr.bf16.mxu0 0
    %1087 = vmatpush1.bf16.msra.mxu0 0
    %1088 = vmatprep.subr.bf16.mxu0 0
    %1089 = vmatpush1.bf16.msra.mxu0 0
    %1090 = vmatprep.subr.bf16.mxu0 0
    %1091 = vmatpush1.bf16.msra.mxu0 0
    %1092 = vmatprep.mubr.bf16.mxu0 0
    %1093 = vmatmul.mubr.bf16.gmra.mrb[0].mxu0 %v964
    %v1094 = vpop.f32.mrb[0].mxu0
    %v1095 = vadd.f32 0.0, %v1094
    %v1096 = vpop.f32.mrb[0].mxu0
    %v1097 = vadd.f32 0.0, %v1096
    %v1098 = vpop.f32.mrb[0].mxu0
    %v1099 = vadd.f32 0.0, %v1098
    %v1100 = vpop.f32.mrb[0].mxu0
    %v1101 = vadd.f32 0.0, %v1100
    %1102 = vmatprep.mubr.bf16.mxu0 0
    %1103 = vmatmul.mubr.bf16.gmra.mrb[0].mxu0 %v965
    %v1104 = vpop.f32.mrb[0].mxu0
    %v1105 = vadd.f32 0.0, %v1104
    %v1106 = vpop.f32.mrb[0].mxu0
    %v1107 = vadd.f32 0.0, %v1106
    %v1108 = vpop.f32.mrb[0].mxu0
    %v1109 = vadd.f32 0.0, %v1108
    %v1110 = vpop.f32.mrb[0].mxu0
    %v1111 = vadd.f32 0.0, %v1110
    %1112 = vmatprep.mubr.bf16.mxu0 0
    %1113 = vmatmul.mubr.bf16.gmra.mrb[0].mxu0 %v966
    %v1114 = vpop.f32.mrb[0].mxu0
    %v1115 = vadd.f32 0.0, %v1114
    %v1116 = vpop.f32.mrb[0].mxu0
    %v1117 = vadd.f32 0.0, %v1116
    %v1118 = vpop.f32.mrb[0].mxu0
    %v1119 = vadd.f32 0.0, %v1118
    %v1120 = vpop.f32.mrb[0].mxu0
    %v1121 = vadd.f32 0.0, %v1120
    %1122 = vmatprep.mubr.bf16.mxu0 0
    %1123 = vmatmul.mubr.bf16.gmra.mrb[0].mxu0 %v967
    %v1124 = vpop.f32.mrb[0].mxu0
    %v1125 = vadd.f32 0.0, %v1124
    %v1126 = vpop.f32.mrb[0].mxu0
    %v1127 = vadd.f32 0.0, %v1126
    %v1128 = vpop.f32.mrb[0].mxu0
    %v1129 = vadd.f32 0.0, %v1128
    %v1130 = vpop.f32.mrb[0].mxu0
    %v1131 = vadd.f32 0.0, %v1130
    %1132 = vmatprep.mubr.bf16.mxu0 0
    %1133 = vmatmul.mubr.bf16.gmra.mrb[0].mxu0 %v968
    %v1134 = vpop.f32.mrb[0].mxu0
    %v1135 = vadd.f32 0.0, %v1134
    %v1136 = vpop.f32.mrb[0].mxu0
    %v1137 = vadd.f32 0.0, %v1136
    %v1138 = vpop.f32.mrb[0].mxu0
    %v1139 = vadd.f32 0.0, %v1138
    %v1140 = vpop.f32.mrb[0].mxu0
    %v1141 = vadd.f32 0.0, %v1140
    %1142 = vmatprep.mubr.bf16.mxu0 0
    %1143 = vmatmul.mubr.bf16.gmra.mrb[0].mxu0 %v969
    %v1144 = vpop.f32.mrb[0].mxu0
    %v1145 = vadd.f32 0.0, %v1144
    %v1146 = vpop.f32.mrb[0].mxu0
    %v1147 = vadd.f32 0.0, %v1146
    %v1148 = vpop.f32.mrb[0].mxu0
    %v1149 = vadd.f32 0.0, %v1148
    %v1150 = vpop.f32.mrb[0].mxu0
    %v1151 = vadd.f32 0.0, %v1150
    %1152 = vmatprep.mubr.bf16.mxu0 0
    %1153 = vmatmul.mubr.bf16.gmra.mrb[0].mxu0 %v970
    %v1154 = vpop.f32.mrb[0].mxu0
    %v1155 = vadd.f32 0.0, %v1154
    %v1156 = vpop.f32.mrb[0].mxu0
    %v1157 = vadd.f32 0.0, %v1156
    %v1158 = vpop.f32.mrb[0].mxu0
    %v1159 = vadd.f32 0.0, %v1158
    %v1160 = vpop.f32.mrb[0].mxu0
    %v1161 = vadd.f32 0.0, %v1160
    %1162 = vmatprep.mubr.bf16.mxu0 0
    %1163 = vmatmul.mubr.bf16.gmra.mrb[0].mxu0 %v971
    %v1164 = vpop.f32.mrb[0].mxu0
    %v1165 = vadd.f32 0.0, %v1164
    %v1166 = vpop.f32.mrb[0].mxu0
    %v1167 = vadd.f32 0.0, %v1166
    %v1168 = vpop.f32.mrb[0].mxu0
    %v1169 = vadd.f32 0.0, %v1168
    %v1170 = vpop.f32.mrb[0].mxu0
    %v1171 = vadd.f32 0.0, %v1170
    %1172 = vmatprep.mubr.bf16.mxu0 0
    %1173 = vmatmul.mubr.bf16.gmra.mrb[0].mxu0 %v972
    %v1174 = vpop.f32.mrb[0].mxu0
    %v1175 = vadd.f32 0.0, %v1174
    %v1176 = vpop.f32.mrb[0].mxu0
    %v1177 = vadd.f32 0.0, %v1176
    %v1178 = vpop.f32.mrb[0].mxu0
    %v1179 = vadd.f32 0.0, %v1178
    %v1180 = vpop.f32.mrb[0].mxu0
    %v1181 = vadd.f32 0.0, %v1180
    %1182 = vmatprep.mubr.bf16.mxu0 0
    %1183 = vmatmul.mubr.bf16.gmra.mrb[0].mxu0 %v973
    %v1184 = vpop.f32.mrb[0].mxu0
    %v1185 = vadd.f32 0.0, %v1184
    %v1186 = vpop.f32.mrb[0].mxu0
    %v1187 = vadd.f32 0.0, %v1186
    %v1188 = vpop.f32.mrb[0].mxu0
    %v1189 = vadd.f32 0.0, %v1188
    %v1190 = vpop.f32.mrb[0].mxu0
    %v1191 = vadd.f32 0.0, %v1190
    %1192 = vmatprep.mubr.bf16.mxu0 0
    %1193 = vmatmul.mubr.bf16.gmra.mrb[0].mxu0 %v974
    %v1194 = vpop.f32.mrb[0].mxu0
    %v1195 = vadd.f32 0.0, %v1194
    %v1196 = vpop.f32.mrb[0].mxu0
    %v1197 = vadd.f32 0.0, %v1196
    %v1198 = vpop.f32.mrb[0].mxu0
    %v1199 = vadd.f32 0.0, %v1198
    %v1200 = vpop.f32.mrb[0].mxu0
    %v1201 = vadd.f32 0.0, %v1200
    %1202 = vmatprep.mubr.bf16.mxu0 0
    %1203 = vmatmul.mubr.bf16.gmra.mrb[0].mxu0 %v975
    %v1204 = vpop.f32.mrb[0].mxu0
    %v1205 = vadd.f32 0.0, %v1204
    %v1206 = vpop.f32.mrb[0].mxu0
    %v1207 = vadd.f32 0.0, %v1206
    %v1208 = vpop.f32.mrb[0].mxu0
    %v1209 = vadd.f32 0.0, %v1208
    %v1210 = vpop.f32.mrb[0].mxu0
    %v1211 = vadd.f32 0.0, %v1210
    %1212 = vmatprep.mubr.bf16.mxu0 0
    %1213 = vmatmul.mubr.bf16.gmra.mrb[0].mxu0 %v976
    %v1214 = vpop.f32.mrb[0].mxu0
    %v1215 = vadd.f32 0.0, %v1214
    %v1216 = vpop.f32.mrb[0].mxu0
    %v1217 = vadd.f32 0.0, %v1216
    %v1218 = vpop.f32.mrb[0].mxu0
    %v1219 = vadd.f32 0.0, %v1218
    %v1220 = vpop.f32.mrb[0].mxu0
    %v1221 = vadd.f32 0.0, %v1220
    %1222 = vmatprep.mubr.bf16.mxu0 0
    %1223 = vmatmul.mubr.bf16.gmra.mrb[0].mxu0 %v977
    %v1224 = vpop.f32.mrb[0].mxu0
    %v1225 = vadd.f32 0.0, %v1224
    %v1226 = vpop.f32.mrb[0].mxu0
    %v1227 = vadd.f32 0.0, %v1226
    %v1228 = vpop.f32.mrb[0].mxu0
    %v1229 = vadd.f32 0.0, %v1228
    %v1230 = vpop.f32.mrb[0].mxu0
    %v1231 = vadd.f32 0.0, %v1230
    %1232 = vmatprep.mubr.bf16.mxu0 0
    %1233 = vmatmul.mubr.bf16.gmra.mrb[0].mxu0 %v978
    %v1234 = vpop.f32.mrb[0].mxu0
    %v1235 = vadd.f32 0.0, %v1234
    %v1236 = vpop.f32.mrb[0].mxu0
    %v1237 = vadd.f32 0.0, %v1236
    %v1238 = vpop.f32.mrb[0].mxu0
    %v1239 = vadd.f32 0.0, %v1238
    %v1240 = vpop.f32.mrb[0].mxu0
    %v1241 = vadd.f32 0.0, %v1240
    %1242 = vmatprep.mubr.bf16.mxu0 0
    %1243 = vmatmul.mubr.bf16.gmra.mrb[0].mxu0 %v979
    %v1244 = vpop.f32.mrb[0].mxu0
    %v1245 = vadd.f32 0.0, %v1244
    %v1246 = vpop.f32.mrb[0].mxu0
    %v1247 = vadd.f32 0.0, %v1246
    %v1248 = vpop.f32.mrb[0].mxu0
    %v1249 = vpop.f32.mrb[0].mxu0
    %1250 = vdwg.mxu0
    %v1267 = vunpack.c.l.b16 %v577
    %v1268 = vunpack.c.h.b16 %v577
    %v1269 = vunpack.c.l.b16 %v578
    %v1270 = vunpack.c.h.b16 %v578
    %v1271 = vunpack.c.l.b16 %v579
    %v1272 = vunpack.c.h.b16 %v579
    %v1273 = vunpack.c.l.b16 %v580
    %v1274 = vunpack.c.h.b16 %v580
    %v1275 = vunpack.c.l.b16 %v581
    %v1276 = vunpack.c.h.b16 %v581
    %v1277 = vunpack.c.l.b16 %v582
    %v1278 = vunpack.c.h.b16 %v582
    %v1279 = vunpack.c.l.b16 %v583
    %v1280 = vunpack.c.h.b16 %v583
    %v1281 = vunpack.c.l.b16 %v584
    %v1282 = vunpack.c.h.b16 %v584
    %v1283 = vunpack.c.l.b16 %v585
    %v1284 = vunpack.c.h.b16 %v585
    %v1285 = vunpack.c.l.b16 %v586
    %v1286 = vunpack.c.h.b16 %v586
    %v1287 = vunpack.c.l.b16 %v587
    %v1288 = vunpack.c.h.b16 %v587
    %v1289 = vunpack.c.l.b16 %v588
    %v1290 = vunpack.c.h.b16 %v588
    %v1291 = vunpack.c.l.b16 %v589
    %v1292 = vunpack.c.h.b16 %v589
    %v1293 = vunpack.c.l.b16 %v590
    %v1294 = vunpack.c.h.b16 %v590
    %v1295 = vunpack.c.l.b16 %v591
    %v1296 = vunpack.c.h.b16 %v591
    %v1297 = vunpack.c.l.b16 %v592
    %v1298 = vunpack.c.h.b16 %v592
    %v1299 = vpack.c.b16 %v1269, %v1267
    %v1300 = vpack.c.b16 %v1270, %v1268
    %v1301 = vpack.c.b16 %v1273, %v1271
    %v1302 = vpack.c.b16 %v1274, %v1272
    %v1303 = vpack.c.b16 %v1277, %v1275
    %v1304 = vpack.c.b16 %v1278, %v1276
    %v1305 = vpack.c.b16 %v1281, %v1279
    %v1306 = vpack.c.b16 %v1282, %v1280
    %v1307 = vpack.c.b16 %v1285, %v1283
    %v1308 = vpack.c.b16 %v1286, %v1284
    %v1309 = vpack.c.b16 %v1289, %v1287
    %v1310 = vpack.c.b16 %v1290, %v1288
    %v1311 = vpack.c.b16 %v1293, %v1291
    %v1312 = vpack.c.b16 %v1294, %v1292
    %v1313 = vpack.c.b16 %v1297, %v1295
    %v1314 = vpack.c.b16 %v1298, %v1296
    %1331 = vmatprep.subr.bf16.mxu0 %v1300
    %1332 = vmatpush1.bf16.msra.mxu0 %v1299
    %1333 = vmatprep.subr.bf16.mxu0 %v1302
    %1334 = vmatpush1.bf16.msra.mxu0 %v1301
    %1335 = vmatprep.subr.bf16.mxu0 %v1304
    %1336 = vmatpush1.bf16.msra.mxu0 %v1303
    %1337 = vmatprep.subr.bf16.mxu0 %v1306
    %1338 = vmatpush1.bf16.msra.mxu0 %v1305
    %1339 = vmatprep.subr.bf16.mxu0 %v1308
    %1340 = vmatpush1.bf16.msra.mxu0 %v1307
    %1341 = vmatprep.subr.bf16.mxu0 %v1310
    %1342 = vmatpush1.bf16.msra.mxu0 %v1309
    %1343 = vmatprep.subr.bf16.mxu0 %v1312
    %1344 = vmatpush1.bf16.msra.mxu0 %v1311
    %1345 = vmatprep.subr.bf16.mxu0 %v1314
    %1346 = vmatpush1.bf16.msra.mxu0 %v1313
    %1347 = vmatprep.subr.bf16.mxu0 0
    %1348 = vmatpush1.bf16.msra.mxu0 0
    %1349 = vmatprep.subr.bf16.mxu0 0
    %1350 = vmatpush1.bf16.msra.mxu0 0
    %1351 = vmatprep.subr.bf16.mxu0 0
    %1352 = vmatpush1.bf16.msra.mxu0 0
    %1353 = vmatprep.subr.bf16.mxu0 0
    %1354 = vmatpush1.bf16.msra.mxu0 0
    %1355 = vmatprep.subr.bf16.mxu0 0
    %1356 = vmatpush1.bf16.msra.mxu0 0
    %1357 = vmatprep.subr.bf16.mxu0 0
    %1358 = vmatpush1.bf16.msra.mxu0 0
    %1359 = vmatprep.subr.bf16.mxu0 0
    %1360 = vmatpush1.bf16.msra.mxu0 0
    %1361 = vmatprep.subr.bf16.mxu0 0
    %1362 = vmatpush1.bf16.msra.mxu0 0
    %1363 = vmatprep.mubr.bf16.mxu0 0
    %1364 = vmatmul.mubr.bf16.gmra.mrb[0].mxu0 %v262
    %v1365 = vpop.f32.mrb[0].mxu0
    %v1366 = vadd.f32 %v1095, %v1365
    %v1367 = vpop.f32.mrb[0].mxu0
    %v1368 = vadd.f32 %v1097, %v1367
    %v1369 = vpop.f32.mrb[0].mxu0
    %v1370 = vadd.f32 %v1099, %v1369
    %v1371 = vpop.f32.mrb[0].mxu0
    %v1372 = vadd.f32 %v1101, %v1371
    %1373 = vmatprep.mubr.bf16.mxu0 0
    %1374 = vmatmul.mubr.bf16.gmra.mrb[0].mxu0 %v263
    %v1375 = vpop.f32.mrb[0].mxu0
    %v1376 = vadd.f32 %v1105, %v1375
    %v1377 = vpop.f32.mrb[0].mxu0
    %v1378 = vadd.f32 %v1107, %v1377
    %v1379 = vpop.f32.mrb[0].mxu0
    %v1380 = vadd.f32 %v1109, %v1379
    %v1381 = vpop.f32.mrb[0].mxu0
    %v1382 = vadd.f32 %v1111, %v1381
    %1383 = vmatprep.mubr.bf16.mxu0 0
    %1384 = vmatmul.mubr.bf16.gmra.mrb[0].mxu0 %v264
    %v1385 = vpop.f32.mrb[0].mxu0
    %v1386 = vadd.f32 %v1115, %v1385
    %v1387 = vpop.f32.mrb[0].mxu0
    %v1388 = vadd.f32 %v1117, %v1387
    %v1389 = vpop.f32.mrb[0].mxu0
    %v1390 = vadd.f32 %v1119, %v1389
    %v1391 = vpop.f32.mrb[0].mxu0
    %v1392 = vadd.f32 %v1121, %v1391
    %1393 = vmatprep.mubr.bf16.mxu0 0
    %1394 = vmatmul.mubr.bf16.gmra.mrb[0].mxu0 %v265
    %v1395 = vpop.f32.mrb[0].mxu0
    %v1396 = vadd.f32 %v1125, %v1395
    %v1397 = vpop.f32.mrb[0].mxu0
    %v1398 = vadd.f32 %v1127, %v1397
    %v1399 = vpop.f32.mrb[0].mxu0
    %v1400 = vadd.f32 %v1129, %v1399
    %v1401 = vpop.f32.mrb[0].mxu0
    %v1402 = vadd.f32 %v1131, %v1401
    %1403 = vmatprep.mubr.bf16.mxu0 0
    %1404 = vmatmul.mubr.bf16.gmra.mrb[0].mxu0 %v266
    %v1405 = vpop.f32.mrb[0].mxu0
    %v1406 = vadd.f32 %v1135, %v1405
    %v1407 = vpop.f32.mrb[0].mxu0
    %v1408 = vadd.f32 %v1137, %v1407
    %v1409 = vpop.f32.mrb[0].mxu0
    %v1410 = vadd.f32 %v1139, %v1409
    %v1411 = vpop.f32.mrb[0].mxu0
    %v1412 = vadd.f32 %v1141, %v1411
    %1413 = vmatprep.mubr.bf16.mxu0 0
    %1414 = vmatmul.mubr.bf16.gmra.mrb[0].mxu0 %v267
    %v1415 = vpop.f32.mrb[0].mxu0
    %v1416 = vadd.f32 %v1145, %v1415
    %v1417 = vpop.f32.mrb[0].mxu0
    %v1418 = vadd.f32 %v1147, %v1417
    %v1419 = vpop.f32.mrb[0].mxu0
    %v1420 = vadd.f32 %v1149, %v1419
    %v1421 = vpop.f32.mrb[0].mxu0
    %v1422 = vadd.f32 %v1151, %v1421
    %1423 = vmatprep.mubr.bf16.mxu0 0
    %1424 = vmatmul.mubr.bf16.gmra.mrb[0].mxu0 %v268
    %v1425 = vpop.f32.mrb[0].mxu0
    %v1426 = vadd.f32 %v1155, %v1425
    %v1427 = vpop.f32.mrb[0].mxu0
    %v1428 = vadd.f32 %v1157, %v1427
    %v1429 = vpop.f32.mrb[0].mxu0
    %v1430 = vadd.f32 %v1159, %v1429
    %v1431 = vpop.f32.mrb[0].mxu0
    %v1432 = vadd.f32 %v1161, %v1431
    %1433 = vmatprep.mubr.bf16.mxu0 0
    %1434 = vmatmul.mubr.bf16.gmra.mrb[0].mxu0 %v269
    %v1435 = vpop.f32.mrb[0].mxu0
    %v1436 = vadd.f32 %v1165, %v1435
    %v1437 = vpop.f32.mrb[0].mxu0
    %v1438 = vadd.f32 %v1167, %v1437
    %v1439 = vpop.f32.mrb[0].mxu0
    %v1440 = vadd.f32 %v1169, %v1439
    %v1441 = vpop.f32.mrb[0].mxu0
    %v1442 = vadd.f32 %v1171, %v1441
    %1443 = vmatprep.mubr.bf16.mxu0 0
    %1444 = vmatmul.mubr.bf16.gmra.mrb[0].mxu0 %v270
    %v1445 = vpop.f32.mrb[0].mxu0
    %v1446 = vadd.f32 %v1175, %v1445
    %v1447 = vpop.f32.mrb[0].mxu0
    %v1448 = vadd.f32 %v1177, %v1447
    %v1449 = vpop.f32.mrb[0].mxu0
    %v1450 = vadd.f32 %v1179, %v1449
    %v1451 = vpop.f32.mrb[0].mxu0
    %v1452 = vadd.f32 %v1181, %v1451
    %1453 = vmatprep.mubr.bf16.mxu0 0
    %1454 = vmatmul.mubr.bf16.gmra.mrb[0].mxu0 %v271
    %v1455 = vpop.f32.mrb[0].mxu0
    %v1456 = vadd.f32 %v1185, %v1455
    %v1457 = vpop.f32.mrb[0].mxu0
    %v1458 = vadd.f32 %v1187, %v1457
    %v1459 = vpop.f32.mrb[0].mxu0
    %v1460 = vadd.f32 %v1189, %v1459
    %v1461 = vpop.f32.mrb[0].mxu0
    %v1462 = vadd.f32 %v1191, %v1461
    %1463 = vmatprep.mubr.bf16.mxu0 0
    %1464 = vmatmul.mubr.bf16.gmra.mrb[0].mxu0 %v272
    %v1465 = vpop.f32.mrb[0].mxu0
    %v1466 = vadd.f32 %v1195, %v1465
    %v1467 = vpop.f32.mrb[0].mxu0
    %v1468 = vadd.f32 %v1197, %v1467
    %v1469 = vpop.f32.mrb[0].mxu0
    %v1470 = vadd.f32 %v1199, %v1469
    %v1471 = vpop.f32.mrb[0].mxu0
    %v1472 = vadd.f32 %v1201, %v1471
    %1473 = vmatprep.mubr.bf16.mxu0 0
    %1474 = vmatmul.mubr.bf16.gmra.mrb[0].mxu0 %v273
    %v1475 = vpop.f32.mrb[0].mxu0
    %v1476 = vadd.f32 %v1205, %v1475
    %v1477 = vpop.f32.mrb[0].mxu0
    %v1478 = vadd.f32 %v1207, %v1477
    %v1479 = vpop.f32.mrb[0].mxu0
    %v1480 = vadd.f32 %v1209, %v1479
    %v1481 = vpop.f32.mrb[0].mxu0
    %v1482 = vadd.f32 %v1211, %v1481
    %1483 = vmatprep.mubr.bf16.mxu0 0
    %1484 = vmatmul.mubr.bf16.gmra.mrb[0].mxu0 %v274
    %v1485 = vpop.f32.mrb[0].mxu0
    %v1486 = vadd.f32 %v1215, %v1485
    %v1487 = vpop.f32.mrb[0].mxu0
    %v1488 = vadd.f32 %v1217, %v1487
    %v1489 = vpop.f32.mrb[0].mxu0
    %v1490 = vadd.f32 %v1219, %v1489
    %v1491 = vpop.f32.mrb[0].mxu0
    %v1492 = vadd.f32 %v1221, %v1491
    %1493 = vmatprep.mubr.bf16.mxu0 0
    %1494 = vmatmul.mubr.bf16.gmra.mrb[0].mxu0 %v275
    %v1495 = vpop.f32.mrb[0].mxu0
    %v1496 = vadd.f32 %v1225, %v1495
    %v1497 = vpop.f32.mrb[0].mxu0
    %v1498 = vadd.f32 %v1227, %v1497
    %v1499 = vpop.f32.mrb[0].mxu0
    %v1500 = vadd.f32 %v1229, %v1499
    %v1501 = vpop.f32.mrb[0].mxu0
    %v1502 = vadd.f32 %v1231, %v1501
    %1503 = vmatprep.mubr.bf16.mxu0 0
    %1504 = vmatmul.mubr.bf16.gmra.mrb[0].mxu0 %v276
    %v1505 = vpop.f32.mrb[0].mxu0
    %v1506 = vadd.f32 %v1235, %v1505
    %v1507 = vpop.f32.mrb[0].mxu0
    %v1508 = vadd.f32 %v1237, %v1507
    %v1509 = vpop.f32.mrb[0].mxu0
    %v1510 = vadd.f32 %v1239, %v1509
    %v1511 = vpop.f32.mrb[0].mxu0
    %v1512 = vadd.f32 %v1241, %v1511
    %1513 = vmatprep.mubr.bf16.mxu0 0
    %1514 = vmatmul.mubr.bf16.gmra.mrb[0].mxu0 %v277
    %v1515 = vpop.f32.mrb[0].mxu0
    %v1516 = vadd.f32 %v1245, %v1515
    %v1517 = vpop.f32.mrb[0].mxu0
    %v1518 = vadd.f32 %v1247, %v1517
    %v1519 = vpop.f32.mrb[0].mxu0
    %v1520 = vpop.f32.mrb[0].mxu0
    %1521 = vdwg.mxu0
    %v1523 = vlaneseq
    %v1524 = vshrl.u32 %v1523, 7
    %v1525 = vsub.s32 0, %v1524
    %v1526 = vrot.slane %v609, %v1525
    %v1527 = vlaneseq
    %v1528 = vshrl.u32 %v1527, 7
    %v1529 = vsub.s32 1, %v1528
    %v1530 = vrot.slane %v609, %v1529
    %v1533 = vadd.f32 %v1366, %v1526
    %v1534 = vadd.f32 %v1368, %v1530
    %v1535 = vadd.f32 %v1370, %v1526
    %v1536 = vadd.f32 %v1372, %v1530
    %v1537 = vadd.f32 %v1376, %v1526
    %v1538 = vadd.f32 %v1378, %v1530
    %v1539 = vadd.f32 %v1380, %v1526
    %v1540 = vadd.f32 %v1382, %v1530
    %v1541 = vadd.f32 %v1386, %v1526
    %v1542 = vadd.f32 %v1388, %v1530
    %v1543 = vadd.f32 %v1390, %v1526
    %v1544 = vadd.f32 %v1392, %v1530
    %v1545 = vadd.f32 %v1396, %v1526
    %v1546 = vadd.f32 %v1398, %v1530
    %v1547 = vadd.f32 %v1400, %v1526
    %v1548 = vadd.f32 %v1402, %v1530
    %v1549 = vadd.f32 %v1406, %v1526
    %v1550 = vadd.f32 %v1408, %v1530
    %v1551 = vadd.f32 %v1410, %v1526
    %v1552 = vadd.f32 %v1412, %v1530
    %v1553 = vadd.f32 %v1416, %v1526
    %v1554 = vadd.f32 %v1418, %v1530
    %v1555 = vadd.f32 %v1420, %v1526
    %v1556 = vadd.f32 %v1422, %v1530
    %v1557 = vadd.f32 %v1426, %v1526
    %v1558 = vadd.f32 %v1428, %v1530
    %v1559 = vadd.f32 %v1430, %v1526
    %v1560 = vadd.f32 %v1432, %v1530
    %v1561 = vadd.f32 %v1436, %v1526
    %v1562 = vadd.f32 %v1438, %v1530
    %v1563 = vadd.f32 %v1440, %v1526
    %v1564 = vadd.f32 %v1442, %v1530
    %v1565 = vadd.f32 %v1446, %v1526
    %v1566 = vadd.f32 %v1448, %v1530
    %v1567 = vadd.f32 %v1450, %v1526
    %v1568 = vadd.f32 %v1452, %v1530
    %v1569 = vadd.f32 %v1456, %v1526
    %v1570 = vadd.f32 %v1458, %v1530
    %v1571 = vadd.f32 %v1460, %v1526
    %v1572 = vadd.f32 %v1462, %v1530
    %v1573 = vadd.f32 %v1466, %v1526
    %v1574 = vadd.f32 %v1468, %v1530
    %v1575 = vadd.f32 %v1470, %v1526
    %v1576 = vadd.f32 %v1472, %v1530
    %v1577 = vadd.f32 %v1476, %v1526
    %v1578 = vadd.f32 %v1478, %v1530
    %v1579 = vadd.f32 %v1480, %v1526
    %v1580 = vadd.f32 %v1482, %v1530
    %v1581 = vadd.f32 %v1486, %v1526
    %v1582 = vadd.f32 %v1488, %v1530
    %v1583 = vadd.f32 %v1490, %v1526
    %v1584 = vadd.f32 %v1492, %v1530
    %v1585 = vadd.f32 %v1496, %v1526
    %v1586 = vadd.f32 %v1498, %v1530
    %v1587 = vadd.f32 %v1500, %v1526
    %v1588 = vadd.f32 %v1502, %v1530
    %v1589 = vadd.f32 %v1506, %v1526
    %v1590 = vadd.f32 %v1508, %v1530
    %v1591 = vadd.f32 %v1510, %v1526
    %v1592 = vadd.f32 %v1512, %v1530
    %v1593 = vadd.f32 %v1516, %v1526
    %v1594 = vadd.f32 %v1518, %v1530
    %v1595 = vxor.u32 %v1533, 2147483648
    %v1596 = vxor.u32 %v1534, 2147483648
    %v1597 = vxor.u32 %v1535, 2147483648
    %v1598 = vxor.u32 %v1536, 2147483648
    %v1599 = vxor.u32 %v1537, 2147483648
    %v1600 = vxor.u32 %v1538, 2147483648
    %v1601 = vxor.u32 %v1539, 2147483648
    %v1602 = vxor.u32 %v1540, 2147483648
    %v1603 = vxor.u32 %v1541, 2147483648
    %v1604 = vxor.u32 %v1542, 2147483648
    %v1605 = vxor.u32 %v1543, 2147483648
    %v1606 = vxor.u32 %v1544, 2147483648
    %v1607 = vxor.u32 %v1545, 2147483648
    %v1608 = vxor.u32 %v1546, 2147483648
    %v1609 = vxor.u32 %v1547, 2147483648
    %v1610 = vxor.u32 %v1548, 2147483648
    %v1611 = vxor.u32 %v1549, 2147483648
    %v1612 = vxor.u32 %v1550, 2147483648
    %v1613 = vxor.u32 %v1551, 2147483648
    %v1614 = vxor.u32 %v1552, 2147483648
    %v1615 = vxor.u32 %v1553, 2147483648
    %v1616 = vxor.u32 %v1554, 2147483648
    %v1617 = vxor.u32 %v1555, 2147483648
    %v1618 = vxor.u32 %v1556, 2147483648
    %v1619 = vxor.u32 %v1557, 2147483648
    %v1620 = vxor.u32 %v1558, 2147483648
    %v1621 = vxor.u32 %v1559, 2147483648
    %v1622 = vxor.u32 %v1560, 2147483648
    %v1623 = vxor.u32 %v1561, 2147483648
    %v1624 = vxor.u32 %v1562, 2147483648
    %v1625 = vxor.u32 %v1563, 2147483648
    %v1626 = vxor.u32 %v1564, 2147483648
    %v1627 = vxor.u32 %v1565, 2147483648
    %v1628 = vxor.u32 %v1566, 2147483648
    %v1629 = vxor.u32 %v1567, 2147483648
    %v1630 = vxor.u32 %v1568, 2147483648
    %v1631 = vxor.u32 %v1569, 2147483648
    %v1632 = vxor.u32 %v1570, 2147483648
    %v1633 = vxor.u32 %v1571, 2147483648
    %v1634 = vxor.u32 %v1572, 2147483648
    %v1635 = vxor.u32 %v1573, 2147483648
    %v1636 = vxor.u32 %v1574, 2147483648
    %v1637 = vxor.u32 %v1575, 2147483648
    %v1638 = vxor.u32 %v1576, 2147483648
    %v1639 = vxor.u32 %v1577, 2147483648
    %v1640 = vxor.u32 %v1578, 2147483648
    %v1641 = vxor.u32 %v1579, 2147483648
    %v1642 = vxor.u32 %v1580, 2147483648
    %v1643 = vxor.u32 %v1581, 2147483648
    %v1644 = vxor.u32 %v1582, 2147483648
    %v1645 = vxor.u32 %v1583, 2147483648
    %v1646 = vxor.u32 %v1584, 2147483648
    %v1647 = vxor.u32 %v1585, 2147483648
    %v1648 = vxor.u32 %v1586, 2147483648
    %v1649 = vxor.u32 %v1587, 2147483648
    %v1650 = vxor.u32 %v1588, 2147483648
    %v1651 = vxor.u32 %v1589, 2147483648
    %v1652 = vxor.u32 %v1590, 2147483648
    %v1653 = vxor.u32 %v1591, 2147483648
    %v1654 = vxor.u32 %v1592, 2147483648
    %v1655 = vxor.u32 %v1593, 2147483648
    %v1656 = vxor.u32 %v1594, 2147483648
    %v1657 = vmul.f32 %v1595, 1.442695
    %v1658 = vpow.pop %v1657
    %v1659 = vmul.f32 %v1596, 1.442695
    %v1660 = vpow.pop %v1659
    %v1661 = vmul.f32 %v1597, 1.442695
    %v1662 = vpow.pop %v1661
    %v1663 = vmul.f32 %v1598, 1.442695
    %v1664 = vpow.pop %v1663
    %v1665 = vmul.f32 %v1599, 1.442695
    %v1666 = vpow.pop %v1665
    %v1667 = vmul.f32 %v1600, 1.442695
    %v1668 = vpow.pop %v1667
    %v1669 = vmul.f32 %v1601, 1.442695
    %v1670 = vpow.pop %v1669
    %v1671 = vmul.f32 %v1602, 1.442695
    %v1672 = vpow.pop %v1671
    %v1673 = vmul.f32 %v1603, 1.442695
    %v1674 = vpow.pop %v1673
    %v1675 = vmul.f32 %v1604, 1.442695
    %v1676 = vpow.pop %v1675
    %v1677 = vmul.f32 %v1605, 1.442695
    %v1678 = vpow.pop %v1677
    %v1679 = vmul.f32 %v1606, 1.442695
    %v1680 = vpow.pop %v1679
    %v1681 = vmul.f32 %v1607, 1.442695
    %v1682 = vpow.pop %v1681
    %v1683 = vmul.f32 %v1608, 1.442695
    %v1684 = vpow.pop %v1683
    %v1685 = vmul.f32 %v1609, 1.442695
    %v1686 = vpow.pop %v1685
    %v1687 = vmul.f32 %v1610, 1.442695
    %v1688 = vpow.pop %v1687
    %v1689 = vmul.f32 %v1611, 1.442695
    %v1690 = vpow.pop %v1689
    %v1691 = vmul.f32 %v1612, 1.442695
    %v1692 = vpow.pop %v1691
    %v1693 = vmul.f32 %v1613, 1.442695
    %v1694 = vpow.pop %v1693
    %v1695 = vmul.f32 %v1614, 1.442695
    %v1696 = vpow.pop %v1695
    %v1697 = vmul.f32 %v1615, 1.442695
    %v1698 = vpow.pop %v1697
    %v1699 = vmul.f32 %v1616, 1.442695
    %v1700 = vpow.pop %v1699
    %v1701 = vmul.f32 %v1617, 1.442695
    %v1702 = vpow.pop %v1701
    %v1703 = vmul.f32 %v1618, 1.442695
    %v1704 = vpow.pop %v1703
    %v1705 = vmul.f32 %v1619, 1.442695
    %v1706 = vpow.pop %v1705
    %v1707 = vmul.f32 %v1620, 1.442695
    %v1708 = vpow.pop %v1707
    %v1709 = vmul.f32 %v1621, 1.442695
    %v1710 = vpow.pop %v1709
    %v1711 = vmul.f32 %v1622, 1.442695
    %v1712 = vpow.pop %v1711
    %v1713 = vmul.f32 %v1623, 1.442695
    %v1714 = vpow.pop %v1713
    %v1715 = vmul.f32 %v1624, 1.442695
    %v1716 = vpow.pop %v1715
    %v1717 = vmul.f32 %v1625, 1.442695
    %v1718 = vpow.pop %v1717
    %v1719 = vmul.f32 %v1626, 1.442695
    %v1720 = vpow.pop %v1719
    %v1721 = vmul.f32 %v1627, 1.442695
    %v1722 = vpow.pop %v1721
    %v1723 = vmul.f32 %v1628, 1.442695
    %v1724 = vpow.pop %v1723
    %v1725 = vmul.f32 %v1629, 1.442695
    %v1726 = vpow.pop %v1725
    %v1727 = vmul.f32 %v1630, 1.442695
    %v1728 = vpow.pop %v1727
    %v1729 = vmul.f32 %v1631, 1.442695
    %v1730 = vpow.pop %v1729
    %v1731 = vmul.f32 %v1632, 1.442695
    %v1732 = vpow.pop %v1731
    %v1733 = vmul.f32 %v1633, 1.442695
    %v1734 = vpow.pop %v1733
    %v1735 = vmul.f32 %v1634, 1.442695
    %v1736 = vpow.pop %v1735
    %v1737 = vmul.f32 %v1635, 1.442695
    %v1738 = vpow.pop %v1737
    %v1739 = vmul.f32 %v1636, 1.442695
    %v1740 = vpow.pop %v1739
    %v1741 = vmul.f32 %v1637, 1.442695
    %v1742 = vpow.pop %v1741
    %v1743 = vmul.f32 %v1638, 1.442695
    %v1744 = vpow.pop %v1743
    %v1745 = vmul.f32 %v1639, 1.442695
    %v1746 = vpow.pop %v1745
    %v1747 = vmul.f32 %v1640, 1.442695
    %v1748 = vpow.pop %v1747
    %v1749 = vmul.f32 %v1641, 1.442695
    %v1750 = vpow.pop %v1749
    %v1751 = vmul.f32 %v1642, 1.442695
    %v1752 = vpow.pop %v1751
    %v1753 = vmul.f32 %v1643, 1.442695
    %v1754 = vpow.pop %v1753
    %v1755 = vmul.f32 %v1644, 1.442695
    %v1756 = vpow.pop %v1755
    %v1757 = vmul.f32 %v1645, 1.442695
    %v1758 = vpow.pop %v1757
    %v1759 = vmul.f32 %v1646, 1.442695
    %v1760 = vpow.pop %v1759
    %v1761 = vmul.f32 %v1647, 1.442695
    %v1762 = vpow.pop %v1761
    %v1763 = vmul.f32 %v1648, 1.442695
    %v1764 = vpow.pop %v1763
    %v1765 = vmul.f32 %v1649, 1.442695
    %v1766 = vpow.pop %v1765
    %v1767 = vmul.f32 %v1650, 1.442695
    %v1768 = vpow.pop %v1767
    %v1769 = vmul.f32 %v1651, 1.442695
    %v1770 = vpow.pop %v1769
    %v1771 = vmul.f32 %v1652, 1.442695
    %v1772 = vpow.pop %v1771
    %v1773 = vmul.f32 %v1653, 1.442695
    %v1774 = vpow.pop %v1773
    %v1775 = vmul.f32 %v1654, 1.442695
    %v1776 = vpow.pop %v1775
    %v1777 = vmul.f32 %v1655, 1.442695
    %v1778 = vpow.pop %v1777
    %v1779 = vmul.f32 %v1656, 1.442695
    %v1780 = vpow.pop %v1779
    %v1781 = vadd.f32 %v1658, 1.0
    %v1782 = vadd.f32 %v1660, 1.0
    %v1783 = vadd.f32 %v1662, 1.0
    %v1784 = vadd.f32 %v1664, 1.0
    %v1785 = vadd.f32 %v1666, 1.0
    %v1786 = vadd.f32 %v1668, 1.0
    %v1787 = vadd.f32 %v1670, 1.0
    %v1788 = vadd.f32 %v1672, 1.0
    %v1789 = vadd.f32 %v1674, 1.0
    %v1790 = vadd.f32 %v1676, 1.0
    %v1791 = vadd.f32 %v1678, 1.0
    %v1792 = vadd.f32 %v1680, 1.0
    %v1793 = vadd.f32 %v1682, 1.0
    %v1794 = vadd.f32 %v1684, 1.0
    %v1795 = vadd.f32 %v1686, 1.0
    %v1796 = vadd.f32 %v1688, 1.0
    %v1797 = vadd.f32 %v1690, 1.0
    %v1798 = vadd.f32 %v1692, 1.0
    %v1799 = vadd.f32 %v1694, 1.0
    %v1800 = vadd.f32 %v1696, 1.0
    %v1801 = vadd.f32 %v1698, 1.0
    %v1802 = vadd.f32 %v1700, 1.0
    %v1803 = vadd.f32 %v1702, 1.0
    %v1804 = vadd.f32 %v1704, 1.0
    %v1805 = vadd.f32 %v1706, 1.0
    %v1806 = vadd.f32 %v1708, 1.0
    %v1807 = vadd.f32 %v1710, 1.0
    %v1808 = vadd.f32 %v1712, 1.0
    %v1809 = vadd.f32 %v1714, 1.0
    %v1810 = vadd.f32 %v1716, 1.0
    %v1811 = vadd.f32 %v1718, 1.0
    %v1812 = vadd.f32 %v1720, 1.0
    %v1813 = vadd.f32 %v1722, 1.0
    %v1814 = vadd.f32 %v1724, 1.0
    %v1815 = vadd.f32 %v1726, 1.0
    %v1816 = vadd.f32 %v1728, 1.0
    %v1817 = vadd.f32 %v1730, 1.0
    %v1818 = vadd.f32 %v1732, 1.0
    %v1819 = vadd.f32 %v1734, 1.0
    %v1820 = vadd.f32 %v1736, 1.0
    %v1821 = vadd.f32 %v1738, 1.0
    %v1822 = vadd.f32 %v1740, 1.0
    %v1823 = vadd.f32 %v1742, 1.0
    %v1824 = vadd.f32 %v1744, 1.0
    %v1825 = vadd.f32 %v1746, 1.0
    %v1826 = vadd.f32 %v1748, 1.0
    %v1827 = vadd.f32 %v1750, 1.0
    %v1828 = vadd.f32 %v1752, 1.0
    %v1829 = vadd.f32 %v1754, 1.0
    %v1830 = vadd.f32 %v1756, 1.0
    %v1831 = vadd.f32 %v1758, 1.0
    %v1832 = vadd.f32 %v1760, 1.0
    %v1833 = vadd.f32 %v1762, 1.0
    %v1834 = vadd.f32 %v1764, 1.0
    %v1835 = vadd.f32 %v1766, 1.0
    %v1836 = vadd.f32 %v1768, 1.0
    %v1837 = vadd.f32 %v1770, 1.0
    %v1838 = vadd.f32 %v1772, 1.0
    %v1839 = vadd.f32 %v1774, 1.0
    %v1840 = vadd.f32 %v1776, 1.0
    %v1841 = vadd.f32 %v1778, 1.0
    %v1842 = vadd.f32 %v1780, 1.0
    %v1843 = vrcp.pop %v1781
    %v1844 = vmul.f32 1.0, %v1843
    %v1845 = vrcp.pop %v1782
    %v1846 = vmul.f32 1.0, %v1845
    %v1847 = vrcp.pop %v1783
    %v1848 = vmul.f32 1.0, %v1847
    %v1849 = vrcp.pop %v1784
    %v1850 = vmul.f32 1.0, %v1849
    %v1851 = vrcp.pop %v1785
    %v1852 = vmul.f32 1.0, %v1851
    %v1853 = vrcp.pop %v1786
    %v1854 = vmul.f32 1.0, %v1853
    %v1855 = vrcp.pop %v1787
    %v1856 = vmul.f32 1.0, %v1855
    %v1857 = vrcp.pop %v1788
    %v1858 = vmul.f32 1.0, %v1857
    %v1859 = vrcp.pop %v1789
    %v1860 = vmul.f32 1.0, %v1859
    %v1861 = vrcp.pop %v1790
    %v1862 = vmul.f32 1.0, %v1861
    %v1863 = vrcp.pop %v1791
    %v1864 = vmul.f32 1.0, %v1863
    %v1865 = vrcp.pop %v1792
    %v1866 = vmul.f32 1.0, %v1865
    %v1867 = vrcp.pop %v1793
    %v1868 = vmul.f32 1.0, %v1867
    %v1869 = vrcp.pop %v1794
    %v1870 = vmul.f32 1.0, %v1869
    %v1871 = vrcp.pop %v1795
    %v1872 = vmul.f32 1.0, %v1871
    %v1873 = vrcp.pop %v1796
    %v1874 = vmul.f32 1.0, %v1873
    %v1875 = vrcp.pop %v1797
    %v1876 = vmul.f32 1.0, %v1875
    %v1877 = vrcp.pop %v1798
    %v1878 = vmul.f32 1.0, %v1877
    %v1879 = vrcp.pop %v1799
    %v1880 = vmul.f32 1.0, %v1879
    %v1881 = vrcp.pop %v1800
    %v1882 = vmul.f32 1.0, %v1881
    %v1883 = vrcp.pop %v1801
    %v1884 = vmul.f32 1.0, %v1883
    %v1885 = vrcp.pop %v1802
    %v1886 = vmul.f32 1.0, %v1885
    %v1887 = vrcp.pop %v1803
    %v1888 = vmul.f32 1.0, %v1887
    %v1889 = vrcp.pop %v1804
    %v1890 = vmul.f32 1.0, %v1889
    %v1891 = vrcp.pop %v1805
    %v1892 = vmul.f32 1.0, %v1891
    %v1893 = vrcp.pop %v1806
    %v1894 = vmul.f32 1.0, %v1893
    %v1895 = vrcp.pop %v1807
    %v1896 = vmul.f32 1.0, %v1895
    %v1897 = vrcp.pop %v1808
    %v1898 = vmul.f32 1.0, %v1897
    %v1899 = vrcp.pop %v1809
    %v1900 = vmul.f32 1.0, %v1899
    %v1901 = vrcp.pop %v1810
    %v1902 = vmul.f32 1.0, %v1901
    %v1903 = vrcp.pop %v1811
    %v1904 = vmul.f32 1.0, %v1903
    %v1905 = vrcp.pop %v1812
    %v1906 = vmul.f32 1.0, %v1905
    %v1907 = vrcp.pop %v1813
    %v1908 = vmul.f32 1.0, %v1907
    %v1909 = vrcp.pop %v1814
    %v1910 = vmul.f32 1.0, %v1909
    %v1911 = vrcp.pop %v1815
    %v1912 = vmul.f32 1.0, %v1911
    %v1913 = vrcp.pop %v1816
    %v1914 = vmul.f32 1.0, %v1913
    %v1915 = vrcp.pop %v1817
    %v1916 = vmul.f32 1.0, %v1915
    %v1917 = vrcp.pop %v1818
    %v1918 = vmul.f32 1.0, %v1917
    %v1919 = vrcp.pop %v1819
    %v1920 = vmul.f32 1.0, %v1919
    %v1921 = vrcp.pop %v1820
    %v1922 = vmul.f32 1.0, %v1921
    %v1923 = vrcp.pop %v1821
    %v1924 = vmul.f32 1.0, %v1923
    %v1925 = vrcp.pop %v1822
    %v1926 = vmul.f32 1.0, %v1925
    %v1927 = vrcp.pop %v1823
    %v1928 = vmul.f32 1.0, %v1927
    %v1929 = vrcp.pop %v1824
    %v1930 = vmul.f32 1.0, %v1929
    %v1931 = vrcp.pop %v1825
    %v1932 = vmul.f32 1.0, %v1931
    %v1933 = vrcp.pop %v1826
    %v1934 = vmul.f32 1.0, %v1933
    %v1935 = vrcp.pop %v1827
    %v1936 = vmul.f32 1.0, %v1935
    %v1937 = vrcp.pop %v1828
    %v1938 = vmul.f32 1.0, %v1937
    %v1939 = vrcp.pop %v1829
    %v1940 = vmul.f32 1.0, %v1939
    %v1941 = vrcp.pop %v1830
    %v1942 = vmul.f32 1.0, %v1941
    %v1943 = vrcp.pop %v1831
    %v1944 = vmul.f32 1.0, %v1943
    %v1945 = vrcp.pop %v1832
    %v1946 = vmul.f32 1.0, %v1945
    %v1947 = vrcp.pop %v1833
    %v1948 = vmul.f32 1.0, %v1947
    %v1949 = vrcp.pop %v1834
    %v1950 = vmul.f32 1.0, %v1949
    %v1951 = vrcp.pop %v1835
    %v1952 = vmul.f32 1.0, %v1951
    %v1953 = vrcp.pop %v1836
    %v1954 = vmul.f32 1.0, %v1953
    %v1955 = vrcp.pop %v1837
    %v1956 = vmul.f32 1.0, %v1955
    %v1957 = vrcp.pop %v1838
    %v1958 = vmul.f32 1.0, %v1957
    %v1959 = vrcp.pop %v1839
    %v1960 = vmul.f32 1.0, %v1959
    %v1961 = vrcp.pop %v1840
    %v1962 = vmul.f32 1.0, %v1961
    %v1963 = vrcp.pop %v1841
    %v1964 = vmul.f32 1.0, %v1963
    %v1965 = vrcp.pop %v1842
    %v1966 = vmul.f32 1.0, %v1965
    %v1967 = vmul.f32 %v1533, %v1844
    %v1968 = vmul.f32 %v1534, %v1846
    %v1969 = vmul.f32 %v1535, %v1848
    %v1970 = vmul.f32 %v1536, %v1850
    %v1971 = vmul.f32 %v1537, %v1852
    %v1972 = vmul.f32 %v1538, %v1854
    %v1973 = vmul.f32 %v1539, %v1856
    %v1974 = vmul.f32 %v1540, %v1858
    %v1975 = vmul.f32 %v1541, %v1860
    %v1976 = vmul.f32 %v1542, %v1862
    %v1977 = vmul.f32 %v1543, %v1864
    %v1978 = vmul.f32 %v1544, %v1866
    %v1979 = vmul.f32 %v1545, %v1868
    %v1980 = vmul.f32 %v1546, %v1870
    %v1981 = vmul.f32 %v1547, %v1872
    %v1982 = vmul.f32 %v1548, %v1874
    %v1983 = vmul.f32 %v1549, %v1876
    %v1984 = vmul.f32 %v1550, %v1878
    %v1985 = vmul.f32 %v1551, %v1880
    %v1986 = vmul.f32 %v1552, %v1882
    %v1987 = vmul.f32 %v1553, %v1884
    %v1988 = vmul.f32 %v1554, %v1886
    %v1989 = vmul.f32 %v1555, %v1888
    %v1990 = vmul.f32 %v1556, %v1890
    %v1991 = vmul.f32 %v1557, %v1892
    %v1992 = vmul.f32 %v1558, %v1894
    %v1993 = vmul.f32 %v1559, %v1896
    %v1994 = vmul.f32 %v1560, %v1898
    %v1995 = vmul.f32 %v1561, %v1900
    %v1996 = vmul.f32 %v1562, %v1902
    %v1997 = vmul.f32 %v1563, %v1904
    %v1998 = vmul.f32 %v1564, %v1906
    %v1999 = vmul.f32 %v1565, %v1908
    %v2000 = vmul.f32 %v1566, %v1910
    %v2001 = vmul.f32 %v1567, %v1912
    %v2002 = vmul.f32 %v1568, %v1914
    %v2003 = vmul.f32 %v1569, %v1916
    %v2004 = vmul.f32 %v1570, %v1918
    %v2005 = vmul.f32 %v1571, %v1920
    %v2006 = vmul.f32 %v1572, %v1922
    %v2007 = vmul.f32 %v1573, %v1924
    %v2008 = vmul.f32 %v1574, %v1926
    %v2009 = vmul.f32 %v1575, %v1928
    %v2010 = vmul.f32 %v1576, %v1930
    %v2011 = vmul.f32 %v1577, %v1932
    %v2012 = vmul.f32 %v1578, %v1934
    %v2013 = vmul.f32 %v1579, %v1936
    %v2014 = vmul.f32 %v1580, %v1938
    %v2015 = vmul.f32 %v1581, %v1940
    %v2016 = vmul.f32 %v1582, %v1942
    %v2017 = vmul.f32 %v1583, %v1944
    %v2018 = vmul.f32 %v1584, %v1946
    %v2019 = vmul.f32 %v1585, %v1948
    %v2020 = vmul.f32 %v1586, %v1950
    %v2021 = vmul.f32 %v1587, %v1952
    %v2022 = vmul.f32 %v1588, %v1954
    %v2023 = vmul.f32 %v1589, %v1956
    %v2024 = vmul.f32 %v1590, %v1958
    %v2025 = vmul.f32 %v1591, %v1960
    %v2026 = vmul.f32 %v1592, %v1962
    %v2027 = vmul.f32 %v1593, %v1964
    %v2028 = vmul.f32 %v1594, %v1966
    %v2029 = vadd.f32 %v1967, %v1968
    %v2030 = vadd.f32 %v2029, %v1969
    %v2031 = vadd.f32 %v2030, %v1970
    %v2032 = vadd.f32 %v2031, %v1971
    %v2033 = vadd.f32 %v2032, %v1972
    %v2034 = vadd.f32 %v2033, %v1973
    %v2035 = vadd.f32 %v2034, %v1974
    %v2036 = vadd.f32 %v2035, %v1975
    %v2037 = vadd.f32 %v2036, %v1976
    %v2038 = vadd.f32 %v2037, %v1977
    %v2039 = vadd.f32 %v2038, %v1978
    %v2040 = vadd.f32 %v2039, %v1979
    %v2041 = vadd.f32 %v2040, %v1980
    %v2042 = vadd.f32 %v2041, %v1981
    %v2043 = vadd.f32 %v2042, %v1982
    %v2044 = vadd.f32 %v2043, %v1983
    %v2045 = vadd.f32 %v2044, %v1984
    %v2046 = vadd.f32 %v2045, %v1985
    %v2047 = vadd.f32 %v2046, %v1986
    %v2048 = vadd.f32 %v2047, %v1987
    %v2049 = vadd.f32 %v2048, %v1988
    %v2050 = vadd.f32 %v2049, %v1989
    %v2051 = vadd.f32 %v2050, %v1990
    %v2052 = vadd.f32 %v2051, %v1991
    %v2053 = vadd.f32 %v2052, %v1992
    %v2054 = vadd.f32 %v2053, %v1993
    %v2055 = vadd.f32 %v2054, %v1994
    %v2056 = vadd.f32 %v2055, %v1995
    %v2057 = vadd.f32 %v2056, %v1996
    %v2058 = vadd.f32 %v2057, %v1997
    %v2059 = vadd.f32 %v2058, %v1998
    %v2060 = vadd.f32 %v2059, %v1999
    %v2061 = vadd.f32 %v2060, %v2000
    %v2062 = vadd.f32 %v2061, %v2001
    %v2063 = vadd.f32 %v2062, %v2002
    %v2064 = vadd.f32 %v2063, %v2003
    %v2065 = vadd.f32 %v2064, %v2004
    %v2066 = vadd.f32 %v2065, %v2005
    %v2067 = vadd.f32 %v2066, %v2006
    %v2068 = vadd.f32 %v2067, %v2007
    %v2069 = vadd.f32 %v2068, %v2008
    %v2070 = vadd.f32 %v2069, %v2009
    %v2071 = vadd.f32 %v2070, %v2010
    %v2072 = vadd.f32 %v2071, %v2011
    %v2073 = vadd.f32 %v2072, %v2012
    %v2074 = vadd.f32 %v2073, %v2013
    %v2075 = vadd.f32 %v2074, %v2014
    %v2076 = vadd.f32 %v2075, %v2015
    %v2077 = vadd.f32 %v2076, %v2016
    %v2078 = vadd.f32 %v2077, %v2017
    %v2079 = vadd.f32 %v2078, %v2018
    %v2080 = vadd.f32 %v2079, %v2019
    %v2081 = vadd.f32 %v2080, %v2020
    %v2082 = vadd.f32 %v2081, %v2021
    %v2083 = vadd.f32 %v2082, %v2022
    %v2084 = vadd.f32 %v2083, %v2023
    %v2085 = vadd.f32 %v2084, %v2024
    %v2086 = vadd.f32 %v2085, %v2025
    %v2087 = vadd.f32 %v2086, %v2026
    %v2088 = vadd.f32 %v2087, %v2027
    %v2089 = vadd.f32 %v2088, %v2028
    %2090 = vadd.xlane.f32.xlu0 %v2089
    %v2091 = vpop.xlane.xlu0 %2090
    %v2092 = vrot.slane %v2091, 4
    %v2093 = vadd.f32 %v2091, %v2092
    %v2094 = vrot.slane %v2093, 2
    %v2095 = vadd.f32 %v2093, %v2094
    %v2096 = vrot.slane %v2095, 1
    %v2097 = vadd.f32 %v2095, %v2096
    %s2098 = vtos %v2097
    %v2099 = vmul.f32 %v1967, %v1967
    %v2100 = vmul.f32 %v1968, %v1968
    %v2101 = vmul.f32 %v1969, %v1969
    %v2102 = vmul.f32 %v1970, %v1970
    %v2103 = vmul.f32 %v1971, %v1971
    %v2104 = vmul.f32 %v1972, %v1972
    %v2105 = vmul.f32 %v1973, %v1973
    %v2106 = vmul.f32 %v1974, %v1974
    %v2107 = vmul.f32 %v1975, %v1975
    %v2108 = vmul.f32 %v1976, %v1976
    %v2109 = vmul.f32 %v1977, %v1977
    %v2110 = vmul.f32 %v1978, %v1978
    %v2111 = vmul.f32 %v1979, %v1979
    %v2112 = vmul.f32 %v1980, %v1980
    %v2113 = vmul.f32 %v1981, %v1981
    %v2114 = vmul.f32 %v1982, %v1982
    %v2115 = vmul.f32 %v1983, %v1983
    %v2116 = vmul.f32 %v1984, %v1984
    %v2117 = vmul.f32 %v1985, %v1985
    %v2118 = vmul.f32 %v1986, %v1986
    %v2119 = vmul.f32 %v1987, %v1987
    %v2120 = vmul.f32 %v1988, %v1988
    %v2121 = vmul.f32 %v1989, %v1989
    %v2122 = vmul.f32 %v1990, %v1990
    %v2123 = vmul.f32 %v1991, %v1991
    %v2124 = vmul.f32 %v1992, %v1992
    %v2125 = vmul.f32 %v1993, %v1993
    %v2126 = vmul.f32 %v1994, %v1994
    %v2127 = vmul.f32 %v1995, %v1995
    %v2128 = vmul.f32 %v1996, %v1996
    %v2129 = vmul.f32 %v1997, %v1997
    %v2130 = vmul.f32 %v1998, %v1998
    %v2131 = vmul.f32 %v1999, %v1999
    %v2132 = vmul.f32 %v2000, %v2000
    %v2133 = vmul.f32 %v2001, %v2001
    %v2134 = vmul.f32 %v2002, %v2002
    %v2135 = vmul.f32 %v2003, %v2003
    %v2136 = vmul.f32 %v2004, %v2004
    %v2137 = vmul.f32 %v2005, %v2005
    %v2138 = vmul.f32 %v2006, %v2006
    %v2139 = vmul.f32 %v2007, %v2007
    %v2140 = vmul.f32 %v2008, %v2008
    %v2141 = vmul.f32 %v2009, %v2009
    %v2142 = vmul.f32 %v2010, %v2010
    %v2143 = vmul.f32 %v2011, %v2011
    %v2144 = vmul.f32 %v2012, %v2012
    %v2145 = vmul.f32 %v2013, %v2013
    %v2146 = vmul.f32 %v2014, %v2014
    %v2147 = vmul.f32 %v2015, %v2015
    %v2148 = vmul.f32 %v2016, %v2016
    %v2149 = vmul.f32 %v2017, %v2017
    %v2150 = vmul.f32 %v2018, %v2018
    %v2151 = vmul.f32 %v2019, %v2019
    %v2152 = vmul.f32 %v2020, %v2020
    %v2153 = vmul.f32 %v2021, %v2021
    %v2154 = vmul.f32 %v2022, %v2022
    %v2155 = vmul.f32 %v2023, %v2023
    %v2156 = vmul.f32 %v2024, %v2024
    %v2157 = vmul.f32 %v2025, %v2025
    %v2158 = vmul.f32 %v2026, %v2026
    %v2159 = vmul.f32 %v2027, %v2027
    %v2160 = vmul.f32 %v2028, %v2028
    %v2161 = vadd.f32 %v2099, %v2100
    %v2162 = vadd.f32 %v2161, %v2101
    %v2163 = vadd.f32 %v2162, %v2102
    %v2164 = vadd.f32 %v2163, %v2103
    %v2165 = vadd.f32 %v2164, %v2104
    %v2166 = vadd.f32 %v2165, %v2105
    %v2167 = vadd.f32 %v2166, %v2106
    %v2168 = vadd.f32 %v2167, %v2107
    %v2169 = vadd.f32 %v2168, %v2108
    %v2170 = vadd.f32 %v2169, %v2109
    %v2171 = vadd.f32 %v2170, %v2110
    %v2172 = vadd.f32 %v2171, %v2111
    %v2173 = vadd.f32 %v2172, %v2112
    %v2174 = vadd.f32 %v2173, %v2113
    %v2175 = vadd.f32 %v2174, %v2114
    %v2176 = vadd.f32 %v2175, %v2115
    %v2177 = vadd.f32 %v2176, %v2116
    %v2178 = vadd.f32 %v2177, %v2117
    %v2179 = vadd.f32 %v2178, %v2118
    %v2180 = vadd.f32 %v2179, %v2119
    %v2181 = vadd.f32 %v2180, %v2120
    %v2182 = vadd.f32 %v2181, %v2121
    %v2183 = vadd.f32 %v2182, %v2122
    %v2184 = vadd.f32 %v2183, %v2123
    %v2185 = vadd.f32 %v2184, %v2124
    %v2186 = vadd.f32 %v2185, %v2125
    %v2187 = vadd.f32 %v2186, %v2126
    %v2188 = vadd.f32 %v2187, %v2127
    %v2189 = vadd.f32 %v2188, %v2128
    %v2190 = vadd.f32 %v2189, %v2129
    %v2191 = vadd.f32 %v2190, %v2130
    %v2192 = vadd.f32 %v2191, %v2131
    %v2193 = vadd.f32 %v2192, %v2132
    %v2194 = vadd.f32 %v2193, %v2133
    %v2195 = vadd.f32 %v2194, %v2134
    %v2196 = vadd.f32 %v2195, %v2135
    %v2197 = vadd.f32 %v2196, %v2136
    %v2198 = vadd.f32 %v2197, %v2137
    %v2199 = vadd.f32 %v2198, %v2138
    %v2200 = vadd.f32 %v2199, %v2139
    %v2201 = vadd.f32 %v2200, %v2140
    %v2202 = vadd.f32 %v2201, %v2141
    %v2203 = vadd.f32 %v2202, %v2142
    %v2204 = vadd.f32 %v2203, %v2143
    %v2205 = vadd.f32 %v2204, %v2144
    %v2206 = vadd.f32 %v2205, %v2145
    %v2207 = vadd.f32 %v2206, %v2146
    %v2208 = vadd.f32 %v2207, %v2147
    %v2209 = vadd.f32 %v2208, %v2148
    %v2210 = vadd.f32 %v2209, %v2149
    %v2211 = vadd.f32 %v2210, %v2150
    %v2212 = vadd.f32 %v2211, %v2151
    %v2213 = vadd.f32 %v2212, %v2152
    %v2214 = vadd.f32 %v2213, %v2153
    %v2215 = vadd.f32 %v2214, %v2154
    %v2216 = vadd.f32 %v2215, %v2155
    %v2217 = vadd.f32 %v2216, %v2156
    %v2218 = vadd.f32 %v2217, %v2157
    %v2219 = vadd.f32 %v2218, %v2158
    %v2220 = vadd.f32 %v2219, %v2159
    %v2221 = vadd.f32 %v2220, %v2160
    %2222 = vadd.xlane.f32.xlu0 %v2221
    %v2223 = vpop.xlane.xlu0 %2222
    %v2224 = vrot.slane %v2223, 4
    %v2225 = vadd.f32 %v2223, %v2224
    %v2226 = vrot.slane %v2225, 2
    %v2227 = vadd.f32 %v2225, %v2226
    %v2228 = vrot.slane %v2227, 1
    %v2229 = vadd.f32 %v2227, %v2228
    %s2230 = vtos %v2229
    %v2231 = vrcp.pop 63488.0
    %s2232 = vtos %v2231
    %s2233 = smul.f32 %s2098, %s2232
    %v2234 = vrcp.pop 63488.0
    %s2235 = vtos %v2234
    %s2236 = smul.f32 %s2230, %s2235
    %s2237 = smul.f32 %s2233, %s2233
    %s2238 = ssub.f32 %s2236, %s2237
    %s2239 = sadd.f32 %s2238, 1e-05
    %v2240 = vstv %s2239
    %v2241 = vrsqrt.pop %v2240
    %s2242 = vtos %v2241
    %v2243 = vstv %s2242
    %v2244 = vmul.f32 %v1967, %v2243
    %v2245 = vmul.f32 %v1968, %v2243
    %v2246 = vmul.f32 %v1969, %v2243
    %v2247 = vmul.f32 %v1970, %v2243
    %v2248 = vmul.f32 %v1971, %v2243
    %v2249 = vmul.f32 %v1972, %v2243
    %v2250 = vmul.f32 %v1973, %v2243
    %v2251 = vmul.f32 %v1974, %v2243
    %v2252 = vmul.f32 %v1975, %v2243
    %v2253 = vmul.f32 %v1976, %v2243
    %v2254 = vmul.f32 %v1977, %v2243
    %v2255 = vmul.f32 %v1978, %v2243
    %v2256 = vmul.f32 %v1979, %v2243
    %v2257 = vmul.f32 %v1980, %v2243
    %v2258 = vmul.f32 %v1981, %v2243
    %v2259 = vmul.f32 %v1982, %v2243
    %v2260 = vmul.f32 %v1983, %v2243
    %v2261 = vmul.f32 %v1984, %v2243
    %v2262 = vmul.f32 %v1985, %v2243
    %v2263 = vmul.f32 %v1986, %v2243
    %v2264 = vmul.f32 %v1987, %v2243
    %v2265 = vmul.f32 %v1988, %v2243
    %v2266 = vmul.f32 %v1989, %v2243
    %v2267 = vmul.f32 %v1990, %v2243
    %v2268 = vmul.f32 %v1991, %v2243
    %v2269 = vmul.f32 %v1992, %v2243
    %v2270 = vmul.f32 %v1993, %v2243
    %v2271 = vmul.f32 %v1994, %v2243
    %v2272 = vmul.f32 %v1995, %v2243
    %v2273 = vmul.f32 %v1996, %v2243
    %v2274 = vmul.f32 %v1997, %v2243
    %v2275 = vmul.f32 %v1998, %v2243
    %v2276 = vmul.f32 %v1999, %v2243
    %v2277 = vmul.f32 %v2000, %v2243
    %v2278 = vmul.f32 %v2001, %v2243
    %v2279 = vmul.f32 %v2002, %v2243
    %v2280 = vmul.f32 %v2003, %v2243
    %v2281 = vmul.f32 %v2004, %v2243
    %v2282 = vmul.f32 %v2005, %v2243
    %v2283 = vmul.f32 %v2006, %v2243
    %v2284 = vmul.f32 %v2007, %v2243
    %v2285 = vmul.f32 %v2008, %v2243
    %v2286 = vmul.f32 %v2009, %v2243
    %v2287 = vmul.f32 %v2010, %v2243
    %v2288 = vmul.f32 %v2011, %v2243
    %v2289 = vmul.f32 %v2012, %v2243
    %v2290 = vmul.f32 %v2013, %v2243
    %v2291 = vmul.f32 %v2014, %v2243
    %v2292 = vmul.f32 %v2015, %v2243
    %v2293 = vmul.f32 %v2016, %v2243
    %v2294 = vmul.f32 %v2017, %v2243
    %v2295 = vmul.f32 %v2018, %v2243
    %v2296 = vmul.f32 %v2019, %v2243
    %v2297 = vmul.f32 %v2020, %v2243
    %v2298 = vmul.f32 %v2021, %v2243
    %v2299 = vmul.f32 %v2022, %v2243
    %v2300 = vmul.f32 %v2023, %v2243
    %v2301 = vmul.f32 %v2024, %v2243
    %v2302 = vmul.f32 %v2025, %v2243
    %v2303 = vmul.f32 %v2026, %v2243
    %v2304 = vmul.f32 %v2027, %v2243
    %v2305 = vmul.f32 %v2028, %v2243
    %s2306 = smul.f32 %s2233, %s2242
    %v2307 = vstv %s2306
    %v2308 = vsub.f32 %v2244, %v2307
    %v2309 = vsub.f32 %v2245, %v2307
    %v2310 = vsub.f32 %v2246, %v2307
    %v2311 = vsub.f32 %v2247, %v2307
    %v2312 = vsub.f32 %v2248, %v2307
    %v2313 = vsub.f32 %v2249, %v2307
    %v2314 = vsub.f32 %v2250, %v2307
    %v2315 = vsub.f32 %v2251, %v2307
    %v2316 = vsub.f32 %v2252, %v2307
    %v2317 = vsub.f32 %v2253, %v2307
    %v2318 = vsub.f32 %v2254, %v2307
    %v2319 = vsub.f32 %v2255, %v2307
    %v2320 = vsub.f32 %v2256, %v2307
    %v2321 = vsub.f32 %v2257, %v2307
    %v2322 = vsub.f32 %v2258, %v2307
    %v2323 = vsub.f32 %v2259, %v2307
    %v2324 = vsub.f32 %v2260, %v2307
    %v2325 = vsub.f32 %v2261, %v2307
    %v2326 = vsub.f32 %v2262, %v2307
    %v2327 = vsub.f32 %v2263, %v2307
    %v2328 = vsub.f32 %v2264, %v2307
    %v2329 = vsub.f32 %v2265, %v2307
    %v2330 = vsub.f32 %v2266, %v2307
    %v2331 = vsub.f32 %v2267, %v2307
    %v2332 = vsub.f32 %v2268, %v2307
    %v2333 = vsub.f32 %v2269, %v2307
    %v2334 = vsub.f32 %v2270, %v2307
    %v2335 = vsub.f32 %v2271, %v2307
    %v2336 = vsub.f32 %v2272, %v2307
    %v2337 = vsub.f32 %v2273, %v2307
    %v2338 = vsub.f32 %v2274, %v2307
    %v2339 = vsub.f32 %v2275, %v2307
    %v2340 = vsub.f32 %v2276, %v2307
    %v2341 = vsub.f32 %v2277, %v2307
    %v2342 = vsub.f32 %v2278, %v2307
    %v2343 = vsub.f32 %v2279, %v2307
    %v2344 = vsub.f32 %v2280, %v2307
    %v2345 = vsub.f32 %v2281, %v2307
    %v2346 = vsub.f32 %v2282, %v2307
    %v2347 = vsub.f32 %v2283, %v2307
    %v2348 = vsub.f32 %v2284, %v2307
    %v2349 = vsub.f32 %v2285, %v2307
    %v2350 = vsub.f32 %v2286, %v2307
    %v2351 = vsub.f32 %v2287, %v2307
    %v2352 = vsub.f32 %v2288, %v2307
    %v2353 = vsub.f32 %v2289, %v2307
    %v2354 = vsub.f32 %v2290, %v2307
    %v2355 = vsub.f32 %v2291, %v2307
    %v2356 = vsub.f32 %v2292, %v2307
    %v2357 = vsub.f32 %v2293, %v2307
    %v2358 = vsub.f32 %v2294, %v2307
    %v2359 = vsub.f32 %v2295, %v2307
    %v2360 = vsub.f32 %v2296, %v2307
    %v2361 = vsub.f32 %v2297, %v2307
    %v2362 = vsub.f32 %v2298, %v2307
    %v2363 = vsub.f32 %v2299, %v2307
    %v2364 = vsub.f32 %v2300, %v2307
    %v2365 = vsub.f32 %v2301, %v2307
    %v2366 = vsub.f32 %v2302, %v2307
    %v2367 = vsub.f32 %v2303, %v2307
    %v2368 = vsub.f32 %v2304, %v2307
    %v2369 = vsub.f32 %v2305, %v2307
    %s2370 = smul.u32 4, 32
    %s2371 = smul.u32 %s2370, 2
    %s2372 = sshll.u32 %s2371, 4
    %2373 = dma.done [#allocation6], %s2372
    %s2374 = sshll.u32 %s2371, 4
    %2375 = dma.done %s141, %s2374
    %v2376 = vld [vmem:[#allocation2] sm:$0xff]
    %v2377 = vld [vmem:[#allocation2 + $0x8] sm:$0xff]
    %v2378 = vld [vmem:[#allocation2 + $0x10] sm:$0xff]
    %v2379 = vld [vmem:[#allocation2 + $0x18] sm:$0xff]
    %v2380 = vld [vmem:[#allocation2 + $0x20] sm:$0xff]
    %v2381 = vld [vmem:[#allocation2 + $0x28] sm:$0xff]
    %v2382 = vld [vmem:[#allocation2 + $0x30] sm:$0xff]
    %v2383 = vld [vmem:[#allocation2 + $0x38] sm:$0xff]
    %v2384 = vld [vmem:[#allocation2 + $0x40] sm:$0xff]
    %v2385 = vld [vmem:[#allocation2 + $0x48] sm:$0xff]
    %v2386 = vld [vmem:[#allocation2 + $0x50] sm:$0xff]
    %v2387 = vld [vmem:[#allocation2 + $0x58] sm:$0xff]
    %v2388 = vld [vmem:[#allocation2 + $0x60] sm:$0xff]
    %v2389 = vld [vmem:[#allocation2 + $0x68] sm:$0xff]
    %v2390 = vld [vmem:[#allocation2 + $0x70] sm:$0xff]
    %v2391 = vld [vmem:[#allocation2 + $0x78] sm:$0xff]
    %v2392 = vld [vmem:[#allocation2 + $0x80] sm:$0xff]
    %v2393 = vld [vmem:[#allocation2 + $0x88] sm:$0xff]
    %v2394 = vld [vmem:[#allocation2 + $0x90] sm:$0xff]
    %v2395 = vld [vmem:[#allocation2 + $0x98] sm:$0xff]
    %v2396 = vld [vmem:[#allocation2 + $0xa0] sm:$0xff]
    %v2397 = vld [vmem:[#allocation2 + $0xa8] sm:$0xff]
    %v2398 = vld [vmem:[#allocation2 + $0xb0] sm:$0xff]
    %v2399 = vld [vmem:[#allocation2 + $0xb8] sm:$0xff]
    %v2400 = vld [vmem:[#allocation2 + $0xc0] sm:$0xff]
    %v2401 = vld [vmem:[#allocation2 + $0xc8] sm:$0xff]
    %v2402 = vld [vmem:[#allocation2 + $0xd0] sm:$0xff]
    %v2403 = vld [vmem:[#allocation2 + $0xd8] sm:$0xff]
    %v2404 = vld [vmem:[#allocation2 + $0xe0] sm:$0xff]
    %v2405 = vld [vmem:[#allocation2 + $0xe8] sm:$0xff]
    %v2406 = vld [vmem:[#allocation2 + $0xf0] sm:$0xff]
    %v2407 = vld [vmem:[#allocation2 + $0xf8] sm:$0xff]
    %v2408 = vld [vmem:[#allocation3] sm:$0xff]
    %v2409 = vld [vmem:[#allocation3 + $0x8] sm:$0xff]
    %v2410 = vld [vmem:[#allocation3 + $0x10] sm:$0xff]
    %v2411 = vld [vmem:[#allocation3 + $0x18] sm:$0xff]
    %v2412 = vld [vmem:[#allocation3 + $0x20] sm:$0xff]
    %v2413 = vld [vmem:[#allocation3 + $0x28] sm:$0xff]
    %v2414 = vld [vmem:[#allocation3 + $0x30] sm:$0xff]
    %v2415 = vld [vmem:[#allocation3 + $0x38] sm:$0xff]
    %v2416 = vld [vmem:[#allocation3 + $0x40] sm:$0xff]
    %v2417 = vld [vmem:[#allocation3 + $0x48] sm:$0xff]
    %v2418 = vld [vmem:[#allocation3 + $0x50] sm:$0xff]
    %v2419 = vld [vmem:[#allocation3 + $0x58] sm:$0xff]
    %v2420 = vld [vmem:[#allocation3 + $0x60] sm:$0xff]
    %v2421 = vld [vmem:[#allocation3 + $0x68] sm:$0xff]
    %v2422 = vld [vmem:[#allocation3 + $0x70] sm:$0xff]
    %v2423 = vld [vmem:[#allocation3 + $0x78] sm:$0xff]
    %v2424 = vld [vmem:[#allocation3 + $0x80] sm:$0xff]
    %v2425 = vld [vmem:[#allocation3 + $0x88] sm:$0xff]
    %v2426 = vld [vmem:[#allocation3 + $0x90] sm:$0xff]
    %v2427 = vld [vmem:[#allocation3 + $0x98] sm:$0xff]
    %v2428 = vld [vmem:[#allocation3 + $0xa0] sm:$0xff]
    %v2429 = vld [vmem:[#allocation3 + $0xa8] sm:$0xff]
    %v2430 = vld [vmem:[#allocation3 + $0xb0] sm:$0xff]
    %v2431 = vld [vmem:[#allocation3 + $0xb8] sm:$0xff]
    %v2432 = vld [vmem:[#allocation3 + $0xc0] sm:$0xff]
    %v2433 = vld [vmem:[#allocation3 + $0xc8] sm:$0xff]
    %v2434 = vld [vmem:[#allocation3 + $0xd0] sm:$0xff]
    %v2435 = vld [vmem:[#allocation3 + $0xd8] sm:$0xff]
    %v2436 = vld [vmem:[#allocation3 + $0xe0] sm:$0xff]
    %v2437 = vld [vmem:[#allocation3 + $0xe8] sm:$0xff]
    %v2438 = vld [vmem:[#allocation3 + $0xf0] sm:$0xff]
    %v2439 = vld [vmem:[#allocation3 + $0xf8] sm:$0xff]
    %v2440 = vld [vmem:[%s9] sm:$0x3]
    %v2441 = vpack.c.bf16 %v2310, %v2308
    %v2442 = vpack.c.bf16 %v2311, %v2309
    %v2443 = vpack.c.bf16 %v2314, %v2312
    %v2444 = vpack.c.bf16 %v2315, %v2313
    %v2445 = vpack.c.bf16 %v2318, %v2316
    %v2446 = vpack.c.bf16 %v2319, %v2317
    %v2447 = vpack.c.bf16 %v2322, %v2320
    %v2448 = vpack.c.bf16 %v2323, %v2321
    %v2449 = vpack.c.bf16 %v2326, %v2324
    %v2450 = vpack.c.bf16 %v2327, %v2325
    %v2451 = vpack.c.bf16 %v2330, %v2328
    %v2452 = vpack.c.bf16 %v2331, %v2329
    %v2453 = vpack.c.bf16 %v2334, %v2332
    %v2454 = vpack.c.bf16 %v2335, %v2333
    %v2455 = vpack.c.bf16 %v2338, %v2336
    %v2456 = vpack.c.bf16 %v2339, %v2337
    %v2457 = vpack.c.bf16 %v2342, %v2340
    %v2458 = vpack.c.bf16 %v2343, %v2341
    %v2459 = vpack.c.bf16 %v2346, %v2344
    %v2460 = vpack.c.bf16 %v2347, %v2345
    %v2461 = vpack.c.bf16 %v2350, %v2348
    %v2462 = vpack.c.bf16 %v2351, %v2349
    %v2463 = vpack.c.bf16 %v2354, %v2352
    %v2464 = vpack.c.bf16 %v2355, %v2353
    %v2465 = vpack.c.bf16 %v2358, %v2356
    %v2466 = vpack.c.bf16 %v2359, %v2357
    %v2467 = vpack.c.bf16 %v2362, %v2360
    %v2468 = vpack.c.bf16 %v2363, %v2361
    %v2469 = vpack.c.bf16 %v2366, %v2364
    %v2470 = vpack.c.bf16 %v2367, %v2365
    %v2471 = vpack.c.bf16 %v2368, %v2368
    %v2472 = vpack.c.bf16 %v2369, %v2369
    %v2474 = vsel %vm800, %v2471, 0
    %v2477 = vsel %vm800, %v2472, 0
    %2479 = vmatprep.subr.bf16.mxu0 %v2442
    %2480 = vmatpush1.bf16.msra.mxu0 %v2441
    %2481 = vmatprep.subr.bf16.mxu0 %v2444
    %2482 = vmatpush1.bf16.msra.mxu0 %v2443
    %2483 = vmatprep.subr.bf16.mxu0 %v2446
    %2484 = vmatpush1.bf16.msra.mxu0 %v2445
    %2485 = vmatprep.subr.bf16.mxu0 %v2448
    %2486 = vmatpush1.bf16.msra.mxu0 %v2447
    %2487 = vmatprep.subr.bf16.mxu0 %v2450
    %2488 = vmatpush1.bf16.msra.mxu0 %v2449
    %2489 = vmatprep.subr.bf16.mxu0 %v2452
    %2490 = vmatpush1.bf16.msra.mxu0 %v2451
    %2491 = vmatprep.subr.bf16.mxu0 %v2454
    %2492 = vmatpush1.bf16.msra.mxu0 %v2453
    %2493 = vmatprep.subr.bf16.mxu0 %v2456
    %2494 = vmatpush1.bf16.msra.mxu0 %v2455
    %2495 = vmatprep.subr.bf16.mxu0 %v2458
    %2496 = vmatpush1.bf16.msra.mxu0 %v2457
    %2497 = vmatprep.subr.bf16.mxu0 %v2460
    %2498 = vmatpush1.bf16.msra.mxu0 %v2459
    %2499 = vmatprep.subr.bf16.mxu0 %v2462
    %2500 = vmatpush1.bf16.msra.mxu0 %v2461
    %2501 = vmatprep.subr.bf16.mxu0 %v2464
    %2502 = vmatpush1.bf16.msra.mxu0 %v2463
    %2503 = vmatprep.subr.bf16.mxu0 %v2466
    %2504 = vmatpush1.bf16.msra.mxu0 %v2465
    %2505 = vmatprep.subr.bf16.mxu0 %v2468
    %2506 = vmatpush1.bf16.msra.mxu0 %v2467
    %2507 = vmatprep.subr.bf16.mxu0 %v2470
    %2508 = vmatpush1.bf16.msra.mxu0 %v2469
    %2509 = vmatprep.subr.bf16.mxu0 %v2477
    %2510 = vmatpush1.bf16.msra.mxu0 %v2474
    %2511 = vmatprep.mubr.bf16.mxu0 %v753
    %2512 = vmatmul.mubr.bf16.gmra.mrb[0].mxu0 %v703
    %v2513 = vpop.f32.mrb[0].mxu0
    %v2514 = vadd.f32 0.0, %v2513
    %v2515 = vpop.f32.mrb[0].mxu0
    %v2516 = vadd.f32 0.0, %v2515
    %v2517 = vpop.f32.mrb[0].mxu0
    %v2518 = vadd.f32 0.0, %v2517
    %v2519 = vpop.f32.mrb[0].mxu0
    %v2520 = vadd.f32 0.0, %v2519
    %2521 = vmatprep.mubr.bf16.mxu0 %v756
    %2522 = vmatmul.mubr.bf16.gmra.mrb[0].mxu0 %v705
    %v2523 = vpop.f32.mrb[0].mxu0
    %v2524 = vadd.f32 0.0, %v2523
    %v2525 = vpop.f32.mrb[0].mxu0
    %v2526 = vadd.f32 0.0, %v2525
    %v2527 = vpop.f32.mrb[0].mxu0
    %v2528 = vadd.f32 0.0, %v2527
    %v2529 = vpop.f32.mrb[0].mxu0
    %v2530 = vadd.f32 0.0, %v2529
    %2531 = vmatprep.mubr.bf16.mxu0 %v759
    %2532 = vmatmul.mubr.bf16.gmra.mrb[0].mxu0 %v707
    %v2533 = vpop.f32.mrb[0].mxu0
    %v2534 = vadd.f32 0.0, %v2533
    %v2535 = vpop.f32.mrb[0].mxu0
    %v2536 = vadd.f32 0.0, %v2535
    %v2537 = vpop.f32.mrb[0].mxu0
    %v2538 = vadd.f32 0.0, %v2537
    %v2539 = vpop.f32.mrb[0].mxu0
    %v2540 = vadd.f32 0.0, %v2539
    %2541 = vmatprep.mubr.bf16.mxu0 %v762
    %2542 = vmatmul.mubr.bf16.gmra.mrb[0].mxu0 %v709
    %v2543 = vpop.f32.mrb[0].mxu0
    %v2544 = vadd.f32 0.0, %v2543
    %v2545 = vpop.f32.mrb[0].mxu0
    %v2546 = vadd.f32 0.0, %v2545
    %v2547 = vpop.f32.mrb[0].mxu0
    %v2548 = vadd.f32 0.0, %v2547
    %v2549 = vpop.f32.mrb[0].mxu0
    %v2550 = vadd.f32 0.0, %v2549
    %2551 = vmatprep.mubr.bf16.mxu0 %v765
    %2552 = vmatmul.mubr.bf16.gmra.mrb[0].mxu0 %v711
    %v2553 = vpop.f32.mrb[0].mxu0
    %v2554 = vadd.f32 0.0, %v2553
    %v2555 = vpop.f32.mrb[0].mxu0
    %v2556 = vadd.f32 0.0, %v2555
    %v2557 = vpop.f32.mrb[0].mxu0
    %v2558 = vadd.f32 0.0, %v2557
    %v2559 = vpop.f32.mrb[0].mxu0
    %v2560 = vadd.f32 0.0, %v2559
    %2561 = vmatprep.mubr.bf16.mxu0 %v768
    %2562 = vmatmul.mubr.bf16.gmra.mrb[0].mxu0 %v713
    %v2563 = vpop.f32.mrb[0].mxu0
    %v2564 = vadd.f32 0.0, %v2563
    %v2565 = vpop.f32.mrb[0].mxu0
    %v2566 = vadd.f32 0.0, %v2565
    %v2567 = vpop.f32.mrb[0].mxu0
    %v2568 = vadd.f32 0.0, %v2567
    %v2569 = vpop.f32.mrb[0].mxu0
    %v2570 = vadd.f32 0.0, %v2569
    %2571 = vmatprep.mubr.bf16.mxu0 %v771
    %2572 = vmatmul.mubr.bf16.gmra.mrb[0].mxu0 %v715
    %v2573 = vpop.f32.mrb[0].mxu0
    %v2574 = vadd.f32 0.0, %v2573
    %v2575 = vpop.f32.mrb[0].mxu0
    %v2576 = vadd.f32 0.0, %v2575
    %v2577 = vpop.f32.mrb[0].mxu0
    %v2578 = vadd.f32 0.0, %v2577
    %v2579 = vpop.f32.mrb[0].mxu0
    %v2580 = vadd.f32 0.0, %v2579
    %2581 = vmatprep.mubr.bf16.mxu0 %v774
    %2582 = vmatmul.mubr.bf16.gmra.mrb[0].mxu0 %v717
    %v2583 = vpop.f32.mrb[0].mxu0
    %v2584 = vadd.f32 0.0, %v2583
    %v2585 = vpop.f32.mrb[0].mxu0
    %v2586 = vadd.f32 0.0, %v2585
    %v2587 = vpop.f32.mrb[0].mxu0
    %v2588 = vadd.f32 0.0, %v2587
    %v2589 = vpop.f32.mrb[0].mxu0
    %v2590 = vadd.f32 0.0, %v2589
    %2591 = vmatprep.mubr.bf16.mxu0 %v777
    %2592 = vmatmul.mubr.bf16.gmra.mrb[0].mxu0 %v719
    %v2593 = vpop.f32.mrb[0].mxu0
    %v2594 = vadd.f32 0.0, %v2593
    %v2595 = vpop.f32.mrb[0].mxu0
    %v2596 = vadd.f32 0.0, %v2595
    %v2597 = vpop.f32.mrb[0].mxu0
    %v2598 = vadd.f32 0.0, %v2597
    %v2599 = vpop.f32.mrb[0].mxu0
    %v2600 = vadd.f32 0.0, %v2599
    %2601 = vmatprep.mubr.bf16.mxu0 %v780
    %2602 = vmatmul.mubr.bf16.gmra.mrb[0].mxu0 %v721
    %v2603 = vpop.f32.mrb[0].mxu0
    %v2604 = vadd.f32 0.0, %v2603
    %v2605 = vpop.f32.mrb[0].mxu0
    %v2606 = vadd.f32 0.0, %v2605
    %v2607 = vpop.f32.mrb[0].mxu0
    %v2608 = vadd.f32 0.0, %v2607
    %v2609 = vpop.f32.mrb[0].mxu0
    %v2610 = vadd.f32 0.0, %v2609
    %2611 = vmatprep.mubr.bf16.mxu0 %v783
    %2612 = vmatmul.mubr.bf16.gmra.mrb[0].mxu0 %v723
    %v2613 = vpop.f32.mrb[0].mxu0
    %v2614 = vadd.f32 0.0, %v2613
    %v2615 = vpop.f32.mrb[0].mxu0
    %v2616 = vadd.f32 0.0, %v2615
    %v2617 = vpop.f32.mrb[0].mxu0
    %v2618 = vadd.f32 0.0, %v2617
    %v2619 = vpop.f32.mrb[0].mxu0
    %v2620 = vadd.f32 0.0, %v2619
    %2621 = vmatprep.mubr.bf16.mxu0 %v786
    %2622 = vmatmul.mubr.bf16.gmra.mrb[0].mxu0 %v725
    %v2623 = vpop.f32.mrb[0].mxu0
    %v2624 = vadd.f32 0.0, %v2623
    %v2625 = vpop.f32.mrb[0].mxu0
    %v2626 = vadd.f32 0.0, %v2625
    %v2627 = vpop.f32.mrb[0].mxu0
    %v2628 = vadd.f32 0.0, %v2627
    %v2629 = vpop.f32.mrb[0].mxu0
    %v2630 = vadd.f32 0.0, %v2629
    %2631 = vmatprep.mubr.bf16.mxu0 %v789
    %2632 = vmatmul.mubr.bf16.gmra.mrb[0].mxu0 %v727
    %v2633 = vpop.f32.mrb[0].mxu0
    %v2634 = vadd.f32 0.0, %v2633
    %v2635 = vpop.f32.mrb[0].mxu0
    %v2636 = vadd.f32 0.0, %v2635
    %v2637 = vpop.f32.mrb[0].mxu0
    %v2638 = vadd.f32 0.0, %v2637
    %v2639 = vpop.f32.mrb[0].mxu0
    %v2640 = vadd.f32 0.0, %v2639
    %2641 = vmatprep.mubr.bf16.mxu0 %v792
    %2642 = vmatmul.mubr.bf16.gmra.mrb[0].mxu0 %v729
    %v2643 = vpop.f32.mrb[0].mxu0
    %v2644 = vadd.f32 0.0, %v2643
    %v2645 = vpop.f32.mrb[0].mxu0
    %v2646 = vadd.f32 0.0, %v2645
    %v2647 = vpop.f32.mrb[0].mxu0
    %v2648 = vadd.f32 0.0, %v2647
    %v2649 = vpop.f32.mrb[0].mxu0
    %v2650 = vadd.f32 0.0, %v2649
    %2651 = vmatprep.mubr.bf16.mxu0 %v795
    %2652 = vmatmul.mubr.bf16.gmra.mrb[0].mxu0 %v731
    %v2653 = vpop.f32.mrb[0].mxu0
    %v2654 = vadd.f32 0.0, %v2653
    %v2655 = vpop.f32.mrb[0].mxu0
    %v2656 = vadd.f32 0.0, %v2655
    %v2657 = vpop.f32.mrb[0].mxu0
    %v2658 = vadd.f32 0.0, %v2657
    %v2659 = vpop.f32.mrb[0].mxu0
    %v2660 = vadd.f32 0.0, %v2659
    %2661 = vmatprep.mubr.bf16.mxu0 %v798
    %2662 = vmatmul.mubr.bf16.gmra.mrb[0].mxu0 %v733
    %v2663 = vpop.f32.mrb[0].mxu0
    %v2664 = vadd.f32 0.0, %v2663
    %v2665 = vpop.f32.mrb[0].mxu0
    %v2666 = vadd.f32 0.0, %v2665
    %v2667 = vpop.f32.mrb[0].mxu0
    %v2668 = vpop.f32.mrb[0].mxu0
    %2669 = vdwg.mxu0
    %v2670 = vpack.c.bf16 %v2518, %v2514
    %v2671 = vpack.c.bf16 %v2520, %v2516
    %v2672 = vpack.c.bf16 %v2528, %v2524
    %v2673 = vpack.c.bf16 %v2530, %v2526
    %v2674 = vpack.c.bf16 %v2538, %v2534
    %v2675 = vpack.c.bf16 %v2540, %v2536
    %v2676 = vpack.c.bf16 %v2548, %v2544
    %v2677 = vpack.c.bf16 %v2550, %v2546
    %v2678 = vpack.c.bf16 %v2558, %v2554
    %v2679 = vpack.c.bf16 %v2560, %v2556
    %v2680 = vpack.c.bf16 %v2568, %v2564
    %v2681 = vpack.c.bf16 %v2570, %v2566
    %v2682 = vpack.c.bf16 %v2578, %v2574
    %v2683 = vpack.c.bf16 %v2580, %v2576
    %v2684 = vpack.c.bf16 %v2588, %v2584
    %v2685 = vpack.c.bf16 %v2590, %v2586
    %v2686 = vpack.c.bf16 %v2598, %v2594
    %v2687 = vpack.c.bf16 %v2600, %v2596
    %v2688 = vpack.c.bf16 %v2608, %v2604
    %v2689 = vpack.c.bf16 %v2610, %v2606
    %v2690 = vpack.c.bf16 %v2618, %v2614
    %v2691 = vpack.c.bf16 %v2620, %v2616
    %v2692 = vpack.c.bf16 %v2628, %v2624
    %v2693 = vpack.c.bf16 %v2630, %v2626
    %v2694 = vpack.c.bf16 %v2638, %v2634
    %v2695 = vpack.c.bf16 %v2640, %v2636
    %v2696 = vpack.c.bf16 %v2648, %v2644
    %v2697 = vpack.c.bf16 %v2650, %v2646
    %v2698 = vpack.c.bf16 %v2658, %v2654
    %v2699 = vpack.c.bf16 %v2660, %v2656
    %v2700 = vpack.c.bf16 %v2664, %v2664
    %v2701 = vpack.c.bf16 %v2666, %v2666
    %2702 = vmatprep.subr.bf16.mxu0 %v2409
    %2703 = vmatpush1.bf16.msra.mxu0 %v2408
    %2704 = vmatprep.subr.bf16.mxu0 %v2411
    %2705 = vmatpush1.bf16.msra.mxu0 %v2410
    %2706 = vmatprep.subr.bf16.mxu0 %v2413
    %2707 = vmatpush1.bf16.msra.mxu0 %v2412
    %2708 = vmatprep.subr.bf16.mxu0 %v2415
    %2709 = vmatpush1.bf16.msra.mxu0 %v2414
    %2710 = vmatprep.subr.bf16.mxu0 %v2417
    %2711 = vmatpush1.bf16.msra.mxu0 %v2416
    %2712 = vmatprep.subr.bf16.mxu0 %v2419
    %2713 = vmatpush1.bf16.msra.mxu0 %v2418
    %2714 = vmatprep.subr.bf16.mxu0 %v2421
    %2715 = vmatpush1.bf16.msra.mxu0 %v2420
    %2716 = vmatprep.subr.bf16.mxu0 %v2423
    %2717 = vmatpush1.bf16.msra.mxu0 %v2422
    %2718 = vmatprep.subr.bf16.mxu0 %v2425
    %2719 = vmatpush1.bf16.msra.mxu0 %v2424
    %2720 = vmatprep.subr.bf16.mxu0 %v2427
    %2721 = vmatpush1.bf16.msra.mxu0 %v2426
    %2722 = vmatprep.subr.bf16.mxu0 %v2429
    %2723 = vmatpush1.bf16.msra.mxu0 %v2428
    %2724 = vmatprep.subr.bf16.mxu0 %v2431
    %2725 = vmatpush1.bf16.msra.mxu0 %v2430
    %2726 = vmatprep.subr.bf16.mxu0 %v2433
    %2727 = vmatpush1.bf16.msra.mxu0 %v2432
    %2728 = vmatprep.subr.bf16.mxu0 %v2435
    %2729 = vmatpush1.bf16.msra.mxu0 %v2434
    %2730 = vmatprep.subr.bf16.mxu0 %v2437
    %2731 = vmatpush1.bf16.msra.mxu0 %v2436
    %2732 = vmatprep.subr.bf16.mxu0 %v2439
    %2733 = vmatpush1.bf16.msra.mxu0 %v2438
    %2734 = vmatprep.mubr.bf16.mxu0 %v2671
    %2735 = vmatmul.mubr.bf16.gmra.mrb[0].mxu0 %v2670
    %v2736 = vpop.f32.mrb[0].mxu0
    %v2737 = vadd.f32 0.0, %v2736
    %v2738 = vpop.f32.mrb[0].mxu0
    %v2739 = vadd.f32 0.0, %v2738
    %v2740 = vpop.f32.mrb[0].mxu0
    %v2741 = vadd.f32 0.0, %v2740
    %v2742 = vpop.f32.mrb[0].mxu0
    %v2743 = vadd.f32 0.0, %v2742
    %2744 = vmatprep.mubr.bf16.mxu0 %v2673
    %2745 = vmatmul.mubr.bf16.gmra.mrb[0].mxu0 %v2672
    %v2746 = vpop.f32.mrb[0].mxu0
    %v2747 = vadd.f32 0.0, %v2746
    %v2748 = vpop.f32.mrb[0].mxu0
    %v2749 = vadd.f32 0.0, %v2748
    %v2750 = vpop.f32.mrb[0].mxu0
    %v2751 = vadd.f32 0.0, %v2750
    %v2752 = vpop.f32.mrb[0].mxu0
    %v2753 = vadd.f32 0.0, %v2752
    %2754 = vmatprep.mubr.bf16.mxu0 %v2675
    %2755 = vmatmul.mubr.bf16.gmra.mrb[0].mxu0 %v2674
    %v2756 = vpop.f32.mrb[0].mxu0
    %v2757 = vadd.f32 0.0, %v2756
    %v2758 = vpop.f32.mrb[0].mxu0
    %v2759 = vadd.f32 0.0, %v2758
    %v2760 = vpop.f32.mrb[0].mxu0
    %v2761 = vadd.f32 0.0, %v2760
    %v2762 = vpop.f32.mrb[0].mxu0
    %v2763 = vadd.f32 0.0, %v2762
    %2764 = vmatprep.mubr.bf16.mxu0 %v2677
    %2765 = vmatmul.mubr.bf16.gmra.mrb[0].mxu0 %v2676
    %v2766 = vpop.f32.mrb[0].mxu0
    %v2767 = vadd.f32 0.0, %v2766
    %v2768 = vpop.f32.mrb[0].mxu0
    %v2769 = vadd.f32 0.0, %v2768
    %v2770 = vpop.f32.mrb[0].mxu0
    %v2771 = vadd.f32 0.0, %v2770
    %v2772 = vpop.f32.mrb[0].mxu0
    %v2773 = vadd.f32 0.0, %v2772
    %2774 = vmatprep.mubr.bf16.mxu0 %v2679
    %2775 = vmatmul.mubr.bf16.gmra.mrb[0].mxu0 %v2678
    %v2776 = vpop.f32.mrb[0].mxu0
    %v2777 = vadd.f32 0.0, %v2776
    %v2778 = vpop.f32.mrb[0].mxu0
    %v2779 = vadd.f32 0.0, %v2778
    %v2780 = vpop.f32.mrb[0].mxu0
    %v2781 = vadd.f32 0.0, %v2780
    %v2782 = vpop.f32.mrb[0].mxu0
    %v2783 = vadd.f32 0.0, %v2782
    %2784 = vmatprep.mubr.bf16.mxu0 %v2681
    %2785 = vmatmul.mubr.bf16.gmra.mrb[0].mxu0 %v2680
    %v2786 = vpop.f32.mrb[0].mxu0
    %v2787 = vadd.f32 0.0, %v2786
    %v2788 = vpop.f32.mrb[0].mxu0
    %v2789 = vadd.f32 0.0, %v2788
    %v2790 = vpop.f32.mrb[0].mxu0
    %v2791 = vadd.f32 0.0, %v2790
    %v2792 = vpop.f32.mrb[0].mxu0
    %v2793 = vadd.f32 0.0, %v2792
    %2794 = vmatprep.mubr.bf16.mxu0 %v2683
    %2795 = vmatmul.mubr.bf16.gmra.mrb[0].mxu0 %v2682
    %v2796 = vpop.f32.mrb[0].mxu0
    %v2797 = vadd.f32 0.0, %v2796
    %v2798 = vpop.f32.mrb[0].mxu0
    %v2799 = vadd.f32 0.0, %v2798
    %v2800 = vpop.f32.mrb[0].mxu0
    %v2801 = vadd.f32 0.0, %v2800
    %v2802 = vpop.f32.mrb[0].mxu0
    %v2803 = vadd.f32 0.0, %v2802
    %2804 = vmatprep.mubr.bf16.mxu0 %v2685
    %2805 = vmatmul.mubr.bf16.gmra.mrb[0].mxu0 %v2684
    %v2806 = vpop.f32.mrb[0].mxu0
    %v2807 = vadd.f32 0.0, %v2806
    %v2808 = vpop.f32.mrb[0].mxu0
    %v2809 = vadd.f32 0.0, %v2808
    %v2810 = vpop.f32.mrb[0].mxu0
    %v2811 = vadd.f32 0.0, %v2810
    %v2812 = vpop.f32.mrb[0].mxu0
    %v2813 = vadd.f32 0.0, %v2812
    %2814 = vmatprep.mubr.bf16.mxu0 %v2687
    %2815 = vmatmul.mubr.bf16.gmra.mrb[0].mxu0 %v2686
    %v2816 = vpop.f32.mrb[0].mxu0
    %v2817 = vadd.f32 0.0, %v2816
    %v2818 = vpop.f32.mrb[0].mxu0
    %v2819 = vadd.f32 0.0, %v2818
    %v2820 = vpop.f32.mrb[0].mxu0
    %v2821 = vadd.f32 0.0, %v2820
    %v2822 = vpop.f32.mrb[0].mxu0
    %v2823 = vadd.f32 0.0, %v2822
    %2824 = vmatprep.mubr.bf16.mxu0 %v2689
    %2825 = vmatmul.mubr.bf16.gmra.mrb[0].mxu0 %v2688
    %v2826 = vpop.f32.mrb[0].mxu0
    %v2827 = vadd.f32 0.0, %v2826
    %v2828 = vpop.f32.mrb[0].mxu0
    %v2829 = vadd.f32 0.0, %v2828
    %v2830 = vpop.f32.mrb[0].mxu0
    %v2831 = vadd.f32 0.0, %v2830
    %v2832 = vpop.f32.mrb[0].mxu0
    %v2833 = vadd.f32 0.0, %v2832
    %2834 = vmatprep.mubr.bf16.mxu0 %v2691
    %2835 = vmatmul.mubr.bf16.gmra.mrb[0].mxu0 %v2690
    %v2836 = vpop.f32.mrb[0].mxu0
    %v2837 = vadd.f32 0.0, %v2836
    %v2838 = vpop.f32.mrb[0].mxu0
    %v2839 = vadd.f32 0.0, %v2838
    %v2840 = vpop.f32.mrb[0].mxu0
    %v2841 = vadd.f32 0.0, %v2840
    %v2842 = vpop.f32.mrb[0].mxu0
    %v2843 = vadd.f32 0.0, %v2842
    %2844 = vmatprep.mubr.bf16.mxu0 %v2693
    %2845 = vmatmul.mubr.bf16.gmra.mrb[0].mxu0 %v2692
    %v2846 = vpop.f32.mrb[0].mxu0
    %v2847 = vadd.f32 0.0, %v2846
    %v2848 = vpop.f32.mrb[0].mxu0
    %v2849 = vadd.f32 0.0, %v2848
    %v2850 = vpop.f32.mrb[0].mxu0
    %v2851 = vadd.f32 0.0, %v2850
    %v2852 = vpop.f32.mrb[0].mxu0
    %v2853 = vadd.f32 0.0, %v2852
    %2854 = vmatprep.mubr.bf16.mxu0 %v2695
    %2855 = vmatmul.mubr.bf16.gmra.mrb[0].mxu0 %v2694
    %v2856 = vpop.f32.mrb[0].mxu0
    %v2857 = vadd.f32 0.0, %v2856
    %v2858 = vpop.f32.mrb[0].mxu0
    %v2859 = vadd.f32 0.0, %v2858
    %v2860 = vpop.f32.mrb[0].mxu0
    %v2861 = vadd.f32 0.0, %v2860
    %v2862 = vpop.f32.mrb[0].mxu0
    %v2863 = vadd.f32 0.0, %v2862
    %2864 = vmatprep.mubr.bf16.mxu0 %v2697
    %2865 = vmatmul.mubr.bf16.gmra.mrb[0].mxu0 %v2696
    %v2866 = vpop.f32.mrb[0].mxu0
    %v2867 = vadd.f32 0.0, %v2866
    %v2868 = vpop.f32.mrb[0].mxu0
    %v2869 = vadd.f32 0.0, %v2868
    %v2870 = vpop.f32.mrb[0].mxu0
    %v2871 = vadd.f32 0.0, %v2870
    %v2872 = vpop.f32.mrb[0].mxu0
    %v2873 = vadd.f32 0.0, %v2872
    %2874 = vmatprep.mubr.bf16.mxu0 %v2699
    %2875 = vmatmul.mubr.bf16.gmra.mrb[0].mxu0 %v2698
    %v2876 = vpop.f32.mrb[0].mxu0
    %v2877 = vadd.f32 0.0, %v2876
    %v2878 = vpop.f32.mrb[0].mxu0
    %v2879 = vadd.f32 0.0, %v2878
    %v2880 = vpop.f32.mrb[0].mxu0
    %v2881 = vadd.f32 0.0, %v2880
    %v2882 = vpop.f32.mrb[0].mxu0
    %v2883 = vadd.f32 0.0, %v2882
    %2884 = vmatprep.mubr.bf16.mxu0 %v2701
    %2885 = vmatmul.mubr.bf16.gmra.mrb[0].mxu0 %v2700
    %v2886 = vpop.f32.mrb[0].mxu0
    %v2887 = vadd.f32 0.0, %v2886
    %v2888 = vpop.f32.mrb[0].mxu0
    %v2889 = vadd.f32 0.0, %v2888
    %v2890 = vpop.f32.mrb[0].mxu0
    %v2891 = vpop.f32.mrb[0].mxu0
    %2892 = vdwg.mxu0
    %2893 = vmatprep.subr.bf16.mxu0 %v2377
    %2894 = vmatpush1.bf16.msra.mxu0 %v2376
    %2895 = vmatprep.subr.bf16.mxu0 %v2379
    %2896 = vmatpush1.bf16.msra.mxu0 %v2378
    %2897 = vmatprep.subr.bf16.mxu0 %v2381
    %2898 = vmatpush1.bf16.msra.mxu0 %v2380
    %2899 = vmatprep.subr.bf16.mxu0 %v2383
    %2900 = vmatpush1.bf16.msra.mxu0 %v2382
    %2901 = vmatprep.subr.bf16.mxu0 %v2385
    %2902 = vmatpush1.bf16.msra.mxu0 %v2384
    %2903 = vmatprep.subr.bf16.mxu0 %v2387
    %2904 = vmatpush1.bf16.msra.mxu0 %v2386
    %2905 = vmatprep.subr.bf16.mxu0 %v2389
    %2906 = vmatpush1.bf16.msra.mxu0 %v2388
    %2907 = vmatprep.subr.bf16.mxu0 %v2391
    %2908 = vmatpush1.bf16.msra.mxu0 %v2390
    %2909 = vmatprep.subr.bf16.mxu0 %v2393
    %2910 = vmatpush1.bf16.msra.mxu0 %v2392
    %2911 = vmatprep.subr.bf16.mxu0 %v2395
    %2912 = vmatpush1.bf16.msra.mxu0 %v2394
    %2913 = vmatprep.subr.bf16.mxu0 %v2397
    %2914 = vmatpush1.bf16.msra.mxu0 %v2396
    %2915 = vmatprep.subr.bf16.mxu0 %v2399
    %2916 = vmatpush1.bf16.msra.mxu0 %v2398
    %2917 = vmatprep.subr.bf16.mxu0 %v2401
    %2918 = vmatpush1.bf16.msra.mxu0 %v2400
    %2919 = vmatprep.subr.bf16.mxu0 %v2403
    %2920 = vmatpush1.bf16.msra.mxu0 %v2402
    %2921 = vmatprep.subr.bf16.mxu0 %v2405
    %2922 = vmatpush1.bf16.msra.mxu0 %v2404
    %2923 = vmatprep.subr.bf16.mxu0 %v2407
    %2924 = vmatpush1.bf16.msra.mxu0 %v2406
    %2925 = vmatprep.mubr.bf16.mxu0 %v2442
    %2926 = vmatmul.mubr.bf16.gmra.mrb[0].mxu0 %v2441
    %v2927 = vpop.f32.mrb[0].mxu0
    %v2928 = vadd.f32 %v2737, %v2927
    %v2929 = vpop.f32.mrb[0].mxu0
    %v2930 = vadd.f32 %v2739, %v2929
    %v2931 = vpop.f32.mrb[0].mxu0
    %v2932 = vadd.f32 %v2741, %v2931
    %v2933 = vpop.f32.mrb[0].mxu0
    %v2934 = vadd.f32 %v2743, %v2933
    %2935 = vmatprep.mubr.bf16.mxu0 %v2444
    %2936 = vmatmul.mubr.bf16.gmra.mrb[0].mxu0 %v2443
    %v2937 = vpop.f32.mrb[0].mxu0
    %v2938 = vadd.f32 %v2747, %v2937
    %v2939 = vpop.f32.mrb[0].mxu0
    %v2940 = vadd.f32 %v2749, %v2939
    %v2941 = vpop.f32.mrb[0].mxu0
    %v2942 = vadd.f32 %v2751, %v2941
    %v2943 = vpop.f32.mrb[0].mxu0
    %v2944 = vadd.f32 %v2753, %v2943
    %2945 = vmatprep.mubr.bf16.mxu0 %v2446
    %2946 = vmatmul.mubr.bf16.gmra.mrb[0].mxu0 %v2445
    %v2947 = vpop.f32.mrb[0].mxu0
    %v2948 = vadd.f32 %v2757, %v2947
    %v2949 = vpop.f32.mrb[0].mxu0
    %v2950 = vadd.f32 %v2759, %v2949
    %v2951 = vpop.f32.mrb[0].mxu0
    %v2952 = vadd.f32 %v2761, %v2951
    %v2953 = vpop.f32.mrb[0].mxu0
    %v2954 = vadd.f32 %v2763, %v2953
    %2955 = vmatprep.mubr.bf16.mxu0 %v2448
    %2956 = vmatmul.mubr.bf16.gmra.mrb[0].mxu0 %v2447
    %v2957 = vpop.f32.mrb[0].mxu0
    %v2958 = vadd.f32 %v2767, %v2957
    %v2959 = vpop.f32.mrb[0].mxu0
    %v2960 = vadd.f32 %v2769, %v2959
    %v2961 = vpop.f32.mrb[0].mxu0
    %v2962 = vadd.f32 %v2771, %v2961
    %v2963 = vpop.f32.mrb[0].mxu0
    %v2964 = vadd.f32 %v2773, %v2963
    %2965 = vmatprep.mubr.bf16.mxu0 %v2450
    %2966 = vmatmul.mubr.bf16.gmra.mrb[0].mxu0 %v2449
    %v2967 = vpop.f32.mrb[0].mxu0
    %v2968 = vadd.f32 %v2777, %v2967
    %v2969 = vpop.f32.mrb[0].mxu0
    %v2970 = vadd.f32 %v2779, %v2969
    %v2971 = vpop.f32.mrb[0].mxu0
    %v2972 = vadd.f32 %v2781, %v2971
    %v2973 = vpop.f32.mrb[0].mxu0
    %v2974 = vadd.f32 %v2783, %v2973
    %2975 = vmatprep.mubr.bf16.mxu0 %v2452
    %2976 = vmatmul.mubr.bf16.gmra.mrb[0].mxu0 %v2451
    %v2977 = vpop.f32.mrb[0].mxu0
    %v2978 = vadd.f32 %v2787, %v2977
    %v2979 = vpop.f32.mrb[0].mxu0
    %v2980 = vadd.f32 %v2789, %v2979
    %v2981 = vpop.f32.mrb[0].mxu0
    %v2982 = vadd.f32 %v2791, %v2981
    %v2983 = vpop.f32.mrb[0].mxu0
    %v2984 = vadd.f32 %v2793, %v2983
    %2985 = vmatprep.mubr.bf16.mxu0 %v2454
    %2986 = vmatmul.mubr.bf16.gmra.mrb[0].mxu0 %v2453
    %v2987 = vpop.f32.mrb[0].mxu0
    %v2988 = vadd.f32 %v2797, %v2987
    %v2989 = vpop.f32.mrb[0].mxu0
    %v2990 = vadd.f32 %v2799, %v2989
    %v2991 = vpop.f32.mrb[0].mxu0
    %v2992 = vadd.f32 %v2801, %v2991
    %v2993 = vpop.f32.mrb[0].mxu0
    %v2994 = vadd.f32 %v2803, %v2993
    %2995 = vmatprep.mubr.bf16.mxu0 %v2456
    %2996 = vmatmul.mubr.bf16.gmra.mrb[0].mxu0 %v2455
    %v2997 = vpop.f32.mrb[0].mxu0
    %v2998 = vadd.f32 %v2807, %v2997
    %v2999 = vpop.f32.mrb[0].mxu0
    %v3000 = vadd.f32 %v2809, %v2999
    %v3001 = vpop.f32.mrb[0].mxu0
    %v3002 = vadd.f32 %v2811, %v3001
    %v3003 = vpop.f32.mrb[0].mxu0
    %v3004 = vadd.f32 %v2813, %v3003
    %3005 = vmatprep.mubr.bf16.mxu0 %v2458
    %3006 = vmatmul.mubr.bf16.gmra.mrb[0].mxu0 %v2457
    %v3007 = vpop.f32.mrb[0].mxu0
    %v3008 = vadd.f32 %v2817, %v3007
    %v3009 = vpop.f32.mrb[0].mxu0
    %v3010 = vadd.f32 %v2819, %v3009
    %v3011 = vpop.f32.mrb[0].mxu0
    %v3012 = vadd.f32 %v2821, %v3011
    %v3013 = vpop.f32.mrb[0].mxu0
    %v3014 = vadd.f32 %v2823, %v3013
    %3015 = vmatprep.mubr.bf16.mxu0 %v2460
    %3016 = vmatmul.mubr.bf16.gmra.mrb[0].mxu0 %v2459
    %v3017 = vpop.f32.mrb[0].mxu0
    %v3018 = vadd.f32 %v2827, %v3017
    %v3019 = vpop.f32.mrb[0].mxu0
    %v3020 = vadd.f32 %v2829, %v3019
    %v3021 = vpop.f32.mrb[0].mxu0
    %v3022 = vadd.f32 %v2831, %v3021
    %v3023 = vpop.f32.mrb[0].mxu0
    %v3024 = vadd.f32 %v2833, %v3023
    %3025 = vmatprep.mubr.bf16.mxu0 %v2462
    %3026 = vmatmul.mubr.bf16.gmra.mrb[0].mxu0 %v2461
    %v3027 = vpop.f32.mrb[0].mxu0
    %v3028 = vadd.f32 %v2837, %v3027
    %v3029 = vpop.f32.mrb[0].mxu0
    %v3030 = vadd.f32 %v2839, %v3029
    %v3031 = vpop.f32.mrb[0].mxu0
    %v3032 = vadd.f32 %v2841, %v3031
    %v3033 = vpop.f32.mrb[0].mxu0
    %v3034 = vadd.f32 %v2843, %v3033
    %3035 = vmatprep.mubr.bf16.mxu0 %v2464
    %3036 = vmatmul.mubr.bf16.gmra.mrb[0].mxu0 %v2463
    %v3037 = vpop.f32.mrb[0].mxu0
    %v3038 = vadd.f32 %v2847, %v3037
    %v3039 = vpop.f32.mrb[0].mxu0
    %v3040 = vadd.f32 %v2849, %v3039
    %v3041 = vpop.f32.mrb[0].mxu0
    %v3042 = vadd.f32 %v2851, %v3041
    %v3043 = vpop.f32.mrb[0].mxu0
    %v3044 = vadd.f32 %v2853, %v3043
    %3045 = vmatprep.mubr.bf16.mxu0 %v2466
    %3046 = vmatmul.mubr.bf16.gmra.mrb[0].mxu0 %v2465
    %v3047 = vpop.f32.mrb[0].mxu0
    %v3048 = vadd.f32 %v2857, %v3047
    %v3049 = vpop.f32.mrb[0].mxu0
    %v3050 = vadd.f32 %v2859, %v3049
    %v3051 = vpop.f32.mrb[0].mxu0
    %v3052 = vadd.f32 %v2861, %v3051
    %v3053 = vpop.f32.mrb[0].mxu0
    %v3054 = vadd.f32 %v2863, %v3053
    %3055 = vmatprep.mubr.bf16.mxu0 %v2468
    %3056 = vmatmul.mubr.bf16.gmra.mrb[0].mxu0 %v2467
    %v3057 = vpop.f32.mrb[0].mxu0
    %v3058 = vadd.f32 %v2867, %v3057
    %v3059 = vpop.f32.mrb[0].mxu0
    %v3060 = vadd.f32 %v2869, %v3059
    %v3061 = vpop.f32.mrb[0].mxu0
    %v3062 = vadd.f32 %v2871, %v3061
    %v3063 = vpop.f32.mrb[0].mxu0
    %v3064 = vadd.f32 %v2873, %v3063
    %3065 = vmatprep.mubr.bf16.mxu0 %v2470
    %3066 = vmatmul.mubr.bf16.gmra.mrb[0].mxu0 %v2469
    %v3067 = vpop.f32.mrb[0].mxu0
    %v3068 = vadd.f32 %v2877, %v3067
    %v3069 = vpop.f32.mrb[0].mxu0
    %v3070 = vadd.f32 %v2879, %v3069
    %v3071 = vpop.f32.mrb[0].mxu0
    %v3072 = vadd.f32 %v2881, %v3071
    %v3073 = vpop.f32.mrb[0].mxu0
    %v3074 = vadd.f32 %v2883, %v3073
    %3075 = vmatprep.mubr.bf16.mxu0 %v2472
    %3076 = vmatmul.mubr.bf16.gmra.mrb[0].mxu0 %v2471
    %v3077 = vpop.f32.mrb[0].mxu0
    %v3078 = vadd.f32 %v2887, %v3077
    %v3079 = vpop.f32.mrb[0].mxu0
    %v3080 = vadd.f32 %v2889, %v3079
    %v3081 = vpop.f32.mrb[0].mxu0
    %v3082 = vpop.f32.mrb[0].mxu0
    %3083 = vdwg.mxu0
    %v3085 = vlaneseq
    %v3086 = vshrl.u32 %v3085, 7
    %v3087 = vsub.s32 0, %v3086
    %v3088 = vrot.slane %v2440, %v3087
    %v3089 = vlaneseq
    %v3090 = vshrl.u32 %v3089, 7
    %v3091 = vsub.s32 1, %v3090
    %v3092 = vrot.slane %v2440, %v3091
    %v3095 = vadd.f32 %v2928, %v3088
    %v3096 = vadd.f32 %v2930, %v3092
    %v3097 = vadd.f32 %v2932, %v3088
    %v3098 = vadd.f32 %v2934, %v3092
    %v3099 = vadd.f32 %v2938, %v3088
    %v3100 = vadd.f32 %v2940, %v3092
    %v3101 = vadd.f32 %v2942, %v3088
    %v3102 = vadd.f32 %v2944, %v3092
    %v3103 = vadd.f32 %v2948, %v3088
    %v3104 = vadd.f32 %v2950, %v3092
    %v3105 = vadd.f32 %v2952, %v3088
    %v3106 = vadd.f32 %v2954, %v3092
    %v3107 = vadd.f32 %v2958, %v3088
    %v3108 = vadd.f32 %v2960, %v3092
    %v3109 = vadd.f32 %v2962, %v3088
    %v3110 = vadd.f32 %v2964, %v3092
    %v3111 = vadd.f32 %v2968, %v3088
    %v3112 = vadd.f32 %v2970, %v3092
    %v3113 = vadd.f32 %v2972, %v3088
    %v3114 = vadd.f32 %v2974, %v3092
    %v3115 = vadd.f32 %v2978, %v3088
    %v3116 = vadd.f32 %v2980, %v3092
    %v3117 = vadd.f32 %v2982, %v3088
    %v3118 = vadd.f32 %v2984, %v3092
    %v3119 = vadd.f32 %v2988, %v3088
    %v3120 = vadd.f32 %v2990, %v3092
    %v3121 = vadd.f32 %v2992, %v3088
    %v3122 = vadd.f32 %v2994, %v3092
    %v3123 = vadd.f32 %v2998, %v3088
    %v3124 = vadd.f32 %v3000, %v3092
    %v3125 = vadd.f32 %v3002, %v3088
    %v3126 = vadd.f32 %v3004, %v3092
    %v3127 = vadd.f32 %v3008, %v3088
    %v3128 = vadd.f32 %v3010, %v3092
    %v3129 = vadd.f32 %v3012, %v3088
    %v3130 = vadd.f32 %v3014, %v3092
    %v3131 = vadd.f32 %v3018, %v3088
    %v3132 = vadd.f32 %v3020, %v3092
    %v3133 = vadd.f32 %v3022, %v3088
    %v3134 = vadd.f32 %v3024, %v3092
    %v3135 = vadd.f32 %v3028, %v3088
    %v3136 = vadd.f32 %v3030, %v3092
    %v3137 = vadd.f32 %v3032, %v3088
    %v3138 = vadd.f32 %v3034, %v3092
    %v3139 = vadd.f32 %v3038, %v3088
    %v3140 = vadd.f32 %v3040, %v3092
    %v3141 = vadd.f32 %v3042, %v3088
    %v3142 = vadd.f32 %v3044, %v3092
    %v3143 = vadd.f32 %v3048, %v3088
    %v3144 = vadd.f32 %v3050, %v3092
    %v3145 = vadd.f32 %v3052, %v3088
    %v3146 = vadd.f32 %v3054, %v3092
    %v3147 = vadd.f32 %v3058, %v3088
    %v3148 = vadd.f32 %v3060, %v3092
    %v3149 = vadd.f32 %v3062, %v3088
    %v3150 = vadd.f32 %v3064, %v3092
    %v3151 = vadd.f32 %v3068, %v3088
    %v3152 = vadd.f32 %v3070, %v3092
    %v3153 = vadd.f32 %v3072, %v3088
    %v3154 = vadd.f32 %v3074, %v3092
    %v3155 = vadd.f32 %v3078, %v3088
    %v3156 = vadd.f32 %v3080, %v3092
    %v3157 = vadd.f32 %v421, %v3095
    %v3158 = vadd.f32 %v423, %v3096
    %v3159 = vadd.f32 %v425, %v3097
    %v3160 = vadd.f32 %v427, %v3098
    %v3161 = vadd.f32 %v431, %v3099
    %v3162 = vadd.f32 %v433, %v3100
    %v3163 = vadd.f32 %v435, %v3101
    %v3164 = vadd.f32 %v437, %v3102
    %v3165 = vadd.f32 %v441, %v3103
    %v3166 = vadd.f32 %v443, %v3104
    %v3167 = vadd.f32 %v445, %v3105
    %v3168 = vadd.f32 %v447, %v3106
    %v3169 = vadd.f32 %v451, %v3107
    %v3170 = vadd.f32 %v453, %v3108
    %v3171 = vadd.f32 %v455, %v3109
    %v3172 = vadd.f32 %v457, %v3110
    %v3173 = vadd.f32 %v461, %v3111
    %v3174 = vadd.f32 %v463, %v3112
    %v3175 = vadd.f32 %v465, %v3113
    %v3176 = vadd.f32 %v467, %v3114
    %v3177 = vadd.f32 %v471, %v3115
    %v3178 = vadd.f32 %v473, %v3116
    %v3179 = vadd.f32 %v475, %v3117
    %v3180 = vadd.f32 %v477, %v3118
    %v3181 = vadd.f32 %v481, %v3119
    %v3182 = vadd.f32 %v483, %v3120
    %v3183 = vadd.f32 %v485, %v3121
    %v3184 = vadd.f32 %v487, %v3122
    %v3185 = vadd.f32 %v491, %v3123
    %v3186 = vadd.f32 %v493, %v3124
    %v3187 = vadd.f32 %v495, %v3125
    %v3188 = vadd.f32 %v497, %v3126
    %v3189 = vadd.f32 %v501, %v3127
    %v3190 = vadd.f32 %v503, %v3128
    %v3191 = vadd.f32 %v505, %v3129
    %v3192 = vadd.f32 %v507, %v3130
    %v3193 = vadd.f32 %v511, %v3131
    %v3194 = vadd.f32 %v513, %v3132
    %v3195 = vadd.f32 %v515, %v3133
    %v3196 = vadd.f32 %v517, %v3134
    %v3197 = vadd.f32 %v521, %v3135
    %v3198 = vadd.f32 %v523, %v3136
    %v3199 = vadd.f32 %v525, %v3137
    %v3200 = vadd.f32 %v527, %v3138
    %v3201 = vadd.f32 %v531, %v3139
    %v3202 = vadd.f32 %v533, %v3140
    %v3203 = vadd.f32 %v535, %v3141
    %v3204 = vadd.f32 %v537, %v3142
    %v3205 = vadd.f32 %v541, %v3143
    %v3206 = vadd.f32 %v543, %v3144
    %v3207 = vadd.f32 %v545, %v3145
    %v3208 = vadd.f32 %v547, %v3146
    %v3209 = vadd.f32 %v551, %v3147
    %v3210 = vadd.f32 %v553, %v3148
    %v3211 = vadd.f32 %v555, %v3149
    %v3212 = vadd.f32 %v557, %v3150
    %v3213 = vadd.f32 %v561, %v3151
    %v3214 = vadd.f32 %v563, %v3152
    %v3215 = vadd.f32 %v565, %v3153
    %v3216 = vadd.f32 %v567, %v3154
    %v3217 = vadd.f32 %v571, %v3155
    %v3218 = vadd.f32 %v573, %v3156
    %v3219 = vxor.u32 %v3157, 2147483648
    %v3220 = vxor.u32 %v3158, 2147483648
    %v3221 = vxor.u32 %v3159, 2147483648
    %v3222 = vxor.u32 %v3160, 2147483648
    %v3223 = vxor.u32 %v3161, 2147483648
    %v3224 = vxor.u32 %v3162, 2147483648
    %v3225 = vxor.u32 %v3163, 2147483648
    %v3226 = vxor.u32 %v3164, 2147483648
    %v3227 = vxor.u32 %v3165, 2147483648
    %v3228 = vxor.u32 %v3166, 2147483648
    %v3229 = vxor.u32 %v3167, 2147483648
    %v3230 = vxor.u32 %v3168, 2147483648
    %v3231 = vxor.u32 %v3169, 2147483648
    %v3232 = vxor.u32 %v3170, 2147483648
    %v3233 = vxor.u32 %v3171, 2147483648
    %v3234 = vxor.u32 %v3172, 2147483648
    %v3235 = vxor.u32 %v3173, 2147483648
    %v3236 = vxor.u32 %v3174, 2147483648
    %v3237 = vxor.u32 %v3175, 2147483648
    %v3238 = vxor.u32 %v3176, 2147483648
    %v3239 = vxor.u32 %v3177, 2147483648
    %v3240 = vxor.u32 %v3178, 2147483648
    %v3241 = vxor.u32 %v3179, 2147483648
    %v3242 = vxor.u32 %v3180, 2147483648
    %v3243 = vxor.u32 %v3181, 2147483648
    %v3244 = vxor.u32 %v3182, 2147483648
    %v3245 = vxor.u32 %v3183, 2147483648
    %v3246 = vxor.u32 %v3184, 2147483648
    %v3247 = vxor.u32 %v3185, 2147483648
    %v3248 = vxor.u32 %v3186, 2147483648
    %v3249 = vxor.u32 %v3187, 2147483648
    %v3250 = vxor.u32 %v3188, 2147483648
    %v3251 = vxor.u32 %v3189, 2147483648
    %v3252 = vxor.u32 %v3190, 2147483648
    %v3253 = vxor.u32 %v3191, 2147483648
    %v3254 = vxor.u32 %v3192, 2147483648
    %v3255 = vxor.u32 %v3193, 2147483648
    %v3256 = vxor.u32 %v3194, 2147483648
    %v3257 = vxor.u32 %v3195, 2147483648
    %v3258 = vxor.u32 %v3196, 2147483648
    %v3259 = vxor.u32 %v3197, 2147483648
    %v3260 = vxor.u32 %v3198, 2147483648
    %v3261 = vxor.u32 %v3199, 2147483648
    %v3262 = vxor.u32 %v3200, 2147483648
    %v3263 = vxor.u32 %v3201, 2147483648
    %v3264 = vxor.u32 %v3202, 2147483648
    %v3265 = vxor.u32 %v3203, 2147483648
    %v3266 = vxor.u32 %v3204, 2147483648
    %v3267 = vxor.u32 %v3205, 2147483648
    %v3268 = vxor.u32 %v3206, 2147483648
    %v3269 = vxor.u32 %v3207, 2147483648
    %v3270 = vxor.u32 %v3208, 2147483648
    %v3271 = vxor.u32 %v3209, 2147483648
    %v3272 = vxor.u32 %v3210, 2147483648
    %v3273 = vxor.u32 %v3211, 2147483648
    %v3274 = vxor.u32 %v3212, 2147483648
    %v3275 = vxor.u32 %v3213, 2147483648
    %v3276 = vxor.u32 %v3214, 2147483648
    %v3277 = vxor.u32 %v3215, 2147483648
    %v3278 = vxor.u32 %v3216, 2147483648
    %v3279 = vxor.u32 %v3217, 2147483648
    %v3280 = vxor.u32 %v3218, 2147483648
    %v3281 = vmul.f32 %v3219, 1.442695
    %v3282 = vpow.pop %v3281
    %v3283 = vmul.f32 %v3220, 1.442695
    %v3284 = vpow.pop %v3283
    %v3285 = vmul.f32 %v3221, 1.442695
    %v3286 = vpow.pop %v3285
    %v3287 = vmul.f32 %v3222, 1.442695
    %v3288 = vpow.pop %v3287
    %v3289 = vmul.f32 %v3223, 1.442695
    %v3290 = vpow.pop %v3289
    %v3291 = vmul.f32 %v3224, 1.442695
    %v3292 = vpow.pop %v3291
    %v3293 = vmul.f32 %v3225, 1.442695
    %v3294 = vpow.pop %v3293
    %v3295 = vmul.f32 %v3226, 1.442695
    %v3296 = vpow.pop %v3295
    %v3297 = vmul.f32 %v3227, 1.442695
    %v3298 = vpow.pop %v3297
    %v3299 = vmul.f32 %v3228, 1.442695
    %v3300 = vpow.pop %v3299
    %v3301 = vmul.f32 %v3229, 1.442695
    %v3302 = vpow.pop %v3301
    %v3303 = vmul.f32 %v3230, 1.442695
    %v3304 = vpow.pop %v3303
    %v3305 = vmul.f32 %v3231, 1.442695
    %v3306 = vpow.pop %v3305
    %v3307 = vmul.f32 %v3232, 1.442695
    %v3308 = vpow.pop %v3307
    %v3309 = vmul.f32 %v3233, 1.442695
    %v3310 = vpow.pop %v3309
    %v3311 = vmul.f32 %v3234, 1.442695
    %v3312 = vpow.pop %v3311
    %v3313 = vmul.f32 %v3235, 1.442695
    %v3314 = vpow.pop %v3313
    %v3315 = vmul.f32 %v3236, 1.442695
    %v3316 = vpow.pop %v3315
    %v3317 = vmul.f32 %v3237, 1.442695
    %v3318 = vpow.pop %v3317
    %v3319 = vmul.f32 %v3238, 1.442695
    %v3320 = vpow.pop %v3319
    %v3321 = vmul.f32 %v3239, 1.442695
    %v3322 = vpow.pop %v3321
    %v3323 = vmul.f32 %v3240, 1.442695
    %v3324 = vpow.pop %v3323
    %v3325 = vmul.f32 %v3241, 1.442695
    %v3326 = vpow.pop %v3325
    %v3327 = vmul.f32 %v3242, 1.442695
    %v3328 = vpow.pop %v3327
    %v3329 = vmul.f32 %v3243, 1.442695
    %v3330 = vpow.pop %v3329
    %v3331 = vmul.f32 %v3244, 1.442695
    %v3332 = vpow.pop %v3331
    %v3333 = vmul.f32 %v3245, 1.442695
    %v3334 = vpow.pop %v3333
    %v3335 = vmul.f32 %v3246, 1.442695
    %v3336 = vpow.pop %v3335
    %v3337 = vmul.f32 %v3247, 1.442695
    %v3338 = vpow.pop %v3337
    %v3339 = vmul.f32 %v3248, 1.442695
    %v3340 = vpow.pop %v3339
    %v3341 = vmul.f32 %v3249, 1.442695
    %v3342 = vpow.pop %v3341
    %v3343 = vmul.f32 %v3250, 1.442695
    %v3344 = vpow.pop %v3343
    %v3345 = vmul.f32 %v3251, 1.442695
    %v3346 = vpow.pop %v3345
    %v3347 = vmul.f32 %v3252, 1.442695
    %v3348 = vpow.pop %v3347
    %v3349 = vmul.f32 %v3253, 1.442695
    %v3350 = vpow.pop %v3349
    %v3351 = vmul.f32 %v3254, 1.442695
    %v3352 = vpow.pop %v3351
    %v3353 = vmul.f32 %v3255, 1.442695
    %v3354 = vpow.pop %v3353
    %v3355 = vmul.f32 %v3256, 1.442695
    %v3356 = vpow.pop %v3355
    %v3357 = vmul.f32 %v3257, 1.442695
    %v3358 = vpow.pop %v3357
    %v3359 = vmul.f32 %v3258, 1.442695
    %v3360 = vpow.pop %v3359
    %v3361 = vmul.f32 %v3259, 1.442695
    %v3362 = vpow.pop %v3361
    %v3363 = vmul.f32 %v3260, 1.442695
    %v3364 = vpow.pop %v3363
    %v3365 = vmul.f32 %v3261, 1.442695
    %v3366 = vpow.pop %v3365
    %v3367 = vmul.f32 %v3262, 1.442695
    %v3368 = vpow.pop %v3367
    %v3369 = vmul.f32 %v3263, 1.442695
    %v3370 = vpow.pop %v3369
    %v3371 = vmul.f32 %v3264, 1.442695
    %v3372 = vpow.pop %v3371
    %v3373 = vmul.f32 %v3265, 1.442695
    %v3374 = vpow.pop %v3373
    %v3375 = vmul.f32 %v3266, 1.442695
    %v3376 = vpow.pop %v3375
    %v3377 = vmul.f32 %v3267, 1.442695
    %v3378 = vpow.pop %v3377
    %v3379 = vmul.f32 %v3268, 1.442695
    %v3380 = vpow.pop %v3379
    %v3381 = vmul.f32 %v3269, 1.442695
    %v3382 = vpow.pop %v3381
    %v3383 = vmul.f32 %v3270, 1.442695
    %v3384 = vpow.pop %v3383
    %v3385 = vmul.f32 %v3271, 1.442695
    %v3386 = vpow.pop %v3385
    %v3387 = vmul.f32 %v3272, 1.442695
    %v3388 = vpow.pop %v3387
    %v3389 = vmul.f32 %v3273, 1.442695
    %v3390 = vpow.pop %v3389
    %v3391 = vmul.f32 %v3274, 1.442695
    %v3392 = vpow.pop %v3391
    %v3393 = vmul.f32 %v3275, 1.442695
    %v3394 = vpow.pop %v3393
    %v3395 = vmul.f32 %v3276, 1.442695
    %v3396 = vpow.pop %v3395
    %v3397 = vmul.f32 %v3277, 1.442695
    %v3398 = vpow.pop %v3397
    %v3399 = vmul.f32 %v3278, 1.442695
    %v3400 = vpow.pop %v3399
    %v3401 = vmul.f32 %v3279, 1.442695
    %v3402 = vpow.pop %v3401
    %v3403 = vmul.f32 %v3280, 1.442695
    %v3404 = vpow.pop %v3403
    %v3405 = vadd.f32 %v3282, 1.0
    %v3406 = vadd.f32 %v3284, 1.0
    %v3407 = vadd.f32 %v3286, 1.0
    %v3408 = vadd.f32 %v3288, 1.0
    %v3409 = vadd.f32 %v3290, 1.0
    %v3410 = vadd.f32 %v3292, 1.0
    %v3411 = vadd.f32 %v3294, 1.0
    %v3412 = vadd.f32 %v3296, 1.0
    %v3413 = vadd.f32 %v3298, 1.0
    %v3414 = vadd.f32 %v3300, 1.0
    %v3415 = vadd.f32 %v3302, 1.0
    %v3416 = vadd.f32 %v3304, 1.0
    %v3417 = vadd.f32 %v3306, 1.0
    %v3418 = vadd.f32 %v3308, 1.0
    %v3419 = vadd.f32 %v3310, 1.0
    %v3420 = vadd.f32 %v3312, 1.0
    %v3421 = vadd.f32 %v3314, 1.0
    %v3422 = vadd.f32 %v3316, 1.0
    %v3423 = vadd.f32 %v3318, 1.0
    %v3424 = vadd.f32 %v3320, 1.0
    %v3425 = vadd.f32 %v3322, 1.0
    %v3426 = vadd.f32 %v3324, 1.0
    %v3427 = vadd.f32 %v3326, 1.0
    %v3428 = vadd.f32 %v3328, 1.0
    %v3429 = vadd.f32 %v3330, 1.0
    %v3430 = vadd.f32 %v3332, 1.0
    %v3431 = vadd.f32 %v3334, 1.0
    %v3432 = vadd.f32 %v3336, 1.0
    %v3433 = vadd.f32 %v3338, 1.0
    %v3434 = vadd.f32 %v3340, 1.0
    %v3435 = vadd.f32 %v3342, 1.0
    %v3436 = vadd.f32 %v3344, 1.0
    %v3437 = vadd.f32 %v3346, 1.0
    %v3438 = vadd.f32 %v3348, 1.0
    %v3439 = vadd.f32 %v3350, 1.0
    %v3440 = vadd.f32 %v3352, 1.0
    %v3441 = vadd.f32 %v3354, 1.0
    %v3442 = vadd.f32 %v3356, 1.0
    %v3443 = vadd.f32 %v3358, 1.0
    %v3444 = vadd.f32 %v3360, 1.0
    %v3445 = vadd.f32 %v3362, 1.0
    %v3446 = vadd.f32 %v3364, 1.0
    %v3447 = vadd.f32 %v3366, 1.0
    %v3448 = vadd.f32 %v3368, 1.0
    %v3449 = vadd.f32 %v3370, 1.0
    %v3450 = vadd.f32 %v3372, 1.0
    %v3451 = vadd.f32 %v3374, 1.0
    %v3452 = vadd.f32 %v3376, 1.0
    %v3453 = vadd.f32 %v3378, 1.0
    %v3454 = vadd.f32 %v3380, 1.0
    %v3455 = vadd.f32 %v3382, 1.0
    %v3456 = vadd.f32 %v3384, 1.0
    %v3457 = vadd.f32 %v3386, 1.0
    %v3458 = vadd.f32 %v3388, 1.0
    %v3459 = vadd.f32 %v3390, 1.0
    %v3460 = vadd.f32 %v3392, 1.0
    %v3461 = vadd.f32 %v3394, 1.0
    %v3462 = vadd.f32 %v3396, 1.0
    %v3463 = vadd.f32 %v3398, 1.0
    %v3464 = vadd.f32 %v3400, 1.0
    %v3465 = vadd.f32 %v3402, 1.0
    %v3466 = vadd.f32 %v3404, 1.0
    %v3467 = vrcp.pop %v3405
    %v3468 = vmul.f32 1.0, %v3467
    %v3469 = vrcp.pop %v3406
    %v3470 = vmul.f32 1.0, %v3469
    %v3471 = vrcp.pop %v3407
    %v3472 = vmul.f32 1.0, %v3471
    %v3473 = vrcp.pop %v3408
    %v3474 = vmul.f32 1.0, %v3473
    %v3475 = vrcp.pop %v3409
    %v3476 = vmul.f32 1.0, %v3475
    %v3477 = vrcp.pop %v3410
    %v3478 = vmul.f32 1.0, %v3477
    %v3479 = vrcp.pop %v3411
    %v3480 = vmul.f32 1.0, %v3479
    %v3481 = vrcp.pop %v3412
    %v3482 = vmul.f32 1.0, %v3481
    %v3483 = vrcp.pop %v3413
    %v3484 = vmul.f32 1.0, %v3483
    %v3485 = vrcp.pop %v3414
    %v3486 = vmul.f32 1.0, %v3485
    %v3487 = vrcp.pop %v3415
    %v3488 = vmul.f32 1.0, %v3487
    %v3489 = vrcp.pop %v3416
    %v3490 = vmul.f32 1.0, %v3489
    %v3491 = vrcp.pop %v3417
    %v3492 = vmul.f32 1.0, %v3491
    %v3493 = vrcp.pop %v3418
    %v3494 = vmul.f32 1.0, %v3493
    %v3495 = vrcp.pop %v3419
    %v3496 = vmul.f32 1.0, %v3495
    %v3497 = vrcp.pop %v3420
    %v3498 = vmul.f32 1.0, %v3497
    %v3499 = vrcp.pop %v3421
    %v3500 = vmul.f32 1.0, %v3499
    %v3501 = vrcp.pop %v3422
    %v3502 = vmul.f32 1.0, %v3501
    %v3503 = vrcp.pop %v3423
    %v3504 = vmul.f32 1.0, %v3503
    %v3505 = vrcp.pop %v3424
    %v3506 = vmul.f32 1.0, %v3505
    %v3507 = vrcp.pop %v3425
    %v3508 = vmul.f32 1.0, %v3507
    %v3509 = vrcp.pop %v3426
    %v3510 = vmul.f32 1.0, %v3509
    %v3511 = vrcp.pop %v3427
    %v3512 = vmul.f32 1.0, %v3511
    %v3513 = vrcp.pop %v3428
    %v3514 = vmul.f32 1.0, %v3513
    %v3515 = vrcp.pop %v3429
    %v3516 = vmul.f32 1.0, %v3515
    %v3517 = vrcp.pop %v3430
    %v3518 = vmul.f32 1.0, %v3517
    %v3519 = vrcp.pop %v3431
    %v3520 = vmul.f32 1.0, %v3519
    %v3521 = vrcp.pop %v3432
    %v3522 = vmul.f32 1.0, %v3521
    %v3523 = vrcp.pop %v3433
    %v3524 = vmul.f32 1.0, %v3523
    %v3525 = vrcp.pop %v3434
    %v3526 = vmul.f32 1.0, %v3525
    %v3527 = vrcp.pop %v3435
    %v3528 = vmul.f32 1.0, %v3527
    %v3529 = vrcp.pop %v3436
    %v3530 = vmul.f32 1.0, %v3529
    %v3531 = vrcp.pop %v3437
    %v3532 = vmul.f32 1.0, %v3531
    %v3533 = vrcp.pop %v3438
    %v3534 = vmul.f32 1.0, %v3533
    %v3535 = vrcp.pop %v3439
    %v3536 = vmul.f32 1.0, %v3535
    %v3537 = vrcp.pop %v3440
    %v3538 = vmul.f32 1.0, %v3537
    %v3539 = vrcp.pop %v3441
    %v3540 = vmul.f32 1.0, %v3539
    %v3541 = vrcp.pop %v3442
    %v3542 = vmul.f32 1.0, %v3541
    %v3543 = vrcp.pop %v3443
    %v3544 = vmul.f32 1.0, %v3543
    %v3545 = vrcp.pop %v3444
    %v3546 = vmul.f32 1.0, %v3545
    %v3547 = vrcp.pop %v3445
    %v3548 = vmul.f32 1.0, %v3547
    %v3549 = vrcp.pop %v3446
    %v3550 = vmul.f32 1.0, %v3549
    %v3551 = vrcp.pop %v3447
    %v3552 = vmul.f32 1.0, %v3551
    %v3553 = vrcp.pop %v3448
    %v3554 = vmul.f32 1.0, %v3553
    %v3555 = vrcp.pop %v3449
    %v3556 = vmul.f32 1.0, %v3555
    %v3557 = vrcp.pop %v3450
    %v3558 = vmul.f32 1.0, %v3557
    %v3559 = vrcp.pop %v3451
    %v3560 = vmul.f32 1.0, %v3559
    %v3561 = vrcp.pop %v3452
    %v3562 = vmul.f32 1.0, %v3561
    %v3563 = vrcp.pop %v3453
    %v3564 = vmul.f32 1.0, %v3563
    %v3565 = vrcp.pop %v3454
    %v3566 = vmul.f32 1.0, %v3565
    %v3567 = vrcp.pop %v3455
    %v3568 = vmul.f32 1.0, %v3567
    %v3569 = vrcp.pop %v3456
    %v3570 = vmul.f32 1.0, %v3569
    %v3571 = vrcp.pop %v3457
    %v3572 = vmul.f32 1.0, %v3571
    %v3573 = vrcp.pop %v3458
    %v3574 = vmul.f32 1.0, %v3573
    %v3575 = vrcp.pop %v3459
    %v3576 = vmul.f32 1.0, %v3575
    %v3577 = vrcp.pop %v3460
    %v3578 = vmul.f32 1.0, %v3577
    %v3579 = vrcp.pop %v3461
    %v3580 = vmul.f32 1.0, %v3579
    %v3581 = vrcp.pop %v3462
    %v3582 = vmul.f32 1.0, %v3581
    %v3583 = vrcp.pop %v3463
    %v3584 = vmul.f32 1.0, %v3583
    %v3585 = vrcp.pop %v3464
    %v3586 = vmul.f32 1.0, %v3585
    %v3587 = vrcp.pop %v3465
    %v3588 = vmul.f32 1.0, %v3587
    %v3589 = vrcp.pop %v3466
    %v3590 = vmul.f32 1.0, %v3589
    %v3591 = vmul.f32 %v3157, %v3468
    %v3592 = vmul.f32 %v3158, %v3470
    %v3593 = vmul.f32 %v3159, %v3472
    %v3594 = vmul.f32 %v3160, %v3474
    %v3595 = vmul.f32 %v3161, %v3476
    %v3596 = vmul.f32 %v3162, %v3478
    %v3597 = vmul.f32 %v3163, %v3480
    %v3598 = vmul.f32 %v3164, %v3482
    %v3599 = vmul.f32 %v3165, %v3484
    %v3600 = vmul.f32 %v3166, %v3486
    %v3601 = vmul.f32 %v3167, %v3488
    %v3602 = vmul.f32 %v3168, %v3490
    %v3603 = vmul.f32 %v3169, %v3492
    %v3604 = vmul.f32 %v3170, %v3494
    %v3605 = vmul.f32 %v3171, %v3496
    %v3606 = vmul.f32 %v3172, %v3498
    %v3607 = vmul.f32 %v3173, %v3500
    %v3608 = vmul.f32 %v3174, %v3502
    %v3609 = vmul.f32 %v3175, %v3504
    %v3610 = vmul.f32 %v3176, %v3506
    %v3611 = vmul.f32 %v3177, %v3508
    %v3612 = vmul.f32 %v3178, %v3510
    %v3613 = vmul.f32 %v3179, %v3512
    %v3614 = vmul.f32 %v3180, %v3514
    %v3615 = vmul.f32 %v3181, %v3516
    %v3616 = vmul.f32 %v3182, %v3518
    %v3617 = vmul.f32 %v3183, %v3520
    %v3618 = vmul.f32 %v3184, %v3522
    %v3619 = vmul.f32 %v3185, %v3524
    %v3620 = vmul.f32 %v3186, %v3526
    %v3621 = vmul.f32 %v3187, %v3528
    %v3622 = vmul.f32 %v3188, %v3530
    %v3623 = vmul.f32 %v3189, %v3532
    %v3624 = vmul.f32 %v3190, %v3534
    %v3625 = vmul.f32 %v3191, %v3536
    %v3626 = vmul.f32 %v3192, %v3538
    %v3627 = vmul.f32 %v3193, %v3540
    %v3628 = vmul.f32 %v3194, %v3542
    %v3629 = vmul.f32 %v3195, %v3544
    %v3630 = vmul.f32 %v3196, %v3546
    %v3631 = vmul.f32 %v3197, %v3548
    %v3632 = vmul.f32 %v3198, %v3550
    %v3633 = vmul.f32 %v3199, %v3552
    %v3634 = vmul.f32 %v3200, %v3554
    %v3635 = vmul.f32 %v3201, %v3556
    %v3636 = vmul.f32 %v3202, %v3558
    %v3637 = vmul.f32 %v3203, %v3560
    %v3638 = vmul.f32 %v3204, %v3562
    %v3639 = vmul.f32 %v3205, %v3564
    %v3640 = vmul.f32 %v3206, %v3566
    %v3641 = vmul.f32 %v3207, %v3568
    %v3642 = vmul.f32 %v3208, %v3570
    %v3643 = vmul.f32 %v3209, %v3572
    %v3644 = vmul.f32 %v3210, %v3574
    %v3645 = vmul.f32 %v3211, %v3576
    %v3646 = vmul.f32 %v3212, %v3578
    %v3647 = vmul.f32 %v3213, %v3580
    %v3648 = vmul.f32 %v3214, %v3582
    %v3649 = vmul.f32 %v3215, %v3584
    %v3650 = vmul.f32 %v3216, %v3586
    %v3651 = vmul.f32 %v3217, %v3588
    %v3652 = vmul.f32 %v3218, %v3590
    %v3653 = vadd.f32 %v3591, %v3592
    %v3654 = vadd.f32 %v3653, %v3593
    %v3655 = vadd.f32 %v3654, %v3594
    %v3656 = vadd.f32 %v3655, %v3595
    %v3657 = vadd.f32 %v3656, %v3596
    %v3658 = vadd.f32 %v3657, %v3597
    %v3659 = vadd.f32 %v3658, %v3598
    %v3660 = vadd.f32 %v3659, %v3599
    %v3661 = vadd.f32 %v3660, %v3600
    %v3662 = vadd.f32 %v3661, %v3601
    %v3663 = vadd.f32 %v3662, %v3602
    %v3664 = vadd.f32 %v3663, %v3603
    %v3665 = vadd.f32 %v3664, %v3604
    %v3666 = vadd.f32 %v3665, %v3605
    %v3667 = vadd.f32 %v3666, %v3606
    %v3668 = vadd.f32 %v3667, %v3607
    %v3669 = vadd.f32 %v3668, %v3608
    %v3670 = vadd.f32 %v3669, %v3609
    %v3671 = vadd.f32 %v3670, %v3610
    %v3672 = vadd.f32 %v3671, %v3611
    %v3673 = vadd.f32 %v3672, %v3612
    %v3674 = vadd.f32 %v3673, %v3613
    %v3675 = vadd.f32 %v3674, %v3614
    %v3676 = vadd.f32 %v3675, %v3615
    %v3677 = vadd.f32 %v3676, %v3616
    %v3678 = vadd.f32 %v3677, %v3617
    %v3679 = vadd.f32 %v3678, %v3618
    %v3680 = vadd.f32 %v3679, %v3619
    %v3681 = vadd.f32 %v3680, %v3620
    %v3682 = vadd.f32 %v3681, %v3621
    %v3683 = vadd.f32 %v3682, %v3622
    %v3684 = vadd.f32 %v3683, %v3623
    %v3685 = vadd.f32 %v3684, %v3624
    %v3686 = vadd.f32 %v3685, %v3625
    %v3687 = vadd.f32 %v3686, %v3626
    %v3688 = vadd.f32 %v3687, %v3627
    %v3689 = vadd.f32 %v3688, %v3628
    %v3690 = vadd.f32 %v3689, %v3629
    %v3691 = vadd.f32 %v3690, %v3630
    %v3692 = vadd.f32 %v3691, %v3631
    %v3693 = vadd.f32 %v3692, %v3632
    %v3694 = vadd.f32 %v3693, %v3633
    %v3695 = vadd.f32 %v3694, %v3634
    %v3696 = vadd.f32 %v3695, %v3635
    %v3697 = vadd.f32 %v3696, %v3636
    %v3698 = vadd.f32 %v3697, %v3637
    %v3699 = vadd.f32 %v3698, %v3638
    %v3700 = vadd.f32 %v3699, %v3639
    %v3701 = vadd.f32 %v3700, %v3640
    %v3702 = vadd.f32 %v3701, %v3641
    %v3703 = vadd.f32 %v3702, %v3642
    %v3704 = vadd.f32 %v3703, %v3643
    %v3705 = vadd.f32 %v3704, %v3644
    %v3706 = vadd.f32 %v3705, %v3645
    %v3707 = vadd.f32 %v3706, %v3646
    %v3708 = vadd.f32 %v3707, %v3647
    %v3709 = vadd.f32 %v3708, %v3648
    %v3710 = vadd.f32 %v3709, %v3649
    %v3711 = vadd.f32 %v3710, %v3650
    %v3712 = vadd.f32 %v3711, %v3651
    %v3713 = vadd.f32 %v3712, %v3652
    %3714 = vadd.xlane.f32.xlu0 %v3713
    %v3715 = vpop.xlane.xlu0 %3714
    %v3716 = vrot.slane %v3715, 4
    %v3717 = vadd.f32 %v3715, %v3716
    %v3718 = vrot.slane %v3717, 2
    %v3719 = vadd.f32 %v3717, %v3718
    %v3720 = vrot.slane %v3719, 1
    %v3721 = vadd.f32 %v3719, %v3720
    %s3722 = vtos %v3721
    %v3723 = vmul.f32 %v3591, %v3591
    %v3724 = vmul.f32 %v3592, %v3592
    %v3725 = vmul.f32 %v3593, %v3593
    %v3726 = vmul.f32 %v3594, %v3594
    %v3727 = vmul.f32 %v3595, %v3595
    %v3728 = vmul.f32 %v3596, %v3596
    %v3729 = vmul.f32 %v3597, %v3597
    %v3730 = vmul.f32 %v3598, %v3598
    %v3731 = vmul.f32 %v3599, %v3599
    %v3732 = vmul.f32 %v3600, %v3600
    %v3733 = vmul.f32 %v3601, %v3601
    %v3734 = vmul.f32 %v3602, %v3602
    %v3735 = vmul.f32 %v3603, %v3603
    %v3736 = vmul.f32 %v3604, %v3604
    %v3737 = vmul.f32 %v3605, %v3605
    %v3738 = vmul.f32 %v3606, %v3606
    %v3739 = vmul.f32 %v3607, %v3607
    %v3740 = vmul.f32 %v3608, %v3608
    %v3741 = vmul.f32 %v3609, %v3609
    %v3742 = vmul.f32 %v3610, %v3610
    %v3743 = vmul.f32 %v3611, %v3611
    %v3744 = vmul.f32 %v3612, %v3612
    %v3745 = vmul.f32 %v3613, %v3613
    %v3746 = vmul.f32 %v3614, %v3614
    %v3747 = vmul.f32 %v3615, %v3615
    %v3748 = vmul.f32 %v3616, %v3616
    %v3749 = vmul.f32 %v3617, %v3617
    %v3750 = vmul.f32 %v3618, %v3618
    %v3751 = vmul.f32 %v3619, %v3619
    %v3752 = vmul.f32 %v3620, %v3620
    %v3753 = vmul.f32 %v3621, %v3621
    %v3754 = vmul.f32 %v3622, %v3622
    %v3755 = vmul.f32 %v3623, %v3623
    %v3756 = vmul.f32 %v3624, %v3624
    %v3757 = vmul.f32 %v3625, %v3625
    %v3758 = vmul.f32 %v3626, %v3626
    %v3759 = vmul.f32 %v3627, %v3627
    %v3760 = vmul.f32 %v3628, %v3628
    %v3761 = vmul.f32 %v3629, %v3629
    %v3762 = vmul.f32 %v3630, %v3630
    %v3763 = vmul.f32 %v3631, %v3631
    %v3764 = vmul.f32 %v3632, %v3632
    %v3765 = vmul.f32 %v3633, %v3633
    %v3766 = vmul.f32 %v3634, %v3634
    %v3767 = vmul.f32 %v3635, %v3635
    %v3768 = vmul.f32 %v3636, %v3636
    %v3769 = vmul.f32 %v3637, %v3637
    %v3770 = vmul.f32 %v3638, %v3638
    %v3771 = vmul.f32 %v3639, %v3639
    %v3772 = vmul.f32 %v3640, %v3640
    %v3773 = vmul.f32 %v3641, %v3641
    %v3774 = vmul.f32 %v3642, %v3642
    %v3775 = vmul.f32 %v3643, %v3643
    %v3776 = vmul.f32 %v3644, %v3644
    %v3777 = vmul.f32 %v3645, %v3645
    %v3778 = vmul.f32 %v3646, %v3646
    %v3779 = vmul.f32 %v3647, %v3647
    %v3780 = vmul.f32 %v3648, %v3648
    %v3781 = vmul.f32 %v3649, %v3649
    %v3782 = vmul.f32 %v3650, %v3650
    %v3783 = vmul.f32 %v3651, %v3651
    %v3784 = vmul.f32 %v3652, %v3652
    %v3785 = vadd.f32 %v3723, %v3724
    %v3786 = vadd.f32 %v3785, %v3725
    %v3787 = vadd.f32 %v3786, %v3726
    %v3788 = vadd.f32 %v3787, %v3727
    %v3789 = vadd.f32 %v3788, %v3728
    %v3790 = vadd.f32 %v3789, %v3729
    %v3791 = vadd.f32 %v3790, %v3730
    %v3792 = vadd.f32 %v3791, %v3731
    %v3793 = vadd.f32 %v3792, %v3732
    %v3794 = vadd.f32 %v3793, %v3733
    %v3795 = vadd.f32 %v3794, %v3734
    %v3796 = vadd.f32 %v3795, %v3735
    %v3797 = vadd.f32 %v3796, %v3736
    %v3798 = vadd.f32 %v3797, %v3737
    %v3799 = vadd.f32 %v3798, %v3738
    %v3800 = vadd.f32 %v3799, %v3739
    %v3801 = vadd.f32 %v3800, %v3740
    %v3802 = vadd.f32 %v3801, %v3741
    %v3803 = vadd.f32 %v3802, %v3742
    %v3804 = vadd.f32 %v3803, %v3743
    %v3805 = vadd.f32 %v3804, %v3744
    %v3806 = vadd.f32 %v3805, %v3745
    %v3807 = vadd.f32 %v3806, %v3746
    %v3808 = vadd.f32 %v3807, %v3747
    %v3809 = vadd.f32 %v3808, %v3748
    %v3810 = vadd.f32 %v3809, %v3749
    %v3811 = vadd.f32 %v3810, %v3750
    %v3812 = vadd.f32 %v3811, %v3751
    %v3813 = vadd.f32 %v3812, %v3752
    %v3814 = vadd.f32 %v3813, %v3753
    %v3815 = vadd.f32 %v3814, %v3754
    %v3816 = vadd.f32 %v3815, %v3755
    %v3817 = vadd.f32 %v3816, %v3756
    %v3818 = vadd.f32 %v3817, %v3757
    %v3819 = vadd.f32 %v3818, %v3758
    %v3820 = vadd.f32 %v3819, %v3759
    %v3821 = vadd.f32 %v3820, %v3760
    %v3822 = vadd.f32 %v3821, %v3761
    %v3823 = vadd.f32 %v3822, %v3762
    %v3824 = vadd.f32 %v3823, %v3763
    %v3825 = vadd.f32 %v3824, %v3764
    %v3826 = vadd.f32 %v3825, %v3765
    %v3827 = vadd.f32 %v3826, %v3766
    %v3828 = vadd.f32 %v3827, %v3767
    %v3829 = vadd.f32 %v3828, %v3768
    %v3830 = vadd.f32 %v3829, %v3769
    %v3831 = vadd.f32 %v3830, %v3770
    %v3832 = vadd.f32 %v3831, %v3771
    %v3833 = vadd.f32 %v3832, %v3772
    %v3834 = vadd.f32 %v3833, %v3773
    %v3835 = vadd.f32 %v3834, %v3774
    %v3836 = vadd.f32 %v3835, %v3775
    %v3837 = vadd.f32 %v3836, %v3776
    %v3838 = vadd.f32 %v3837, %v3777
    %v3839 = vadd.f32 %v3838, %v3778
    %v3840 = vadd.f32 %v3839, %v3779
    %v3841 = vadd.f32 %v3840, %v3780
    %v3842 = vadd.f32 %v3841, %v3781
    %v3843 = vadd.f32 %v3842, %v3782
    %v3844 = vadd.f32 %v3843, %v3783
    %v3845 = vadd.f32 %v3844, %v3784
    %3846 = vadd.xlane.f32.xlu0 %v3845
    %v3847 = vpop.xlane.xlu0 %3846
    %v3848 = vrot.slane %v3847, 4
    %v3849 = vadd.f32 %v3847, %v3848
    %v3850 = vrot.slane %v3849, 2
    %v3851 = vadd.f32 %v3849, %v3850
    %v3852 = vrot.slane %v3851, 1
    %v3853 = vadd.f32 %v3851, %v3852
    %s3854 = vtos %v3853
    %v3855 = vrcp.pop 63488.0
    %s3856 = vtos %v3855
    %s3857 = smul.f32 %s3722, %s3856
    %v3858 = vrcp.pop 63488.0
    %s3859 = vtos %v3858
    %s3860 = smul.f32 %s3854, %s3859
    %s3861 = smul.f32 %s3857, %s3857
    %s3862 = ssub.f32 %s3860, %s3861
    %s3863 = sadd.f32 %s3862, 1e-05
    %v3864 = vstv %s3863
    %v3865 = vrsqrt.pop %v3864
    %s3866 = vtos %v3865
    %v3867 = vstv %s3866
    %v3868 = vmul.f32 %v3591, %v3867
    %v3869 = vmul.f32 %v3592, %v3867
    %v3870 = vmul.f32 %v3593, %v3867
    %v3871 = vmul.f32 %v3594, %v3867
    %v3872 = vmul.f32 %v3595, %v3867
    %v3873 = vmul.f32 %v3596, %v3867
    %v3874 = vmul.f32 %v3597, %v3867
    %v3875 = vmul.f32 %v3598, %v3867
    %v3876 = vmul.f32 %v3599, %v3867
    %v3877 = vmul.f32 %v3600, %v3867
    %v3878 = vmul.f32 %v3601, %v3867
    %v3879 = vmul.f32 %v3602, %v3867
    %v3880 = vmul.f32 %v3603, %v3867
    %v3881 = vmul.f32 %v3604, %v3867
    %v3882 = vmul.f32 %v3605, %v3867
    %v3883 = vmul.f32 %v3606, %v3867
    %v3884 = vmul.f32 %v3607, %v3867
    %v3885 = vmul.f32 %v3608, %v3867
    %v3886 = vmul.f32 %v3609, %v3867
    %v3887 = vmul.f32 %v3610, %v3867
    %v3888 = vmul.f32 %v3611, %v3867
    %v3889 = vmul.f32 %v3612, %v3867
    %v3890 = vmul.f32 %v3613, %v3867
    %v3891 = vmul.f32 %v3614, %v3867
    %v3892 = vmul.f32 %v3615, %v3867
    %v3893 = vmul.f32 %v3616, %v3867
    %v3894 = vmul.f32 %v3617, %v3867
    %v3895 = vmul.f32 %v3618, %v3867
    %v3896 = vmul.f32 %v3619, %v3867
    %v3897 = vmul.f32 %v3620, %v3867
    %v3898 = vmul.f32 %v3621, %v3867
    %v3899 = vmul.f32 %v3622, %v3867
    %v3900 = vmul.f32 %v3623, %v3867
    %v3901 = vmul.f32 %v3624, %v3867
    %v3902 = vmul.f32 %v3625, %v3867
    %v3903 = vmul.f32 %v3626, %v3867
    %v3904 = vmul.f32 %v3627, %v3867
    %v3905 = vmul.f32 %v3628, %v3867
    %v3906 = vmul.f32 %v3629, %v3867
    %v3907 = vmul.f32 %v3630, %v3867
    %v3908 = vmul.f32 %v3631, %v3867
    %v3909 = vmul.f32 %v3632, %v3867
    %v3910 = vmul.f32 %v3633, %v3867
    %v3911 = vmul.f32 %v3634, %v3867
    %v3912 = vmul.f32 %v3635, %v3867
    %v3913 = vmul.f32 %v3636, %v3867
    %v3914 = vmul.f32 %v3637, %v3867
    %v3915 = vmul.f32 %v3638, %v3867
    %v3916 = vmul.f32 %v3639, %v3867
    %v3917 = vmul.f32 %v3640, %v3867
    %v3918 = vmul.f32 %v3641, %v3867
    %v3919 = vmul.f32 %v3642, %v3867
    %v3920 = vmul.f32 %v3643, %v3867
    %v3921 = vmul.f32 %v3644, %v3867
    %v3922 = vmul.f32 %v3645, %v3867
    %v3923 = vmul.f32 %v3646, %v3867
    %v3924 = vmul.f32 %v3647, %v3867
    %v3925 = vmul.f32 %v3648, %v3867
    %v3926 = vmul.f32 %v3649, %v3867
    %v3927 = vmul.f32 %v3650, %v3867
    %v3928 = vmul.f32 %v3651, %v3867
    %v3929 = vmul.f32 %v3652, %v3867
    %s3930 = smul.f32 %s3857, %s3866
    %v3931 = vstv %s3930
    %v3932 = vsub.f32 %v3868, %v3931
    %v3933 = vsub.f32 %v3869, %v3931
    %v3934 = vsub.f32 %v3870, %v3931
    %v3935 = vsub.f32 %v3871, %v3931
    %v3936 = vsub.f32 %v3872, %v3931
    %v3937 = vsub.f32 %v3873, %v3931
    %v3938 = vsub.f32 %v3874, %v3931
    %v3939 = vsub.f32 %v3875, %v3931
    %v3940 = vsub.f32 %v3876, %v3931
    %v3941 = vsub.f32 %v3877, %v3931
    %v3942 = vsub.f32 %v3878, %v3931
    %v3943 = vsub.f32 %v3879, %v3931
    %v3944 = vsub.f32 %v3880, %v3931
    %v3945 = vsub.f32 %v3881, %v3931
    %v3946 = vsub.f32 %v3882, %v3931
    %v3947 = vsub.f32 %v3883, %v3931
    %v3948 = vsub.f32 %v3884, %v3931
    %v3949 = vsub.f32 %v3885, %v3931
    %v3950 = vsub.f32 %v3886, %v3931
    %v3951 = vsub.f32 %v3887, %v3931
    %v3952 = vsub.f32 %v3888, %v3931
    %v3953 = vsub.f32 %v3889, %v3931
    %v3954 = vsub.f32 %v3890, %v3931
    %v3955 = vsub.f32 %v3891, %v3931
    %v3956 = vsub.f32 %v3892, %v3931
    %v3957 = vsub.f32 %v3893, %v3931
    %v3958 = vsub.f32 %v3894, %v3931
    %v3959 = vsub.f32 %v3895, %v3931
    %v3960 = vsub.f32 %v3896, %v3931
    %v3961 = vsub.f32 %v3897, %v3931
    %v3962 = vsub.f32 %v3898, %v3931
    %v3963 = vsub.f32 %v3899, %v3931
    %v3964 = vsub.f32 %v3900, %v3931
    %v3965 = vsub.f32 %v3901, %v3931
    %v3966 = vsub.f32 %v3902, %v3931
    %v3967 = vsub.f32 %v3903, %v3931
    %v3968 = vsub.f32 %v3904, %v3931
    %v3969 = vsub.f32 %v3905, %v3931
    %v3970 = vsub.f32 %v3906, %v3931
    %v3971 = vsub.f32 %v3907, %v3931
    %v3972 = vsub.f32 %v3908, %v3931
    %v3973 = vsub.f32 %v3909, %v3931
    %v3974 = vsub.f32 %v3910, %v3931
    %v3975 = vsub.f32 %v3911, %v3931
    %v3976 = vsub.f32 %v3912, %v3931
    %v3977 = vsub.f32 %v3913, %v3931
    %v3978 = vsub.f32 %v3914, %v3931
    %v3979 = vsub.f32 %v3915, %v3931
    %v3980 = vsub.f32 %v3916, %v3931
    %v3981 = vsub.f32 %v3917, %v3931
    %v3982 = vsub.f32 %v3918, %v3931
    %v3983 = vsub.f32 %v3919, %v3931
    %v3984 = vsub.f32 %v3920, %v3931
    %v3985 = vsub.f32 %v3921, %v3931
    %v3986 = vsub.f32 %v3922, %v3931
    %v3987 = vsub.f32 %v3923, %v3931
    %v3988 = vsub.f32 %v3924, %v3931
    %v3989 = vsub.f32 %v3925, %v3931
    %v3990 = vsub.f32 %v3926, %v3931
    %v3991 = vsub.f32 %v3927, %v3931
    %v3992 = vsub.f32 %v3928, %v3931
    %v3993 = vsub.f32 %v3929, %v3931
    %s3994 = smul.u32 %s2370, 1
    %s3995 = sshll.u32 %s3994, 4
    %3996 = dma.done %s176, %s3995
    %s3997 = sshll.u32 %s3994, 4
    %3998 = dma.done %s188, %s3997
    %v3999 = vld [vmem:[#allocation4] sm:$0xff]
    %v4000 = vld [vmem:[#allocation4 + $0x8] sm:$0xff]
    %v4001 = vld [vmem:[#allocation4 + $0x10] sm:$0xff]
    %v4002 = vld [vmem:[#allocation4 + $0x18] sm:$0xff]
    %v4003 = vld [vmem:[#allocation4 + $0x20] sm:$0xff]
    %v4004 = vld [vmem:[#allocation4 + $0x28] sm:$0xff]
    %v4005 = vld [vmem:[#allocation4 + $0x30] sm:$0xff]
    %v4006 = vld [vmem:[#allocation4 + $0x38] sm:$0xff]
    %v4007 = vld [vmem:[#allocation4 + $0x40] sm:$0xff]
    %v4008 = vld [vmem:[#allocation4 + $0x48] sm:$0xff]
    %v4009 = vld [vmem:[#allocation4 + $0x50] sm:$0xff]
    %v4010 = vld [vmem:[#allocation4 + $0x58] sm:$0xff]
    %v4011 = vld [vmem:[#allocation4 + $0x60] sm:$0xff]
    %v4012 = vld [vmem:[#allocation4 + $0x68] sm:$0xff]
    %v4013 = vld [vmem:[#allocation4 + $0x70] sm:$0xff]
    %v4014 = vld [vmem:[#allocation4 + $0x78] sm:$0xff]
    %v4015 = vld [vmem:[#allocation5] sm:$0xff]
    %v4016 = vld [vmem:[#allocation5 + $0x8] sm:$0xff]
    %v4017 = vld [vmem:[#allocation5 + $0x10] sm:$0xff]
    %v4018 = vld [vmem:[#allocation5 + $0x18] sm:$0xff]
    %v4019 = vld [vmem:[#allocation5 + $0x20] sm:$0xff]
    %v4020 = vld [vmem:[#allocation5 + $0x28] sm:$0xff]
    %v4021 = vld [vmem:[#allocation5 + $0x30] sm:$0xff]
    %v4022 = vld [vmem:[#allocation5 + $0x38] sm:$0xff]
    %v4023 = vld [vmem:[#allocation5 + $0x40] sm:$0xff]
    %v4024 = vld [vmem:[#allocation5 + $0x48] sm:$0xff]
    %v4025 = vld [vmem:[#allocation5 + $0x50] sm:$0xff]
    %v4026 = vld [vmem:[#allocation5 + $0x58] sm:$0xff]
    %v4027 = vld [vmem:[#allocation5 + $0x60] sm:$0xff]
    %v4028 = vld [vmem:[#allocation5 + $0x68] sm:$0xff]
    %v4029 = vld [vmem:[#allocation5 + $0x70] sm:$0xff]
    %v4030 = vld [vmem:[#allocation5 + $0x78] sm:$0xff]
    %v4031 = vld [vmem:[%s12] sm:$0x1]
    %v4032 = vpack.c.bf16 %v3934, %v3932
    %v4033 = vpack.c.bf16 %v3935, %v3933
    %v4034 = vpack.c.bf16 %v3938, %v3936
    %v4035 = vpack.c.bf16 %v3939, %v3937
    %v4036 = vpack.c.bf16 %v3942, %v3940
    %v4037 = vpack.c.bf16 %v3943, %v3941
    %v4038 = vpack.c.bf16 %v3946, %v3944
    %v4039 = vpack.c.bf16 %v3947, %v3945
    %v4040 = vpack.c.bf16 %v3950, %v3948
    %v4041 = vpack.c.bf16 %v3951, %v3949
    %v4042 = vpack.c.bf16 %v3954, %v3952
    %v4043 = vpack.c.bf16 %v3955, %v3953
    %v4044 = vpack.c.bf16 %v3958, %v3956
    %v4045 = vpack.c.bf16 %v3959, %v3957
    %v4046 = vpack.c.bf16 %v3962, %v3960
    %v4047 = vpack.c.bf16 %v3963, %v3961
    %v4048 = vpack.c.bf16 %v3966, %v3964
    %v4049 = vpack.c.bf16 %v3967, %v3965
    %v4050 = vpack.c.bf16 %v3970, %v3968
    %v4051 = vpack.c.bf16 %v3971, %v3969
    %v4052 = vpack.c.bf16 %v3974, %v3972
    %v4053 = vpack.c.bf16 %v3975, %v3973
    %v4054 = vpack.c.bf16 %v3978, %v3976
    %v4055 = vpack.c.bf16 %v3979, %v3977
    %v4056 = vpack.c.bf16 %v3982, %v3980
    %v4057 = vpack.c.bf16 %v3983, %v3981
    %v4058 = vpack.c.bf16 %v3986, %v3984
    %v4059 = vpack.c.bf16 %v3987, %v3985
    %v4060 = vpack.c.bf16 %v3990, %v3988
    %v4061 = vpack.c.bf16 %v3991, %v3989
    %v4062 = vpack.c.bf16 %v3992, %v3992
    %v4063 = vpack.c.bf16 %v3993, %v3993
    %v4065 = vsel %vm800, %v4062, 0
    %v4068 = vsel %vm800, %v4063, 0
    %4070 = vmatprep.subr.bf16.mxu0 %v4033
    %4071 = vmatpush1.bf16.msra.mxu0 %v4032
    %4072 = vmatprep.subr.bf16.mxu0 %v4035
    %4073 = vmatpush1.bf16.msra.mxu0 %v4034
    %4074 = vmatprep.subr.bf16.mxu0 %v4037
    %4075 = vmatpush1.bf16.msra.mxu0 %v4036
    %4076 = vmatprep.subr.bf16.mxu0 %v4039
    %4077 = vmatpush1.bf16.msra.mxu0 %v4038
    %4078 = vmatprep.subr.bf16.mxu0 %v4041
    %4079 = vmatpush1.bf16.msra.mxu0 %v4040
    %4080 = vmatprep.subr.bf16.mxu0 %v4043
    %4081 = vmatpush1.bf16.msra.mxu0 %v4042
    %4082 = vmatprep.subr.bf16.mxu0 %v4045
    %4083 = vmatpush1.bf16.msra.mxu0 %v4044
    %4084 = vmatprep.subr.bf16.mxu0 %v4047
    %4085 = vmatpush1.bf16.msra.mxu0 %v4046
    %4086 = vmatprep.subr.bf16.mxu0 %v4049
    %4087 = vmatpush1.bf16.msra.mxu0 %v4048
    %4088 = vmatprep.subr.bf16.mxu0 %v4051
    %4089 = vmatpush1.bf16.msra.mxu0 %v4050
    %4090 = vmatprep.subr.bf16.mxu0 %v4053
    %4091 = vmatpush1.bf16.msra.mxu0 %v4052
    %4092 = vmatprep.subr.bf16.mxu0 %v4055
    %4093 = vmatpush1.bf16.msra.mxu0 %v4054
    %4094 = vmatprep.subr.bf16.mxu0 %v4057
    %4095 = vmatpush1.bf16.msra.mxu0 %v4056
    %4096 = vmatprep.subr.bf16.mxu0 %v4059
    %4097 = vmatpush1.bf16.msra.mxu0 %v4058
    %4098 = vmatprep.subr.bf16.mxu0 %v4061
    %4099 = vmatpush1.bf16.msra.mxu0 %v4060
    %4100 = vmatprep.subr.bf16.mxu0 %v4068
    %4101 = vmatpush1.bf16.msra.mxu0 %v4065
    %4102 = vmatprep.mubr.bf16.mxu0 %v753
    %4103 = vmatmul.mubr.bf16.gmra.mrb[0].mxu0 %v703
    %v4104 = vpop.f32.mrb[0].mxu0
    %v4105 = vadd.f32 0.0, %v4104
    %v4106 = vpop.f32.mrb[0].mxu0
    %v4107 = vadd.f32 0.0, %v4106
    %v4108 = vpop.f32.mrb[0].mxu0
    %v4109 = vadd.f32 0.0, %v4108
    %v4110 = vpop.f32.mrb[0].mxu0
    %v4111 = vadd.f32 0.0, %v4110
    %4112 = vmatprep.mubr.bf16.mxu0 %v756
    %4113 = vmatmul.mubr.bf16.gmra.mrb[0].mxu0 %v705
    %v4114 = vpop.f32.mrb[0].mxu0
    %v4115 = vadd.f32 0.0, %v4114
    %v4116 = vpop.f32.mrb[0].mxu0
    %v4117 = vadd.f32 0.0, %v4116
    %v4118 = vpop.f32.mrb[0].mxu0
    %v4119 = vadd.f32 0.0, %v4118
    %v4120 = vpop.f32.mrb[0].mxu0
    %v4121 = vadd.f32 0.0, %v4120
    %4122 = vmatprep.mubr.bf16.mxu0 %v759
    %4123 = vmatmul.mubr.bf16.gmra.mrb[0].mxu0 %v707
    %v4124 = vpop.f32.mrb[0].mxu0
    %v4125 = vadd.f32 0.0, %v4124
    %v4126 = vpop.f32.mrb[0].mxu0
    %v4127 = vadd.f32 0.0, %v4126
    %v4128 = vpop.f32.mrb[0].mxu0
    %v4129 = vadd.f32 0.0, %v4128
    %v4130 = vpop.f32.mrb[0].mxu0
    %v4131 = vadd.f32 0.0, %v4130
    %4132 = vmatprep.mubr.bf16.mxu0 %v762
    %4133 = vmatmul.mubr.bf16.gmra.mrb[0].mxu0 %v709
    %v4134 = vpop.f32.mrb[0].mxu0
    %v4135 = vadd.f32 0.0, %v4134
    %v4136 = vpop.f32.mrb[0].mxu0
    %v4137 = vadd.f32 0.0, %v4136
    %v4138 = vpop.f32.mrb[0].mxu0
    %v4139 = vadd.f32 0.0, %v4138
    %v4140 = vpop.f32.mrb[0].mxu0
    %v4141 = vadd.f32 0.0, %v4140
    %4142 = vmatprep.mubr.bf16.mxu0 %v765
    %4143 = vmatmul.mubr.bf16.gmra.mrb[0].mxu0 %v711
    %v4144 = vpop.f32.mrb[0].mxu0
    %v4145 = vadd.f32 0.0, %v4144
    %v4146 = vpop.f32.mrb[0].mxu0
    %v4147 = vadd.f32 0.0, %v4146
    %v4148 = vpop.f32.mrb[0].mxu0
    %v4149 = vadd.f32 0.0, %v4148
    %v4150 = vpop.f32.mrb[0].mxu0
    %v4151 = vadd.f32 0.0, %v4150
    %4152 = vmatprep.mubr.bf16.mxu0 %v768
    %4153 = vmatmul.mubr.bf16.gmra.mrb[0].mxu0 %v713
    %v4154 = vpop.f32.mrb[0].mxu0
    %v4155 = vadd.f32 0.0, %v4154
    %v4156 = vpop.f32.mrb[0].mxu0
    %v4157 = vadd.f32 0.0, %v4156
    %v4158 = vpop.f32.mrb[0].mxu0
    %v4159 = vadd.f32 0.0, %v4158
    %v4160 = vpop.f32.mrb[0].mxu0
    %v4161 = vadd.f32 0.0, %v4160
    %4162 = vmatprep.mubr.bf16.mxu0 %v771
    %4163 = vmatmul.mubr.bf16.gmra.mrb[0].mxu0 %v715
    %v4164 = vpop.f32.mrb[0].mxu0
    %v4165 = vadd.f32 0.0, %v4164
    %v4166 = vpop.f32.mrb[0].mxu0
    %v4167 = vadd.f32 0.0, %v4166
    %v4168 = vpop.f32.mrb[0].mxu0
    %v4169 = vadd.f32 0.0, %v4168
    %v4170 = vpop.f32.mrb[0].mxu0
    %v4171 = vadd.f32 0.0, %v4170
    %4172 = vmatprep.mubr.bf16.mxu0 %v774
    %4173 = vmatmul.mubr.bf16.gmra.mrb[0].mxu0 %v717
    %v4174 = vpop.f32.mrb[0].mxu0
    %v4175 = vadd.f32 0.0, %v4174
    %v4176 = vpop.f32.mrb[0].mxu0
    %v4177 = vadd.f32 0.0, %v4176
    %v4178 = vpop.f32.mrb[0].mxu0
    %v4179 = vadd.f32 0.0, %v4178
    %v4180 = vpop.f32.mrb[0].mxu0
    %v4181 = vadd.f32 0.0, %v4180
    %4182 = vmatprep.mubr.bf16.mxu0 %v777
    %4183 = vmatmul.mubr.bf16.gmra.mrb[0].mxu0 %v719
    %v4184 = vpop.f32.mrb[0].mxu0
    %v4185 = vadd.f32 0.0, %v4184
    %v4186 = vpop.f32.mrb[0].mxu0
    %v4187 = vadd.f32 0.0, %v4186
    %v4188 = vpop.f32.mrb[0].mxu0
    %v4189 = vadd.f32 0.0, %v4188
    %v4190 = vpop.f32.mrb[0].mxu0
    %v4191 = vadd.f32 0.0, %v4190
    %4192 = vmatprep.mubr.bf16.mxu0 %v780
    %4193 = vmatmul.mubr.bf16.gmra.mrb[0].mxu0 %v721
    %v4194 = vpop.f32.mrb[0].mxu0
    %v4195 = vadd.f32 0.0, %v4194
    %v4196 = vpop.f32.mrb[0].mxu0
    %v4197 = vadd.f32 0.0, %v4196
    %v4198 = vpop.f32.mrb[0].mxu0
    %v4199 = vadd.f32 0.0, %v4198
    %v4200 = vpop.f32.mrb[0].mxu0
    %v4201 = vadd.f32 0.0, %v4200
    %4202 = vmatprep.mubr.bf16.mxu0 %v783
    %4203 = vmatmul.mubr.bf16.gmra.mrb[0].mxu0 %v723
    %v4204 = vpop.f32.mrb[0].mxu0
    %v4205 = vadd.f32 0.0, %v4204
    %v4206 = vpop.f32.mrb[0].mxu0
    %v4207 = vadd.f32 0.0, %v4206
    %v4208 = vpop.f32.mrb[0].mxu0
    %v4209 = vadd.f32 0.0, %v4208
    %v4210 = vpop.f32.mrb[0].mxu0
    %v4211 = vadd.f32 0.0, %v4210
    %4212 = vmatprep.mubr.bf16.mxu0 %v786
    %4213 = vmatmul.mubr.bf16.gmra.mrb[0].mxu0 %v725
    %v4214 = vpop.f32.mrb[0].mxu0
    %v4215 = vadd.f32 0.0, %v4214
    %v4216 = vpop.f32.mrb[0].mxu0
    %v4217 = vadd.f32 0.0, %v4216
    %v4218 = vpop.f32.mrb[0].mxu0
    %v4219 = vadd.f32 0.0, %v4218
    %v4220 = vpop.f32.mrb[0].mxu0
    %v4221 = vadd.f32 0.0, %v4220
    %4222 = vmatprep.mubr.bf16.mxu0 %v789
    %4223 = vmatmul.mubr.bf16.gmra.mrb[0].mxu0 %v727
    %v4224 = vpop.f32.mrb[0].mxu0
    %v4225 = vadd.f32 0.0, %v4224
    %v4226 = vpop.f32.mrb[0].mxu0
    %v4227 = vadd.f32 0.0, %v4226
    %v4228 = vpop.f32.mrb[0].mxu0
    %v4229 = vadd.f32 0.0, %v4228
    %v4230 = vpop.f32.mrb[0].mxu0
    %v4231 = vadd.f32 0.0, %v4230
    %4232 = vmatprep.mubr.bf16.mxu0 %v792
    %4233 = vmatmul.mubr.bf16.gmra.mrb[0].mxu0 %v729
    %v4234 = vpop.f32.mrb[0].mxu0
    %v4235 = vadd.f32 0.0, %v4234
    %v4236 = vpop.f32.mrb[0].mxu0
    %v4237 = vadd.f32 0.0, %v4236
    %v4238 = vpop.f32.mrb[0].mxu0
    %v4239 = vadd.f32 0.0, %v4238
    %v4240 = vpop.f32.mrb[0].mxu0
    %v4241 = vadd.f32 0.0, %v4240
    %4242 = vmatprep.mubr.bf16.mxu0 %v795
    %4243 = vmatmul.mubr.bf16.gmra.mrb[0].mxu0 %v731
    %v4244 = vpop.f32.mrb[0].mxu0
    %v4245 = vadd.f32 0.0, %v4244
    %v4246 = vpop.f32.mrb[0].mxu0
    %v4247 = vadd.f32 0.0, %v4246
    %v4248 = vpop.f32.mrb[0].mxu0
    %v4249 = vadd.f32 0.0, %v4248
    %v4250 = vpop.f32.mrb[0].mxu0
    %v4251 = vadd.f32 0.0, %v4250
    %4252 = vmatprep.mubr.bf16.mxu0 %v798
    %4253 = vmatmul.mubr.bf16.gmra.mrb[0].mxu0 %v733
    %v4254 = vpop.f32.mrb[0].mxu0
    %v4255 = vadd.f32 0.0, %v4254
    %v4256 = vpop.f32.mrb[0].mxu0
    %v4257 = vadd.f32 0.0, %v4256
    %v4258 = vpop.f32.mrb[0].mxu0
    %v4259 = vpop.f32.mrb[0].mxu0
    %4260 = vdwg.mxu0
    %v4261 = vpack.c.bf16 %v4109, %v4105
    %v4262 = vpack.c.bf16 %v4111, %v4107
    %v4263 = vpack.c.bf16 %v4119, %v4115
    %v4264 = vpack.c.bf16 %v4121, %v4117
    %v4265 = vpack.c.bf16 %v4129, %v4125
    %v4266 = vpack.c.bf16 %v4131, %v4127
    %v4267 = vpack.c.bf16 %v4139, %v4135
    %v4268 = vpack.c.bf16 %v4141, %v4137
    %v4269 = vpack.c.bf16 %v4149, %v4145
    %v4270 = vpack.c.bf16 %v4151, %v4147
    %v4271 = vpack.c.bf16 %v4159, %v4155
    %v4272 = vpack.c.bf16 %v4161, %v4157
    %v4273 = vpack.c.bf16 %v4169, %v4165
    %v4274 = vpack.c.bf16 %v4171, %v4167
    %v4275 = vpack.c.bf16 %v4179, %v4175
    %v4276 = vpack.c.bf16 %v4181, %v4177
    %v4277 = vpack.c.bf16 %v4189, %v4185
    %v4278 = vpack.c.bf16 %v4191, %v4187
    %v4279 = vpack.c.bf16 %v4199, %v4195
    %v4280 = vpack.c.bf16 %v4201, %v4197
    %v4281 = vpack.c.bf16 %v4209, %v4205
    %v4282 = vpack.c.bf16 %v4211, %v4207
    %v4283 = vpack.c.bf16 %v4219, %v4215
    %v4284 = vpack.c.bf16 %v4221, %v4217
    %v4285 = vpack.c.bf16 %v4229, %v4225
    %v4286 = vpack.c.bf16 %v4231, %v4227
    %v4287 = vpack.c.bf16 %v4239, %v4235
    %v4288 = vpack.c.bf16 %v4241, %v4237
    %v4289 = vpack.c.bf16 %v4249, %v4245
    %v4290 = vpack.c.bf16 %v4251, %v4247
    %v4291 = vpack.c.bf16 %v4255, %v4255
    %v4292 = vpack.c.bf16 %v4257, %v4257
    %4293 = vmatprep.subr.bf16.mxu0 0
    %4294 = vmatpush1.bf16.msra.mxu0 %v4015
    %4295 = vmatprep.subr.bf16.mxu0 0
    %4296 = vmatpush1.bf16.msra.mxu0 %v4016
    %4297 = vmatprep.subr.bf16.mxu0 0
    %4298 = vmatpush1.bf16.msra.mxu0 %v4017
    %4299 = vmatprep.subr.bf16.mxu0 0
    %4300 = vmatpush1.bf16.msra.mxu0 %v4018
    %4301 = vmatprep.subr.bf16.mxu0 0
    %4302 = vmatpush1.bf16.msra.mxu0 %v4019
    %4303 = vmatprep.subr.bf16.mxu0 0
    %4304 = vmatpush1.bf16.msra.mxu0 %v4020
    %4305 = vmatprep.subr.bf16.mxu0 0
    %4306 = vmatpush1.bf16.msra.mxu0 %v4021
    %4307 = vmatprep.subr.bf16.mxu0 0
    %4308 = vmatpush1.bf16.msra.mxu0 %v4022
    %4309 = vmatprep.subr.bf16.mxu0 0
    %4310 = vmatpush1.bf16.msra.mxu0 %v4023
    %4311 = vmatprep.subr.bf16.mxu0 0
    %4312 = vmatpush1.bf16.msra.mxu0 %v4024
    %4313 = vmatprep.subr.bf16.mxu0 0
    %4314 = vmatpush1.bf16.msra.mxu0 %v4025
    %4315 = vmatprep.subr.bf16.mxu0 0
    %4316 = vmatpush1.bf16.msra.mxu0 %v4026
    %4317 = vmatprep.subr.bf16.mxu0 0
    %4318 = vmatpush1.bf16.msra.mxu0 %v4027
    %4319 = vmatprep.subr.bf16.mxu0 0
    %4320 = vmatpush1.bf16.msra.mxu0 %v4028
    %4321 = vmatprep.subr.bf16.mxu0 0
    %4322 = vmatpush1.bf16.msra.mxu0 %v4029
    %4323 = vmatprep.subr.bf16.mxu0 0
    %4324 = vmatpush1.bf16.msra.mxu0 %v4030
    %4325 = vmatprep.mubr.bf16.mxu0 %v4262
    %4326 = vmatmul.mubr.bf16.gmra.mrb[0].mxu0 %v4261
    %v4327 = vpop.f32.mrb[0].mxu0
    %v4328 = vadd.f32 0.0, %v4327
    %v4329 = vpop.f32.mrb[0].mxu0
    %v4330 = vpop.f32.mrb[0].mxu0
    %v4331 = vadd.f32 0.0, %v4330
    %v4332 = vpop.f32.mrb[0].mxu0
    %4333 = vmatprep.mubr.bf16.mxu0 %v4264
    %4334 = vmatmul.mubr.bf16.gmra.mrb[0].mxu0 %v4263
    %v4335 = vpop.f32.mrb[0].mxu0
    %v4336 = vadd.f32 0.0, %v4335
    %v4337 = vpop.f32.mrb[0].mxu0
    %v4338 = vpop.f32.mrb[0].mxu0
    %v4339 = vadd.f32 0.0, %v4338
    %v4340 = vpop.f32.mrb[0].mxu0
    %4341 = vmatprep.mubr.bf16.mxu0 %v4266
    %4342 = vmatmul.mubr.bf16.gmra.mrb[0].mxu0 %v4265
    %v4343 = vpop.f32.mrb[0].mxu0
    %v4344 = vadd.f32 0.0, %v4343
    %v4345 = vpop.f32.mrb[0].mxu0
    %v4346 = vpop.f32.mrb[0].mxu0
    %v4347 = vadd.f32 0.0, %v4346
    %v4348 = vpop.f32.mrb[0].mxu0
    %4349 = vmatprep.mubr.bf16.mxu0 %v4268
    %4350 = vmatmul.mubr.bf16.gmra.mrb[0].mxu0 %v4267
    %v4351 = vpop.f32.mrb[0].mxu0
    %v4352 = vadd.f32 0.0, %v4351
    %v4353 = vpop.f32.mrb[0].mxu0
    %v4354 = vpop.f32.mrb[0].mxu0
    %v4355 = vadd.f32 0.0, %v4354
    %v4356 = vpop.f32.mrb[0].mxu0
    %4357 = vmatprep.mubr.bf16.mxu0 %v4270
    %4358 = vmatmul.mubr.bf16.gmra.mrb[0].mxu0 %v4269
    %v4359 = vpop.f32.mrb[0].mxu0
    %v4360 = vadd.f32 0.0, %v4359
    %v4361 = vpop.f32.mrb[0].mxu0
    %v4362 = vpop.f32.mrb[0].mxu0
    %v4363 = vadd.f32 0.0, %v4362
    %v4364 = vpop.f32.mrb[0].mxu0
    %4365 = vmatprep.mubr.bf16.mxu0 %v4272
    %4366 = vmatmul.mubr.bf16.gmra.mrb[0].mxu0 %v4271
    %v4367 = vpop.f32.mrb[0].mxu0
    %v4368 = vadd.f32 0.0, %v4367
    %v4369 = vpop.f32.mrb[0].mxu0
    %v4370 = vpop.f32.mrb[0].mxu0
    %v4371 = vadd.f32 0.0, %v4370
    %v4372 = vpop.f32.mrb[0].mxu0
    %4373 = vmatprep.mubr.bf16.mxu0 %v4274
    %4374 = vmatmul.mubr.bf16.gmra.mrb[0].mxu0 %v4273
    %v4375 = vpop.f32.mrb[0].mxu0
    %v4376 = vadd.f32 0.0, %v4375
    %v4377 = vpop.f32.mrb[0].mxu0
    %v4378 = vpop.f32.mrb[0].mxu0
    %v4379 = vadd.f32 0.0, %v4378
    %v4380 = vpop.f32.mrb[0].mxu0
    %4381 = vmatprep.mubr.bf16.mxu0 %v4276
    %4382 = vmatmul.mubr.bf16.gmra.mrb[0].mxu0 %v4275
    %v4383 = vpop.f32.mrb[0].mxu0
    %v4384 = vadd.f32 0.0, %v4383
    %v4385 = vpop.f32.mrb[0].mxu0
    %v4386 = vpop.f32.mrb[0].mxu0
    %v4387 = vadd.f32 0.0, %v4386
    %v4388 = vpop.f32.mrb[0].mxu0
    %4389 = vmatprep.mubr.bf16.mxu0 %v4278
    %4390 = vmatmul.mubr.bf16.gmra.mrb[0].mxu0 %v4277
    %v4391 = vpop.f32.mrb[0].mxu0
    %v4392 = vadd.f32 0.0, %v4391
    %v4393 = vpop.f32.mrb[0].mxu0
    %v4394 = vpop.f32.mrb[0].mxu0
    %v4395 = vadd.f32 0.0, %v4394
    %v4396 = vpop.f32.mrb[0].mxu0
    %4397 = vmatprep.mubr.bf16.mxu0 %v4280
    %4398 = vmatmul.mubr.bf16.gmra.mrb[0].mxu0 %v4279
    %v4399 = vpop.f32.mrb[0].mxu0
    %v4400 = vadd.f32 0.0, %v4399
    %v4401 = vpop.f32.mrb[0].mxu0
    %v4402 = vpop.f32.mrb[0].mxu0
    %v4403 = vadd.f32 0.0, %v4402
    %v4404 = vpop.f32.mrb[0].mxu0
    %4405 = vmatprep.mubr.bf16.mxu0 %v4282
    %4406 = vmatmul.mubr.bf16.gmra.mrb[0].mxu0 %v4281
    %v4407 = vpop.f32.mrb[0].mxu0
    %v4408 = vadd.f32 0.0, %v4407
    %v4409 = vpop.f32.mrb[0].mxu0
    %v4410 = vpop.f32.mrb[0].mxu0
    %v4411 = vadd.f32 0.0, %v4410
    %v4412 = vpop.f32.mrb[0].mxu0
    %4413 = vmatprep.mubr.bf16.mxu0 %v4284
    %4414 = vmatmul.mubr.bf16.gmra.mrb[0].mxu0 %v4283
    %v4415 = vpop.f32.mrb[0].mxu0
    %v4416 = vadd.f32 0.0, %v4415
    %v4417 = vpop.f32.mrb[0].mxu0
    %v4418 = vpop.f32.mrb[0].mxu0
    %v4419 = vadd.f32 0.0, %v4418
    %v4420 = vpop.f32.mrb[0].mxu0
    %4421 = vmatprep.mubr.bf16.mxu0 %v4286
    %4422 = vmatmul.mubr.bf16.gmra.mrb[0].mxu0 %v4285
    %v4423 = vpop.f32.mrb[0].mxu0
    %v4424 = vadd.f32 0.0, %v4423
    %v4425 = vpop.f32.mrb[0].mxu0
    %v4426 = vpop.f32.mrb[0].mxu0
    %v4427 = vadd.f32 0.0, %v4426
    %v4428 = vpop.f32.mrb[0].mxu0
    %4429 = vmatprep.mubr.bf16.mxu0 %v4288
    %4430 = vmatmul.mubr.bf16.gmra.mrb[0].mxu0 %v4287
    %v4431 = vpop.f32.mrb[0].mxu0
    %v4432 = vadd.f32 0.0, %v4431
    %v4433 = vpop.f32.mrb[0].mxu0
    %v4434 = vpop.f32.mrb[0].mxu0
    %v4435 = vadd.f32 0.0, %v4434
    %v4436 = vpop.f32.mrb[0].mxu0
    %4437 = vmatprep.mubr.bf16.mxu0 %v4290
    %4438 = vmatmul.mubr.bf16.gmra.mrb[0].mxu0 %v4289
    %v4439 = vpop.f32.mrb[0].mxu0
    %v4440 = vadd.f32 0.0, %v4439
    %v4441 = vpop.f32.mrb[0].mxu0
    %v4442 = vpop.f32.mrb[0].mxu0
    %v4443 = vadd.f32 0.0, %v4442
    %v4444 = vpop.f32.mrb[0].mxu0
    %4445 = vmatprep.mubr.bf16.mxu0 %v4292
    %4446 = vmatmul.mubr.bf16.gmra.mrb[0].mxu0 %v4291
    %v4447 = vpop.f32.mrb[0].mxu0
    %v4448 = vadd.f32 0.0, %v4447
    %v4449 = vpop.f32.mrb[0].mxu0
    %v4450 = vpop.f32.mrb[0].mxu0
    %v4451 = vpop.f32.mrb[0].mxu0
    %4452 = vdwg.mxu0
    %4453 = vmatprep.subr.bf16.mxu0 0
    %4454 = vmatpush1.bf16.msra.mxu0 %v3999
    %4455 = vmatprep.subr.bf16.mxu0 0
    %4456 = vmatpush1.bf16.msra.mxu0 %v4000
    %4457 = vmatprep.subr.bf16.mxu0 0
    %4458 = vmatpush1.bf16.msra.mxu0 %v4001
    %4459 = vmatprep.subr.bf16.mxu0 0
    %4460 = vmatpush1.bf16.msra.mxu0 %v4002
    %4461 = vmatprep.subr.bf16.mxu0 0
    %4462 = vmatpush1.bf16.msra.mxu0 %v4003
    %4463 = vmatprep.subr.bf16.mxu0 0
    %4464 = vmatpush1.bf16.msra.mxu0 %v4004
    %4465 = vmatprep.subr.bf16.mxu0 0
    %4466 = vmatpush1.bf16.msra.mxu0 %v4005
    %4467 = vmatprep.subr.bf16.mxu0 0
    %4468 = vmatpush1.bf16.msra.mxu0 %v4006
    %4469 = vmatprep.subr.bf16.mxu0 0
    %4470 = vmatpush1.bf16.msra.mxu0 %v4007
    %4471 = vmatprep.subr.bf16.mxu0 0
    %4472 = vmatpush1.bf16.msra.mxu0 %v4008
    %4473 = vmatprep.subr.bf16.mxu0 0
    %4474 = vmatpush1.bf16.msra.mxu0 %v4009
    %4475 = vmatprep.subr.bf16.mxu0 0
    %4476 = vmatpush1.bf16.msra.mxu0 %v4010
    %4477 = vmatprep.subr.bf16.mxu0 0
    %4478 = vmatpush1.bf16.msra.mxu0 %v4011
    %4479 = vmatprep.subr.bf16.mxu0 0
    %4480 = vmatpush1.bf16.msra.mxu0 %v4012
    %4481 = vmatprep.subr.bf16.mxu0 0
    %4482 = vmatpush1.bf16.msra.mxu0 %v4013
    %4483 = vmatprep.subr.bf16.mxu0 0
    %4484 = vmatpush1.bf16.msra.mxu0 %v4014
    %4485 = vmatprep.mubr.bf16.mxu0 %v4033
    %4486 = vmatmul.mubr.bf16.gmra.mrb[0].mxu0 %v4032
    %v4487 = vpop.f32.mrb[0].mxu0
    %v4488 = vadd.f32 %v4328, %v4487
    %v4489 = vpop.f32.mrb[0].mxu0
    %v4490 = vpop.f32.mrb[0].mxu0
    %v4491 = vadd.f32 %v4331, %v4490
    %v4492 = vpop.f32.mrb[0].mxu0
    %4493 = vmatprep.mubr.bf16.mxu0 %v4035
    %4494 = vmatmul.mubr.bf16.gmra.mrb[0].mxu0 %v4034
    %v4495 = vpop.f32.mrb[0].mxu0
    %v4496 = vadd.f32 %v4336, %v4495
    %v4497 = vpop.f32.mrb[0].mxu0
    %v4498 = vpop.f32.mrb[0].mxu0
    %v4499 = vadd.f32 %v4339, %v4498
    %v4500 = vpop.f32.mrb[0].mxu0
    %4501 = vmatprep.mubr.bf16.mxu0 %v4037
    %4502 = vmatmul.mubr.bf16.gmra.mrb[0].mxu0 %v4036
    %v4503 = vpop.f32.mrb[0].mxu0
    %v4504 = vadd.f32 %v4344, %v4503
    %v4505 = vpop.f32.mrb[0].mxu0
    %v4506 = vpop.f32.mrb[0].mxu0
    %v4507 = vadd.f32 %v4347, %v4506
    %v4508 = vpop.f32.mrb[0].mxu0
    %4509 = vmatprep.mubr.bf16.mxu0 %v4039
    %4510 = vmatmul.mubr.bf16.gmra.mrb[0].mxu0 %v4038
    %v4511 = vpop.f32.mrb[0].mxu0
    %v4512 = vadd.f32 %v4352, %v4511
    %v4513 = vpop.f32.mrb[0].mxu0
    %v4514 = vpop.f32.mrb[0].mxu0
    %v4515 = vadd.f32 %v4355, %v4514
    %v4516 = vpop.f32.mrb[0].mxu0
    %4517 = vmatprep.mubr.bf16.mxu0 %v4041
    %4518 = vmatmul.mubr.bf16.gmra.mrb[0].mxu0 %v4040
    %v4519 = vpop.f32.mrb[0].mxu0
    %v4520 = vadd.f32 %v4360, %v4519
    %v4521 = vpop.f32.mrb[0].mxu0
    %v4522 = vpop.f32.mrb[0].mxu0
    %v4523 = vadd.f32 %v4363, %v4522
    %v4524 = vpop.f32.mrb[0].mxu0
    %4525 = vmatprep.mubr.bf16.mxu0 %v4043
    %4526 = vmatmul.mubr.bf16.gmra.mrb[0].mxu0 %v4042
    %v4527 = vpop.f32.mrb[0].mxu0
    %v4528 = vadd.f32 %v4368, %v4527
    %v4529 = vpop.f32.mrb[0].mxu0
    %v4530 = vpop.f32.mrb[0].mxu0
    %v4531 = vadd.f32 %v4371, %v4530
    %v4532 = vpop.f32.mrb[0].mxu0
    %4533 = vmatprep.mubr.bf16.mxu0 %v4045
    %4534 = vmatmul.mubr.bf16.gmra.mrb[0].mxu0 %v4044
    %v4535 = vpop.f32.mrb[0].mxu0
    %v4536 = vadd.f32 %v4376, %v4535
    %v4537 = vpop.f32.mrb[0].mxu0
    %v4538 = vpop.f32.mrb[0].mxu0
    %v4539 = vadd.f32 %v4379, %v4538
    %v4540 = vpop.f32.mrb[0].mxu0
    %4541 = vmatprep.mubr.bf16.mxu0 %v4047
    %4542 = vmatmul.mubr.bf16.gmra.mrb[0].mxu0 %v4046
    %v4543 = vpop.f32.mrb[0].mxu0
    %v4544 = vadd.f32 %v4384, %v4543
    %v4545 = vpop.f32.mrb[0].mxu0
    %v4546 = vpop.f32.mrb[0].mxu0
    %v4547 = vadd.f32 %v4387, %v4546
    %v4548 = vpop.f32.mrb[0].mxu0
    %4549 = vmatprep.mubr.bf16.mxu0 %v4049
    %4550 = vmatmul.mubr.bf16.gmra.mrb[0].mxu0 %v4048
    %v4551 = vpop.f32.mrb[0].mxu0
    %v4552 = vadd.f32 %v4392, %v4551
    %v4553 = vpop.f32.mrb[0].mxu0
    %v4554 = vpop.f32.mrb[0].mxu0
    %v4555 = vadd.f32 %v4395, %v4554
    %v4556 = vpop.f32.mrb[0].mxu0
    %4557 = vmatprep.mubr.bf16.mxu0 %v4051
    %4558 = vmatmul.mubr.bf16.gmra.mrb[0].mxu0 %v4050
    %v4559 = vpop.f32.mrb[0].mxu0
    %v4560 = vadd.f32 %v4400, %v4559
    %v4561 = vpop.f32.mrb[0].mxu0
    %v4562 = vpop.f32.mrb[0].mxu0
    %v4563 = vadd.f32 %v4403, %v4562
    %v4564 = vpop.f32.mrb[0].mxu0
    %4565 = vmatprep.mubr.bf16.mxu0 %v4053
    %4566 = vmatmul.mubr.bf16.gmra.mrb[0].mxu0 %v4052
    %v4567 = vpop.f32.mrb[0].mxu0
    %v4568 = vadd.f32 %v4408, %v4567
    %v4569 = vpop.f32.mrb[0].mxu0
    %v4570 = vpop.f32.mrb[0].mxu0
    %v4571 = vadd.f32 %v4411, %v4570
    %v4572 = vpop.f32.mrb[0].mxu0
    %4573 = vmatprep.mubr.bf16.mxu0 %v4055
    %4574 = vmatmul.mubr.bf16.gmra.mrb[0].mxu0 %v4054
    %v4575 = vpop.f32.mrb[0].mxu0
    %v4576 = vadd.f32 %v4416, %v4575
    %v4577 = vpop.f32.mrb[0].mxu0
    %v4578 = vpop.f32.mrb[0].mxu0
    %v4579 = vadd.f32 %v4419, %v4578
    %v4580 = vpop.f32.mrb[0].mxu0
    %4581 = vmatprep.mubr.bf16.mxu0 %v4057
    %4582 = vmatmul.mubr.bf16.gmra.mrb[0].mxu0 %v4056
    %v4583 = vpop.f32.mrb[0].mxu0
    %v4584 = vadd.f32 %v4424, %v4583
    %v4585 = vpop.f32.mrb[0].mxu0
    %v4586 = vpop.f32.mrb[0].mxu0
    %v4587 = vadd.f32 %v4427, %v4586
    %v4588 = vpop.f32.mrb[0].mxu0
    %4589 = vmatprep.mubr.bf16.mxu0 %v4059
    %4590 = vmatmul.mubr.bf16.gmra.mrb[0].mxu0 %v4058
    %v4591 = vpop.f32.mrb[0].mxu0
    %v4592 = vadd.f32 %v4432, %v4591
    %v4593 = vpop.f32.mrb[0].mxu0
    %v4594 = vpop.f32.mrb[0].mxu0
    %v4595 = vadd.f32 %v4435, %v4594
    %v4596 = vpop.f32.mrb[0].mxu0
    %4597 = vmatprep.mubr.bf16.mxu0 %v4061
    %4598 = vmatmul.mubr.bf16.gmra.mrb[0].mxu0 %v4060
    %v4599 = vpop.f32.mrb[0].mxu0
    %v4600 = vadd.f32 %v4440, %v4599
    %v4601 = vpop.f32.mrb[0].mxu0
    %v4602 = vpop.f32.mrb[0].mxu0
    %v4603 = vadd.f32 %v4443, %v4602
    %v4604 = vpop.f32.mrb[0].mxu0
    %4605 = vmatprep.mubr.bf16.mxu0 %v4063
    %4606 = vmatmul.mubr.bf16.gmra.mrb[0].mxu0 %v4062
    %v4607 = vpop.f32.mrb[0].mxu0
    %v4608 = vadd.f32 %v4448, %v4607
    %v4609 = vpop.f32.mrb[0].mxu0
    %v4610 = vpop.f32.mrb[0].mxu0
    %v4611 = vpop.f32.mrb[0].mxu0
    %4612 = vdwg.mxu0
    %v4614 = vlaneseq
    %v4615 = vshrl.u32 %v4614, 7
    %v4616 = vsub.s32 0, %v4615
    %v4617 = vrot.slane %v4031, %v4616
    %v4619 = vadd.f32 %v4488, %v4617
    %v4620 = vadd.f32 %v4491, %v4617
    %v4621 = vadd.f32 %v4496, %v4617
    %v4622 = vadd.f32 %v4499, %v4617
    %v4623 = vadd.f32 %v4504, %v4617
    %v4624 = vadd.f32 %v4507, %v4617
    %v4625 = vadd.f32 %v4512, %v4617
    %v4626 = vadd.f32 %v4515, %v4617
    %v4627 = vadd.f32 %v4520, %v4617
    %v4628 = vadd.f32 %v4523, %v4617
    %v4629 = vadd.f32 %v4528, %v4617
    %v4630 = vadd.f32 %v4531, %v4617
    %v4631 = vadd.f32 %v4536, %v4617
    %v4632 = vadd.f32 %v4539, %v4617
    %v4633 = vadd.f32 %v4544, %v4617
    %v4634 = vadd.f32 %v4547, %v4617
    %v4635 = vadd.f32 %v4552, %v4617
    %v4636 = vadd.f32 %v4555, %v4617
    %v4637 = vadd.f32 %v4560, %v4617
    %v4638 = vadd.f32 %v4563, %v4617
    %v4639 = vadd.f32 %v4568, %v4617
    %v4640 = vadd.f32 %v4571, %v4617
    %v4641 = vadd.f32 %v4576, %v4617
    %v4642 = vadd.f32 %v4579, %v4617
    %v4643 = vadd.f32 %v4584, %v4617
    %v4644 = vadd.f32 %v4587, %v4617
    %v4645 = vadd.f32 %v4592, %v4617
    %v4646 = vadd.f32 %v4595, %v4617
    %v4647 = vadd.f32 %v4600, %v4617
    %v4648 = vadd.f32 %v4603, %v4617
    %v4649 = vadd.f32 %v4608, %v4617
    %4650 = vst [vmem:[#allocation16] sm:$0xff] %v4619
    %4651 = vst [vmem:[#allocation16 + $0x8] sm:$0xff] %v4620
    %4652 = vst [vmem:[#allocation16 + $0x10] sm:$0xff] %v4621
    %4653 = vst [vmem:[#allocation16 + $0x18] sm:$0xff] %v4622
    %4654 = vst [vmem:[#allocation16 + $0x20] sm:$0xff] %v4623
    %4655 = vst [vmem:[#allocation16 + $0x28] sm:$0xff] %v4624
    %4656 = vst [vmem:[#allocation16 + $0x30] sm:$0xff] %v4625
    %4657 = vst [vmem:[#allocation16 + $0x38] sm:$0xff] %v4626
    %4658 = vst [vmem:[#allocation16 + $0x40] sm:$0xff] %v4627
    %4659 = vst [vmem:[#allocation16 + $0x48] sm:$0xff] %v4628
    %4660 = vst [vmem:[#allocation16 + $0x50] sm:$0xff] %v4629
    %4661 = vst [vmem:[#allocation16 + $0x58] sm:$0xff] %v4630
    %4662 = vst [vmem:[#allocation16 + $0x60] sm:$0xff] %v4631
    %4663 = vst [vmem:[#allocation16 + $0x68] sm:$0xff] %v4632
    %4664 = vst [vmem:[#allocation16 + $0x70] sm:$0xff] %v4633
    %4665 = vst [vmem:[#allocation16 + $0x78] sm:$0xff] %v4634
    %4666 = vst [vmem:[#allocation16 + $0x80] sm:$0xff] %v4635
    %4667 = vst [vmem:[#allocation16 + $0x88] sm:$0xff] %v4636
    %4668 = vst [vmem:[#allocation16 + $0x90] sm:$0xff] %v4637
    %4669 = vst [vmem:[#allocation16 + $0x98] sm:$0xff] %v4638
    %4670 = vst [vmem:[#allocation16 + $0xa0] sm:$0xff] %v4639
    %4671 = vst [vmem:[#allocation16 + $0xa8] sm:$0xff] %v4640
    %4672 = vst [vmem:[#allocation16 + $0xb0] sm:$0xff] %v4641
    %4673 = vst [vmem:[#allocation16 + $0xb8] sm:$0xff] %v4642
    %4674 = vst [vmem:[#allocation16 + $0xc0] sm:$0xff] %v4643
    %4675 = vst [vmem:[#allocation16 + $0xc8] sm:$0xff] %v4644
    %4676 = vst [vmem:[#allocation16 + $0xd0] sm:$0xff] %v4645
    %4677 = vst [vmem:[#allocation16 + $0xd8] sm:$0xff] %v4646
    %4678 = vst [vmem:[#allocation16 + $0xe0] sm:$0xff] %v4647
    %4679 = vst [vmem:[#allocation16 + $0xe8] sm:$0xff] %v4648
    %4680 = vst [vmem:[#allocation16 + $0xf0] sm:$0xff] %v4649
    // Predicated region
    $region66: #{tpu_custom_call.1} parent=1 // pred_check
      _
    $region67: #{tpu_custom_call.1} parent=1 // pred_check_branch
      %4682 = sbr.rel (0) target = $region69
    $region68: #{tpu_custom_call.1} parent=1 // pred_region
      %s4684 = ssub.s32 3968, 3968
      %4685 = vsyncadd [#allocation9], %s4684
      %s4686 = sshll.u32 [#allocation16], 4
      %s4687 = int_to_ptr.vmem [resolvable:$true] %s4686
      %4692 = dma.vmem_to_hbm [thread:$0]  %s4687, 3968, %s13, [#allocation9], 128, 128, 8
    $region69: #{tpu_custom_call.1} parent=1 // pred_fallthru
      _
    // Predicated region
    $region70: #{tpu_custom_call.1} parent=1 // pred_check
      _
    $region71: #{tpu_custom_call.1} parent=1 // pred_check_branch
      %4694 = sbr.rel (0) target = $region73
    $region72: #{tpu_custom_call.1} parent=1 // pred_region
      %4695 = dma.done [#allocation9], 3968
    $region73: #{tpu_custom_call.1} parent=1 // pred_fallthru
      _
    %4696 = vsyncpa [#allocation8], 1
    %4697 = vsyncpa [#allocation11], 1
    %4698 = vsyncpa [#allocation14], 1
    %4699 = vsyncpa [#allocation9], 1
  %4700 = vsyncmov [#allocation6]
  %s4701 = vpop.sfrf %4700
  %p4702 = scmp.eq.s32.totalorder %s4701, 0
  %p4703 = pneg %p4702
  %4705 = shalt.err (%p4703)
  %s4706 = scalar_lea.sflag [#allocation6], 1
  %4707 = vsyncmov %s4706
  %s4708 = vpop.sfrf %4707
  %p4709 = scmp.eq.s32.totalorder %s4708, 0
  %p4710 = pneg %p4709
  %4712 = shalt.err (%p4710)
  %s4713 = scalar_lea.sflag [#allocation6], 2
  %4714 = vsyncmov %s4713
  %s4715 = vpop.sfrf %4714
  %p4716 = scmp.eq.s32.totalorder %s4715, 0
  %p4717 = pneg %p4716
  %4719 = shalt.err (%p4717)
  %s4720 = scalar_lea.sflag [#allocation6], 3
  %4721 = vsyncmov %s4720
  %s4722 = vpop.sfrf %4721
  %p4723 = scmp.eq.s32.totalorder %s4722, 0
  %p4724 = pneg %p4723
  %4726 = shalt.err (%p4724)

</llo_original>
